<compile_context>
chip_gen: v7x
topology: tpu7x:2x2x1
jax: 0.10.0
libtpu: 0.0.40
codegen_flags: <defaults>
</compile_context>

<pallas_src>
import math

import jax
import jax.numpy as jnp
from jax.experimental import pallas as pl
from jax.experimental.pallas import tpu as pltpu  # noqa: F401  (imported for TPU backend availability)

# ----------------------------- model hyper-parameters -----------------------------
B = 2            # batch
S = 8            # sequence length
H = 32           # args.hidden_sz
N_HEADS = 2
HEAD_DIM = H // N_HEADS
INTER = 4 * H    # BERT intermediate size
N_LAYERS = 2
VOCAB = 50
TYPE_VOCAB = 2
MAX_POS = 16
IMG_HID = 64     # args.img_hidden_sz   (per-frame video feature dim)
N_FRAMES = 4     # video frames (mean-pooled over dim=1)
MOD_SZ = 32      # args.modality_size
ADAPTER_DIM = 16 # adapter bottleneck
N_CLASSES = 3    # args.n_classes
BS = B * S


def _gelu(x):
    # tanh approximation of GELU (transformers 'gelu_new'); exact-erf GELU differs <1e-3.
    c = math.sqrt(2.0 / math.pi)
    return 0.5 * x * (1.0 + jnp.tanh(c * (x + 0.044715 * x * x * x)))


def _ln(x, g, b, eps=1e-12):
    mu = jnp.mean(x, axis=-1, keepdims=True)
    var = jnp.mean((x - mu) ** 2, axis=-1, keepdims=True)
    return (x - mu) * jax.lax.rsqrt(var + eps) * g + b


# ----------------------------------- fused Pallas kernel -----------------------------------
def _fused_forward_kernel(
    # raw inputs
    txt_ref, seg_ref, mask_ref, img_ref,
    # embedding tables + embedding LN + modality projection
    word_emb, pos_emb, type_emb, emb_ln_g, emb_ln_b, mp_w, mp_b,
    # stacked per-layer transformer weights (leading axis = layer)
    wqkv, bqkv, wo, bo, ln1_g, ln1_b,
    wi, bi, wf, bf,
    a_wdx, a_wdm, a_bd, a_wu, a_bu,
    ln2_g, ln2_b,
    # pooler + classifier head
    pool_w, pool_b, c_w1, c_b1, c_ln_g, c_ln_b, c_w2, c_b2,
    # output
    o_ref,
):
    f32 = jnp.float32

    # --- modality_project(torch.mean(mod, dim=1)) ---
    mod = jnp.mean(img_ref[...].astype(f32), axis=1)                          # (B, IMG_HID)
    mod = jnp.dot(mod, mp_w[...], preferred_element_type=f32) + mp_b[...]     # (B, MOD_SZ)

    # --- BERT embeddings: word + position + type, done as one-hot MXU matmuls ---
    txt_ids = txt_ref[...]                                                     # (BS, 1) int32
    seg_ids = seg_ref[...]                                                     # (BS, 1) int32
    vocab_iota = jax.lax.broadcasted_iota(jnp.int32, (BS, VOCAB), 1)
    type_iota = jax.lax.broadcasted_iota(jnp.int32, (BS, TYPE_VOCAB), 1)
    txt_1h = (txt_ids == vocab_iota).astype(f32)                               # (BS, VOCAB)
    seg_1h = (seg_ids == type_iota).astype(f32)                                # (BS, TYPE_VOCAB)
    emb = (jnp.dot(txt_1h, word_emb[...], preferred_element_type=f32)
           + jnp.dot(seg_1h, type_emb[...], preferred_element_type=f32))       # (BS, H)
    emb = emb.reshape(B, S, H) + pos_emb[0:S, :][None, :, :]                    # + pos emb
    x = _ln(emb.reshape(BS, H), emb_ln_g[...], emb_ln_b[...])                   # (BS, H)

    # --- additive attention bias (B, 1, S), broadcast over heads & query positions ---
    bias = ((1.0 - mask_ref[...].astype(f32)) * -10000.0).reshape(B, 1, S)

    scale = 1.0 / math.sqrt(HEAD_DIM)

    for l in range(N_LAYERS):
        # ---- self attention: fused QKV projection (one (BS,H)@(H,3H) MXU op) ----
        qkv = jnp.dot(x, wqkv[l], preferred_element_type=f32) + bqkv[l]       # (BS, 3H)
        q3 = qkv[:, 0 * H:1 * H].reshape(B, S, H)
        k3 = qkv[:, 1 * H:2 * H].reshape(B, S, H)
        v3 = qkv[:, 2 * H:3 * H].reshape(B, S, H)
        wo_l = wo[l]

        # Heads are folded into the output projection (no concat needed):
        #   concat_h(ctx_h) @ Wo == sum_h ctx_h @ Wo[h*hd:(h+1)*hd]
        attn_out = jnp.zeros((BS, H), f32)
        for hh in range(N_HEADS):
            sl = slice(hh * HEAD_DIM, (hh + 1) * HEAD_DIM)
            s = jnp.einsum('bqd,bkd->bqk', q3[:, :, sl], k3[:, :, sl],
                           preferred_element_type=f32) * scale + bias         # (B, S, S)
            s = s - jnp.max(s, axis=-1, keepdims=True)
            p = jnp.exp(s)
            p = p / jnp.sum(p, axis=-1, keepdims=True)
            ctx_h = jnp.einsum('bqk,bkd->bqd', p, v3[:, :, sl],
                               preferred_element_type=f32)                    # (B, S, HD)
            attn_out = attn_out + jnp.dot(ctx_h.reshape(BS, HEAD_DIM), wo_l[sl, :],
                                          preferred_element_type=f32)
        attn_out = attn_out + bo[l]

        # residual + LayerNorm (epilogue, stays in VMEM/vregs)
        h1 = _ln(x + attn_out, ln1_g[l], ln1_b[l])

        # ---- feed-forward ----
        inter = _gelu(jnp.dot(h1, wi[l], preferred_element_type=f32) + bi[l])     # (BS, 4H)
        ffn = jnp.dot(inter, wf[l], preferred_element_type=f32) + bf[l]           # (BS, H)

        # ---- modality-conditioned bottleneck adapter on the FFN output ----
        # TODO(synk): exact adapter-transformers add_adapter('image') wiring is not public in
        # this snippet; approximated as a modality-conditioned bottleneck adapter on the FFN out.
        # Modality contribution hoisted: computed once per layer (B, AD) and broadcast in VMEM.
        mod_contrib = jnp.dot(mod, a_wdm[l], preferred_element_type=f32) + a_bd[l]  # (B, AD)
        down = jnp.dot(ffn, a_wdx[l], preferred_element_type=f32)                   # (BS, AD)
        down = down.reshape(B, S, ADAPTER_DIM) + mod_contrib[:, None, :]
        down = _gelu(down).reshape(BS, ADAPTER_DIM)
        up = jnp.dot(down, a_wu[l], preferred_element_type=f32) + a_bu[l]
        ffn = ffn + up

        x = _ln(h1 + ffn, ln2_g[l], ln2_b[l])                                       # (BS, H)

    # ---- BERT pooler: tanh(W h[:, 0] + b)  (out[1] of BertModel) ----
    cls = x.reshape(B, S, H)[:, 0:1, :].reshape(B, H)
    pooled = jnp.tanh(jnp.dot(cls, pool_w[...], preferred_element_type=f32) + pool_b[...])

    # ---- SimpleClassifier: Linear -> Dropout(0) -> gelu -> LayerNorm(1e-12) -> Linear ----
    c = _gelu(jnp.dot(pooled, c_w1[...], preferred_element_type=f32) + c_b1[...])
    c = _ln(c, c_ln_g[...], c_ln_b[...], eps=1e-12)
    logits = jnp.dot(c, c_w2[...], preferred_element_type=f32) + c_b2[...]           # (B, 3)
    o_ref[...] = logits.astype(o_ref.dtype)


# ----------------------------------- parameters -----------------------------------
def init_params(key):
    keys = iter(jax.random.split(key, 64))

    def w(shape):
        return 0.02 * jax.random.normal(next(keys), shape, jnp.float32)

    def zeros(shape):
        return jnp.zeros(shape, jnp.float32)

    def ones(shape):
        return jnp.ones(shape, jnp.float32)

    L = N_LAYERS
    return {
        # embedding tables (gathered inside the kernel via one-hot matmuls)
        "word_emb": w((VOCAB, H)),
        "pos_emb": w((MAX_POS, H)),
        "type_emb": w((TYPE_VOCAB, H)),
        "emb_ln_g": ones((1, H)), "emb_ln_b": zeros((1, H)),
        # modality_project
        "mp_w": w((IMG_HID, MOD_SZ)), "mp_b": zeros((1, MOD_SZ)),
        # stacked per-layer weights, QKV fused into one (H, 3H) matmul
        "wqkv": w((L, H, 3 * H)), "bqkv": zeros((L, 1, 3 * H)),
        "wo": w((L, H, H)), "bo": zeros((L, 1, H)),
        "ln1_g": ones((L, 1, H)), "ln1_b": zeros((L, 1, H)),
        "wi": w((L, H, INTER)), "bi": zeros((L, 1, INTER)),
        "wf": w((L, INTER, H)), "bf": zeros((L, 1, H)),
        "a_wdx": w((L, H, ADAPTER_DIM)), "a_wdm": w((L, MOD_SZ, ADAPTER_DIM)),
        "a_bd": zeros((L, 1, ADAPTER_DIM)),
        "a_wu": w((L, ADAPTER_DIM, H)), "a_bu": zeros((L, 1, H)),
        "ln2_g": ones((L, 1, H)), "ln2_b": zeros((L, 1, H)),
        # BERT pooler
        "pool_w": w((H, H)), "pool_b": zeros((1, H)),
        # SimpleClassifier(hidden_sz, hidden_sz, n_classes, 0.0)
        "c_w1": w((H, H)), "c_b1": zeros((1, H)),
        "c_ln_g": ones((1, H)), "c_ln_b": zeros((1, H)),
        "c_w2": w((H, N_CLASSES)), "c_b2": zeros((1, N_CLASSES)),
    }


_PARAM_ORDER = (
    "word_emb", "pos_emb", "type_emb", "emb_ln_g", "emb_ln_b", "mp_w", "mp_b",
    "wqkv", "bqkv", "wo", "bo", "ln1_g", "ln1_b",
    "wi", "bi", "wf", "bf",
    "a_wdx", "a_wdm", "a_bd", "a_wu", "a_bu",
    "ln2_g", "ln2_b",
    "pool_w", "pool_b", "c_w1", "c_b1", "c_ln_g", "c_ln_b", "c_w2", "c_b2",
)


# ----------------------------------- forward pass -----------------------------------
def multimodal_adapter_clf(p, txt, mask, segment, img):
    bsz, seq = txt.shape
    # Only trivial reshapes stay outside; the embedding lookups happen inside the kernel.
    txt_flat = txt.reshape(bsz * seq, 1).astype(jnp.int32)
    seg_flat = segment.reshape(bsz * seq, 1).astype(jnp.int32)

    args = [txt_flat, seg_flat, mask.astype(jnp.float32), img] + [p[k] for k in _PARAM_ORDER]

    # Single fused kernel: no grid, every operand is a full-array VMEM-resident block
    # (total weights + activations < 260 KB — fits VMEM on v5e/v6e/v7x).
    return pl.pallas_call(
        _fused_forward_kernel,
        out_shape=jax.ShapeDtypeStruct((bsz, N_CLASSES), jnp.float32),
    )(*args)


# ----------------------------------------- main -----------------------------------------
if __name__ == "__main__":
    key = jax.random.PRNGKey(0)
    k_par, k_txt, k_seg, k_img = jax.random.split(key, 4)

    params = init_params(k_par)

    txt = jax.random.randint(k_txt, (B, S), 0, VOCAB, dtype=jnp.int32)
    segment = jax.random.randint(k_seg, (B, S), 0, TYPE_VOCAB, dtype=jnp.int32)
    mask = jnp.ones((B, S), jnp.float32).at[1, S - 2:].set(0.0)   # some padding in batch 1
    img = jax.random.normal(k_img, (B, N_FRAMES, IMG_HID), jnp.float32)

    fwd = jax.jit(multimodal_adapter_clf)
    logits = jax.block_until_ready(fwd(params, txt, mask, segment, img))
    assert logits.shape == (B, N_CLASSES) and bool(jnp.all(jnp.isfinite(logits)))
    print("KERNEL_OK")
</pallas_src>

<mosaic_0001>
module attributes {stable_mosaic.version = 11 : i64} {
  func.func @_fused_forward_kernel(%arg0: memref<16x1xi32, #tpu.memory_space<vmem>>, %arg1: memref<16x1xi32, #tpu.memory_space<vmem>>, %arg2: memref<2x8xf32, #tpu.memory_space<vmem>>, %arg3: memref<2x4x64xf32, #tpu.memory_space<vmem>>, %arg4: memref<50x32xf32, #tpu.memory_space<vmem>>, %arg5: memref<16x32xf32, #tpu.memory_space<vmem>>, %arg6: memref<2x32xf32, #tpu.memory_space<vmem>>, %arg7: memref<1x32xf32, #tpu.memory_space<vmem>>, %arg8: memref<1x32xf32, #tpu.memory_space<vmem>>, %arg9: memref<64x32xf32, #tpu.memory_space<vmem>>, %arg10: memref<1x32xf32, #tpu.memory_space<vmem>>, %arg11: memref<2x32x96xf32, #tpu.memory_space<vmem>>, %arg12: memref<2x1x96xf32, #tpu.memory_space<vmem>>, %arg13: memref<2x32x32xf32, #tpu.memory_space<vmem>>, %arg14: memref<2x1x32xf32, #tpu.memory_space<vmem>>, %arg15: memref<2x1x32xf32, #tpu.memory_space<vmem>>, %arg16: memref<2x1x32xf32, #tpu.memory_space<vmem>>, %arg17: memref<2x32x128xf32, #tpu.memory_space<vmem>>, %arg18: memref<2x1x128xf32, #tpu.memory_space<vmem>>, %arg19: memref<2x128x32xf32, #tpu.memory_space<vmem>>, %arg20: memref<2x1x32xf32, #tpu.memory_space<vmem>>, %arg21: memref<2x32x16xf32, #tpu.memory_space<vmem>>, %arg22: memref<2x32x16xf32, #tpu.memory_space<vmem>>, %arg23: memref<2x1x16xf32, #tpu.memory_space<vmem>>, %arg24: memref<2x16x32xf32, #tpu.memory_space<vmem>>, %arg25: memref<2x1x32xf32, #tpu.memory_space<vmem>>, %arg26: memref<2x1x32xf32, #tpu.memory_space<vmem>>, %arg27: memref<2x1x32xf32, #tpu.memory_space<vmem>>, %arg28: memref<32x32xf32, #tpu.memory_space<vmem>>, %arg29: memref<1x32xf32, #tpu.memory_space<vmem>>, %arg30: memref<32x32xf32, #tpu.memory_space<vmem>>, %arg31: memref<1x32xf32, #tpu.memory_space<vmem>>, %arg32: memref<1x32xf32, #tpu.memory_space<vmem>>, %arg33: memref<1x32xf32, #tpu.memory_space<vmem>>, %arg34: memref<32x3xf32, #tpu.memory_space<vmem>>, %arg35: memref<1x3xf32, #tpu.memory_space<vmem>>, %arg36: memref<2x3xf32, #tpu.memory_space<vmem>>) attributes {dimension_semantics = [], scalar_prefetch = 0 : i64, scratch_operands = 0 : i64, tpu.core_type = #tpu.core_type<tc>} {
    %c0 = arith.constant 0 : index
    %c0_0 = arith.constant 0 : index
    %c0_1 = arith.constant 0 : index
    %0 = vector.load %arg3[%c0, %c0_0, %c0_1] : memref<2x4x64xf32, #tpu.memory_space<vmem>>, vector<2x4x64xf32>
    %cst = arith.constant dense<0.000000e+00> : vector<2x64xf32>
    %1 = vector.multi_reduction <add>, %0, %cst [1] : vector<2x4x64xf32> to vector<2x64xf32>
    %cst_2 = arith.constant 4.000000e+00 : f32
    %2 = vector.broadcast %cst_2 : f32 to vector<2x64xf32>
    %3 = arith.divf %1, %2 : vector<2x64xf32>
    %c0_3 = arith.constant 0 : index
    %c0_4 = arith.constant 0 : index
    %4 = vector.load %arg9[%c0_3, %c0_4] : memref<64x32xf32, #tpu.memory_space<vmem>>, vector<64x32xf32>
    %cst_5 = arith.constant dense<0.000000e+00> : vector<2x32xf32>
    %5 = tpu.matmul %3, %4, %cst_5 {dimension_numbers = #tpu.dot_dimension_numbers<[1], [0], [0], [1], [0, 0, 1, 1], [], []>} : vector<2x64xf32>, vector<64x32xf32>, vector<2x32xf32> -> vector<2x32xf32>
    %c0_6 = arith.constant 0 : index
    %c0_7 = arith.constant 0 : index
    %6 = vector.load %arg10[%c0_6, %c0_7] : memref<1x32xf32, #tpu.memory_space<vmem>>, vector<1x32xf32>
    %7 = vector.broadcast %6 : vector<1x32xf32> to vector<2x32xf32>
    %8 = arith.addf %5, %7 : vector<2x32xf32>
    %c0_8 = arith.constant 0 : index
    %c0_9 = arith.constant 0 : index
    %9 = vector.load %arg0[%c0_8, %c0_9] : memref<16x1xi32, #tpu.memory_space<vmem>>, vector<16x1xi32>
    %c0_10 = arith.constant 0 : index
    %c0_11 = arith.constant 0 : index
    %10 = vector.load %arg1[%c0_10, %c0_11] : memref<16x1xi32, #tpu.memory_space<vmem>>, vector<16x1xi32>
    %11 = tpu.iota {dimensions = array<i32: 1>} : vector<16x50xi32>
    %12 = tpu.iota {dimensions = array<i32: 1>} : vector<16x2xi32>
    %13 = vector.broadcast %9 : vector<16x1xi32> to vector<16x50xi32>
    %14 = arith.cmpi eq, %13, %11 : vector<16x50xi32>
    %15 = arith.extui %14 : vector<16x50xi1> to vector<16x50xi32>
    %16 = arith.sitofp %15 : vector<16x50xi32> to vector<16x50xf32>
    %17 = vector.broadcast %10 : vector<16x1xi32> to vector<16x2xi32>
    %18 = arith.cmpi eq, %17, %12 : vector<16x2xi32>
    %19 = arith.extui %18 : vector<16x2xi1> to vector<16x2xi32>
    %20 = arith.sitofp %19 : vector<16x2xi32> to vector<16x2xf32>
    %c0_12 = arith.constant 0 : index
    %c0_13 = arith.constant 0 : index
    %21 = vector.load %arg4[%c0_12, %c0_13] : memref<50x32xf32, #tpu.memory_space<vmem>>, vector<50x32xf32>
    %cst_14 = arith.constant dense<0.000000e+00> : vector<16x32xf32>
    %22 = tpu.matmul %16, %21, %cst_14 {dimension_numbers = #tpu.dot_dimension_numbers<[1], [0], [0], [1], [0, 0, 1, 1], [], []>} : vector<16x50xf32>, vector<50x32xf32>, vector<16x32xf32> -> vector<16x32xf32>
    %c0_15 = arith.constant 0 : index
    %c0_16 = arith.constant 0 : index
    %23 = vector.load %arg6[%c0_15, %c0_16] : memref<2x32xf32, #tpu.memory_space<vmem>>, vector<2x32xf32>
    %cst_17 = arith.constant dense<0.000000e+00> : vector<16x32xf32>
    %24 = tpu.matmul %20, %23, %cst_17 {dimension_numbers = #tpu.dot_dimension_numbers<[1], [0], [0], [1], [0, 0, 1, 1], [], []>} : vector<16x2xf32>, vector<2x32xf32>, vector<16x32xf32> -> vector<16x32xf32>
    %25 = arith.addf %22, %24 : vector<16x32xf32>
    %26 = vector.shape_cast %25 : vector<16x32xf32> to vector<2x8x32xf32>
    %c0_18 = arith.constant 0 : index
    %c0_19 = arith.constant 0 : index
    %27 = vector.load %arg5[%c0_18, %c0_19] : memref<16x32xf32, #tpu.memory_space<vmem>>, vector<8x32xf32>
    %28 = vector.shape_cast %27 : vector<8x32xf32> to vector<1x8x32xf32>
    %29 = vector.broadcast %28 : vector<1x8x32xf32> to vector<2x8x32xf32>
    %30 = arith.addf %26, %29 : vector<2x8x32xf32>
    %31 = vector.shape_cast %30 : vector<2x8x32xf32> to vector<16x32xf32>
    %c0_20 = arith.constant 0 : index
    %c0_21 = arith.constant 0 : index
    %32 = vector.load %arg7[%c0_20, %c0_21] : memref<1x32xf32, #tpu.memory_space<vmem>>, vector<1x32xf32>
    %c0_22 = arith.constant 0 : index
    %c0_23 = arith.constant 0 : index
    %33 = vector.load %arg8[%c0_22, %c0_23] : memref<1x32xf32, #tpu.memory_space<vmem>>, vector<1x32xf32>
    %cst_24 = arith.constant dense<0.000000e+00> : vector<16xf32>
    %34 = vector.multi_reduction <add>, %31, %cst_24 [1] : vector<16x32xf32> to vector<16xf32>
    %35 = vector.shape_cast %34 : vector<16xf32> to vector<16x1xf32>
    %cst_25 = arith.constant 3.200000e+01 : f32
    %36 = vector.broadcast %cst_25 : f32 to vector<16x1xf32>
    %37 = arith.divf %35, %36 : vector<16x1xf32>
    %38 = vector.broadcast %37 : vector<16x1xf32> to vector<16x32xf32>
    %39 = arith.subf %31, %38 : vector<16x32xf32>
    %40 = arith.mulf %39, %39 : vector<16x32xf32>
    %cst_26 = arith.constant dense<0.000000e+00> : vector<16xf32>
    %41 = vector.multi_reduction <add>, %40, %cst_26 [1] : vector<16x32xf32> to vector<16xf32>
    %42 = vector.shape_cast %41 : vector<16xf32> to vector<16x1xf32>
    %cst_27 = arith.constant 3.200000e+01 : f32
    %43 = vector.broadcast %cst_27 : f32 to vector<16x1xf32>
    %44 = arith.divf %42, %43 : vector<16x1xf32>
    %45 = vector.broadcast %37 : vector<16x1xf32> to vector<16x32xf32>
    %46 = arith.subf %31, %45 : vector<16x32xf32>
    %cst_28 = arith.constant 9.99999996E-13 : f32
    %47 = vector.broadcast %cst_28 : f32 to vector<16x1xf32>
    %48 = arith.addf %44, %47 : vector<16x1xf32>
    %49 = math.rsqrt %48 : vector<16x1xf32>
    %50 = vector.broadcast %49 : vector<16x1xf32> to vector<16x32xf32>
    %51 = arith.mulf %46, %50 : vector<16x32xf32>
    %52 = vector.broadcast %32 : vector<1x32xf32> to vector<16x32xf32>
    %53 = arith.mulf %51, %52 : vector<16x32xf32>
    %54 = vector.broadcast %33 : vector<1x32xf32> to vector<16x32xf32>
    %55 = arith.addf %53, %54 : vector<16x32xf32>
    %c0_29 = arith.constant 0 : index
    %c0_30 = arith.constant 0 : index
    %56 = vector.load %arg2[%c0_29, %c0_30] : memref<2x8xf32, #tpu.memory_space<vmem>>, vector<2x8xf32>
    %cst_31 = arith.constant 1.000000e+00 : f32
    %57 = vector.broadcast %cst_31 : f32 to vector<2x8xf32>
    %58 = arith.subf %57, %56 : vector<2x8xf32>
    %cst_32 = arith.constant -1.000000e+04 : f32
    %59 = vector.broadcast %cst_32 : f32 to vector<2x8xf32>
    %60 = arith.mulf %58, %59 : vector<2x8xf32>
    %61 = vector.shape_cast %60 : vector<2x8xf32> to vector<2x1x8xf32>
    %c0_33 = arith.constant 0 : index
    %c0_34 = arith.constant 0 : index
    %c0_35 = arith.constant 0 : index
    %62 = vector.load %arg11[%c0_33, %c0_34, %c0_35] : memref<2x32x96xf32, #tpu.memory_space<vmem>>, vector<1x32x96xf32>
    %63 = vector.shape_cast %62 : vector<1x32x96xf32> to vector<32x96xf32>
    %cst_36 = arith.constant dense<0.000000e+00> : vector<16x96xf32>
    %64 = tpu.matmul %55, %63, %cst_36 {dimension_numbers = #tpu.dot_dimension_numbers<[1], [0], [0], [1], [0, 0, 1, 1], [], []>} : vector<16x32xf32>, vector<32x96xf32>, vector<16x96xf32> -> vector<16x96xf32>
    %c0_37 = arith.constant 0 : index
    %c0_38 = arith.constant 0 : index
    %c0_39 = arith.constant 0 : index
    %65 = vector.load %arg12[%c0_37, %c0_38, %c0_39] : memref<2x1x96xf32, #tpu.memory_space<vmem>>, vector<1x1x96xf32>
    %66 = vector.shape_cast %65 : vector<1x1x96xf32> to vector<1x96xf32>
    %67 = vector.broadcast %66 : vector<1x96xf32> to vector<16x96xf32>
    %68 = arith.addf %64, %67 : vector<16x96xf32>
    %69 = vector.extract_strided_slice %68 {offsets = [0, 0], sizes = [16, 32], strides = [1, 1]} : vector<16x96xf32> to vector<16x32xf32>
    %70 = vector.shape_cast %69 : vector<16x32xf32> to vector<2x8x32xf32>
    %71 = vector.extract_strided_slice %68 {offsets = [0, 32], sizes = [16, 32], strides = [1, 1]} : vector<16x96xf32> to vector<16x32xf32>
    %72 = vector.shape_cast %71 : vector<16x32xf32> to vector<2x8x32xf32>
    %73 = vector.extract_strided_slice %68 {offsets = [0, 64], sizes = [16, 32], strides = [1, 1]} : vector<16x96xf32> to vector<16x32xf32>
    %74 = vector.shape_cast %73 : vector<16x32xf32> to vector<2x8x32xf32>
    %c0_40 = arith.constant 0 : index
    %c0_41 = arith.constant 0 : index
    %c0_42 = arith.constant 0 : index
    %75 = vector.load %arg13[%c0_40, %c0_41, %c0_42] : memref<2x32x32xf32, #tpu.memory_space<vmem>>, vector<1x32x32xf32>
    %76 = vector.shape_cast %75 : vector<1x32x32xf32> to vector<32x32xf32>
    %cst_43 = arith.constant 0.000000e+00 : f32
    %77 = vector.broadcast %cst_43 : f32 to vector<16x32xf32>
    %78 = vector.extract_strided_slice %70 {offsets = [0, 0, 0], sizes = [2, 8, 16], strides = [1, 1, 1]} : vector<2x8x32xf32> to vector<2x8x16xf32>
    %79 = vector.extract_strided_slice %72 {offsets = [0, 0, 0], sizes = [2, 8, 16], strides = [1, 1, 1]} : vector<2x8x32xf32> to vector<2x8x16xf32>
    "tpu.trace_start"() <{level = 10 : i32, message = "bqd,bkd->bqk"}> : () -> ()
    %cst_44 = arith.constant dense<0.000000e+00> : vector<2x8x8xf32>
    %80 = tpu.matmul %78, %79, %cst_44 {dimension_numbers = #tpu.dot_dimension_numbers<[2], [2], [1], [1], [0, 0, 0, 1, 1, 1], [0], [0]>} : vector<2x8x16xf32>, vector<2x8x16xf32>, vector<2x8x8xf32> -> vector<2x8x8xf32>
    "tpu.trace_stop"() : () -> ()
    %cst_45 = arith.constant 2.500000e-01 : f32
    %81 = vector.broadcast %cst_45 : f32 to vector<2x8x8xf32>
    %82 = arith.mulf %80, %81 : vector<2x8x8xf32>
    %83 = vector.broadcast %61 : vector<2x1x8xf32> to vector<2x8x8xf32>
    %84 = arith.addf %82, %83 : vector<2x8x8xf32>
    %cst_46 = arith.constant dense<0xFF800000> : vector<2x8xf32>
    %85 = vector.multi_reduction <maximumf>, %84, %cst_46 [2] : vector<2x8x8xf32> to vector<2x8xf32>
    %86 = vector.shape_cast %85 : vector<2x8xf32> to vector<2x8x1xf32>
    %87 = vector.broadcast %86 : vector<2x8x1xf32> to vector<2x8x8xf32>
    %88 = arith.subf %84, %87 : vector<2x8x8xf32>
    %89 = math.exp %88 : vector<2x8x8xf32>
    %cst_47 = arith.constant dense<0.000000e+00> : vector<2x8xf32>
    %90 = vector.multi_reduction <add>, %89, %cst_47 [2] : vector<2x8x8xf32> to vector<2x8xf32>
    %91 = vector.shape_cast %90 : vector<2x8xf32> to vector<2x8x1xf32>
    %92 = vector.broadcast %91 : vector<2x8x1xf32> to vector<2x8x8xf32>
    %93 = arith.divf %89, %92 : vector<2x8x8xf32>
    %94 = vector.extract_strided_slice %74 {offsets = [0, 0, 0], sizes = [2, 8, 16], strides = [1, 1, 1]} : vector<2x8x32xf32> to vector<2x8x16xf32>
    "tpu.trace_start"() <{level = 10 : i32, message = "bqk,bkd->bqd"}> : () -> ()
    %cst_48 = arith.constant dense<0.000000e+00> : vector<2x8x16xf32>
    %95 = tpu.matmul %93, %94, %cst_48 {dimension_numbers = #tpu.dot_dimension_numbers<[2], [1], [1], [2], [0, 0, 0, 1, 1, 2], [0], [0]>} : vector<2x8x8xf32>, vector<2x8x16xf32>, vector<2x8x16xf32> -> vector<2x8x16xf32>
    "tpu.trace_stop"() : () -> ()
    %96 = vector.shape_cast %95 : vector<2x8x16xf32> to vector<16x16xf32>
    %97 = vector.extract_strided_slice %76 {offsets = [0, 0], sizes = [16, 32], strides = [1, 1]} : vector<32x32xf32> to vector<16x32xf32>
    %cst_49 = arith.constant dense<0.000000e+00> : vector<16x32xf32>
    %98 = tpu.matmul %96, %97, %cst_49 {dimension_numbers = #tpu.dot_dimension_numbers<[1], [0], [0], [1], [0, 0, 1, 1], [], []>} : vector<16x16xf32>, vector<16x32xf32>, vector<16x32xf32> -> vector<16x32xf32>
    %99 = arith.addf %77, %98 : vector<16x32xf32>
    %100 = vector.extract_strided_slice %70 {offsets = [0, 0, 16], sizes = [2, 8, 16], strides = [1, 1, 1]} : vector<2x8x32xf32> to vector<2x8x16xf32>
    %101 = vector.extract_strided_slice %72 {offsets = [0, 0, 16], sizes = [2, 8, 16], strides = [1, 1, 1]} : vector<2x8x32xf32> to vector<2x8x16xf32>
    "tpu.trace_start"() <{level = 10 : i32, message = "bqd,bkd->bqk"}> : () -> ()
    %cst_50 = arith.constant dense<0.000000e+00> : vector<2x8x8xf32>
    %102 = tpu.matmul %100, %101, %cst_50 {dimension_numbers = #tpu.dot_dimension_numbers<[2], [2], [1], [1], [0, 0, 0, 1, 1, 1], [0], [0]>} : vector<2x8x16xf32>, vector<2x8x16xf32>, vector<2x8x8xf32> -> vector<2x8x8xf32>
    "tpu.trace_stop"() : () -> ()
    %cst_51 = arith.constant 2.500000e-01 : f32
    %103 = vector.broadcast %cst_51 : f32 to vector<2x8x8xf32>
    %104 = arith.mulf %102, %103 : vector<2x8x8xf32>
    %105 = vector.broadcast %61 : vector<2x1x8xf32> to vector<2x8x8xf32>
    %106 = arith.addf %104, %105 : vector<2x8x8xf32>
    %cst_52 = arith.constant dense<0xFF800000> : vector<2x8xf32>
    %107 = vector.multi_reduction <maximumf>, %106, %cst_52 [2] : vector<2x8x8xf32> to vector<2x8xf32>
    %108 = vector.shape_cast %107 : vector<2x8xf32> to vector<2x8x1xf32>
    %109 = vector.broadcast %108 : vector<2x8x1xf32> to vector<2x8x8xf32>
    %110 = arith.subf %106, %109 : vector<2x8x8xf32>
    %111 = math.exp %110 : vector<2x8x8xf32>
    %cst_53 = arith.constant dense<0.000000e+00> : vector<2x8xf32>
    %112 = vector.multi_reduction <add>, %111, %cst_53 [2] : vector<2x8x8xf32> to vector<2x8xf32>
    %113 = vector.shape_cast %112 : vector<2x8xf32> to vector<2x8x1xf32>
    %114 = vector.broadcast %113 : vector<2x8x1xf32> to vector<2x8x8xf32>
    %115 = arith.divf %111, %114 : vector<2x8x8xf32>
    %116 = vector.extract_strided_slice %74 {offsets = [0, 0, 16], sizes = [2, 8, 16], strides = [1, 1, 1]} : vector<2x8x32xf32> to vector<2x8x16xf32>
    "tpu.trace_start"() <{level = 10 : i32, message = "bqk,bkd->bqd"}> : () -> ()
    %cst_54 = arith.constant dense<0.000000e+00> : vector<2x8x16xf32>
    %117 = tpu.matmul %115, %116, %cst_54 {dimension_numbers = #tpu.dot_dimension_numbers<[2], [1], [1], [2], [0, 0, 0, 1, 1, 2], [0], [0]>} : vector<2x8x8xf32>, vector<2x8x16xf32>, vector<2x8x16xf32> -> vector<2x8x16xf32>
    "tpu.trace_stop"() : () -> ()
    %118 = vector.shape_cast %117 : vector<2x8x16xf32> to vector<16x16xf32>
    %119 = vector.extract_strided_slice %76 {offsets = [16, 0], sizes = [16, 32], strides = [1, 1]} : vector<32x32xf32> to vector<16x32xf32>
    %cst_55 = arith.constant dense<0.000000e+00> : vector<16x32xf32>
    %120 = tpu.matmul %118, %119, %cst_55 {dimension_numbers = #tpu.dot_dimension_numbers<[1], [0], [0], [1], [0, 0, 1, 1], [], []>} : vector<16x16xf32>, vector<16x32xf32>, vector<16x32xf32> -> vector<16x32xf32>
    %121 = arith.addf %99, %120 : vector<16x32xf32>
    %c0_56 = arith.constant 0 : index
    %c0_57 = arith.constant 0 : index
    %c0_58 = arith.constant 0 : index
    %122 = vector.load %arg14[%c0_56, %c0_57, %c0_58] : memref<2x1x32xf32, #tpu.memory_space<vmem>>, vector<1x1x32xf32>
    %123 = vector.shape_cast %122 : vector<1x1x32xf32> to vector<1x32xf32>
    %124 = vector.broadcast %123 : vector<1x32xf32> to vector<16x32xf32>
    %125 = arith.addf %121, %124 : vector<16x32xf32>
    %126 = arith.addf %55, %125 : vector<16x32xf32>
    %c0_59 = arith.constant 0 : index
    %c0_60 = arith.constant 0 : index
    %c0_61 = arith.constant 0 : index
    %127 = vector.load %arg15[%c0_59, %c0_60, %c0_61] : memref<2x1x32xf32, #tpu.memory_space<vmem>>, vector<1x1x32xf32>
    %128 = vector.shape_cast %127 : vector<1x1x32xf32> to vector<1x32xf32>
    %c0_62 = arith.constant 0 : index
    %c0_63 = arith.constant 0 : index
    %c0_64 = arith.constant 0 : index
    %129 = vector.load %arg16[%c0_62, %c0_63, %c0_64] : memref<2x1x32xf32, #tpu.memory_space<vmem>>, vector<1x1x32xf32>
    %130 = vector.shape_cast %129 : vector<1x1x32xf32> to vector<1x32xf32>
    %cst_65 = arith.constant dense<0.000000e+00> : vector<16xf32>
    %131 = vector.multi_reduction <add>, %126, %cst_65 [1] : vector<16x32xf32> to vector<16xf32>
    %132 = vector.shape_cast %131 : vector<16xf32> to vector<16x1xf32>
    %cst_66 = arith.constant 3.200000e+01 : f32
    %133 = vector.broadcast %cst_66 : f32 to vector<16x1xf32>
    %134 = arith.divf %132, %133 : vector<16x1xf32>
    %135 = vector.broadcast %134 : vector<16x1xf32> to vector<16x32xf32>
    %136 = arith.subf %126, %135 : vector<16x32xf32>
    %137 = arith.mulf %136, %136 : vector<16x32xf32>
    %cst_67 = arith.constant dense<0.000000e+00> : vector<16xf32>
    %138 = vector.multi_reduction <add>, %137, %cst_67 [1] : vector<16x32xf32> to vector<16xf32>
    %139 = vector.shape_cast %138 : vector<16xf32> to vector<16x1xf32>
    %cst_68 = arith.constant 3.200000e+01 : f32
    %140 = vector.broadcast %cst_68 : f32 to vector<16x1xf32>
    %141 = arith.divf %139, %140 : vector<16x1xf32>
    %142 = vector.broadcast %134 : vector<16x1xf32> to vector<16x32xf32>
    %143 = arith.subf %126, %142 : vector<16x32xf32>
    %cst_69 = arith.constant 9.99999996E-13 : f32
    %144 = vector.broadcast %cst_69 : f32 to vector<16x1xf32>
    %145 = arith.addf %141, %144 : vector<16x1xf32>
    %146 = math.rsqrt %145 : vector<16x1xf32>
    %147 = vector.broadcast %146 : vector<16x1xf32> to vector<16x32xf32>
    %148 = arith.mulf %143, %147 : vector<16x32xf32>
    %149 = vector.broadcast %128 : vector<1x32xf32> to vector<16x32xf32>
    %150 = arith.mulf %148, %149 : vector<16x32xf32>
    %151 = vector.broadcast %130 : vector<1x32xf32> to vector<16x32xf32>
    %152 = arith.addf %150, %151 : vector<16x32xf32>
    %c0_70 = arith.constant 0 : index
    %c0_71 = arith.constant 0 : index
    %c0_72 = arith.constant 0 : index
    %153 = vector.load %arg17[%c0_70, %c0_71, %c0_72] : memref<2x32x128xf32, #tpu.memory_space<vmem>>, vector<1x32x128xf32>
    %154 = vector.shape_cast %153 : vector<1x32x128xf32> to vector<32x128xf32>
    %cst_73 = arith.constant dense<0.000000e+00> : vector<16x128xf32>
    %155 = tpu.matmul %152, %154, %cst_73 {dimension_numbers = #tpu.dot_dimension_numbers<[1], [0], [0], [1], [0, 0, 1, 1], [], []>} : vector<16x32xf32>, vector<32x128xf32>, vector<16x128xf32> -> vector<16x128xf32>
    %c0_74 = arith.constant 0 : index
    %c0_75 = arith.constant 0 : index
    %c0_76 = arith.constant 0 : index
    %156 = vector.load %arg18[%c0_74, %c0_75, %c0_76] : memref<2x1x128xf32, #tpu.memory_space<vmem>>, vector<1x1x128xf32>
    %157 = vector.shape_cast %156 : vector<1x1x128xf32> to vector<1x128xf32>
    %158 = vector.broadcast %157 : vector<1x128xf32> to vector<16x128xf32>
    %159 = arith.addf %155, %158 : vector<16x128xf32>
    %cst_77 = arith.constant 5.000000e-01 : f32
    %160 = vector.broadcast %cst_77 : f32 to vector<16x128xf32>
    %161 = arith.mulf %160, %159 : vector<16x128xf32>
    %cst_78 = arith.constant 4.471500e-02 : f32
    %162 = vector.broadcast %cst_78 : f32 to vector<16x128xf32>
    %163 = arith.mulf %162, %159 : vector<16x128xf32>
    %164 = arith.mulf %163, %159 : vector<16x128xf32>
    %165 = arith.mulf %164, %159 : vector<16x128xf32>
    %166 = arith.addf %159, %165 : vector<16x128xf32>
    %cst_79 = arith.constant 0.797884583 : f32
    %167 = vector.broadcast %cst_79 : f32 to vector<16x128xf32>
    %168 = arith.mulf %167, %166 : vector<16x128xf32>
    %169 = math.tanh %168 : vector<16x128xf32>
    %cst_80 = arith.constant 1.000000e+00 : f32
    %170 = vector.broadcast %cst_80 : f32 to vector<16x128xf32>
    %171 = arith.addf %170, %169 : vector<16x128xf32>
    %172 = arith.mulf %161, %171 : vector<16x128xf32>
    %c0_81 = arith.constant 0 : index
    %c0_82 = arith.constant 0 : index
    %c0_83 = arith.constant 0 : index
    %173 = vector.load %arg19[%c0_81, %c0_82, %c0_83] : memref<2x128x32xf32, #tpu.memory_space<vmem>>, vector<1x128x32xf32>
    %174 = vector.shape_cast %173 : vector<1x128x32xf32> to vector<128x32xf32>
    %cst_84 = arith.constant dense<0.000000e+00> : vector<16x32xf32>
    %175 = tpu.matmul %172, %174, %cst_84 {dimension_numbers = #tpu.dot_dimension_numbers<[1], [0], [0], [1], [0, 0, 1, 1], [], []>} : vector<16x128xf32>, vector<128x32xf32>, vector<16x32xf32> -> vector<16x32xf32>
    %c0_85 = arith.constant 0 : index
    %c0_86 = arith.constant 0 : index
    %c0_87 = arith.constant 0 : index
    %176 = vector.load %arg20[%c0_85, %c0_86, %c0_87] : memref<2x1x32xf32, #tpu.memory_space<vmem>>, vector<1x1x32xf32>
    %177 = vector.shape_cast %176 : vector<1x1x32xf32> to vector<1x32xf32>
    %178 = vector.broadcast %177 : vector<1x32xf32> to vector<16x32xf32>
    %179 = arith.addf %175, %178 : vector<16x32xf32>
    %c0_88 = arith.constant 0 : index
    %c0_89 = arith.constant 0 : index
    %c0_90 = arith.constant 0 : index
    %180 = vector.load %arg22[%c0_88, %c0_89, %c0_90] : memref<2x32x16xf32, #tpu.memory_space<vmem>>, vector<1x32x16xf32>
    %181 = vector.shape_cast %180 : vector<1x32x16xf32> to vector<32x16xf32>
    %cst_91 = arith.constant dense<0.000000e+00> : vector<2x16xf32>
    %182 = tpu.matmul %8, %181, %cst_91 {dimension_numbers = #tpu.dot_dimension_numbers<[1], [0], [0], [1], [0, 0, 1, 1], [], []>} : vector<2x32xf32>, vector<32x16xf32>, vector<2x16xf32> -> vector<2x16xf32>
    %c0_92 = arith.constant 0 : index
    %c0_93 = arith.constant 0 : index
    %c0_94 = arith.constant 0 : index
    %183 = vector.load %arg23[%c0_92, %c0_93, %c0_94] : memref<2x1x16xf32, #tpu.memory_space<vmem>>, vector<1x1x16xf32>
    %184 = vector.shape_cast %183 : vector<1x1x16xf32> to vector<1x16xf32>
    %185 = vector.broadcast %184 : vector<1x16xf32> to vector<2x16xf32>
    %186 = arith.addf %182, %185 : vector<2x16xf32>
    %c0_95 = arith.constant 0 : index
    %c0_96 = arith.constant 0 : index
    %c0_97 = arith.constant 0 : index
    %187 = vector.load %arg21[%c0_95, %c0_96, %c0_97] : memref<2x32x16xf32, #tpu.memory_space<vmem>>, vector<1x32x16xf32>
    %188 = vector.shape_cast %187 : vector<1x32x16xf32> to vector<32x16xf32>
    %cst_98 = arith.constant dense<0.000000e+00> : vector<16x16xf32>
    %189 = tpu.matmul %179, %188, %cst_98 {dimension_numbers = #tpu.dot_dimension_numbers<[1], [0], [0], [1], [0, 0, 1, 1], [], []>} : vector<16x32xf32>, vector<32x16xf32>, vector<16x16xf32> -> vector<16x16xf32>
    %190 = vector.shape_cast %189 : vector<16x16xf32> to vector<2x8x16xf32>
    %191 = vector.shape_cast %186 : vector<2x16xf32> to vector<2x1x16xf32>
    %192 = vector.broadcast %191 : vector<2x1x16xf32> to vector<2x8x16xf32>
    %193 = arith.addf %190, %192 : vector<2x8x16xf32>
    %cst_99 = arith.constant 5.000000e-01 : f32
    %194 = vector.broadcast %cst_99 : f32 to vector<2x8x16xf32>
    %195 = arith.mulf %194, %193 : vector<2x8x16xf32>
    %cst_100 = arith.constant 4.471500e-02 : f32
    %196 = vector.broadcast %cst_100 : f32 to vector<2x8x16xf32>
    %197 = arith.mulf %196, %193 : vector<2x8x16xf32>
    %198 = arith.mulf %197, %193 : vector<2x8x16xf32>
    %199 = arith.mulf %198, %193 : vector<2x8x16xf32>
    %200 = arith.addf %193, %199 : vector<2x8x16xf32>
    %cst_101 = arith.constant 0.797884583 : f32
    %201 = vector.broadcast %cst_101 : f32 to vector<2x8x16xf32>
    %202 = arith.mulf %201, %200 : vector<2x8x16xf32>
    %203 = math.tanh %202 : vector<2x8x16xf32>
    %cst_102 = arith.constant 1.000000e+00 : f32
    %204 = vector.broadcast %cst_102 : f32 to vector<2x8x16xf32>
    %205 = arith.addf %204, %203 : vector<2x8x16xf32>
    %206 = arith.mulf %195, %205 : vector<2x8x16xf32>
    %207 = vector.shape_cast %206 : vector<2x8x16xf32> to vector<16x16xf32>
    %c0_103 = arith.constant 0 : index
    %c0_104 = arith.constant 0 : index
    %c0_105 = arith.constant 0 : index
    %208 = vector.load %arg24[%c0_103, %c0_104, %c0_105] : memref<2x16x32xf32, #tpu.memory_space<vmem>>, vector<1x16x32xf32>
    %209 = vector.shape_cast %208 : vector<1x16x32xf32> to vector<16x32xf32>
    %cst_106 = arith.constant dense<0.000000e+00> : vector<16x32xf32>
    %210 = tpu.matmul %207, %209, %cst_106 {dimension_numbers = #tpu.dot_dimension_numbers<[1], [0], [0], [1], [0, 0, 1, 1], [], []>} : vector<16x16xf32>, vector<16x32xf32>, vector<16x32xf32> -> vector<16x32xf32>
    %c0_107 = arith.constant 0 : index
    %c0_108 = arith.constant 0 : index
    %c0_109 = arith.constant 0 : index
    %211 = vector.load %arg25[%c0_107, %c0_108, %c0_109] : memref<2x1x32xf32, #tpu.memory_space<vmem>>, vector<1x1x32xf32>
    %212 = vector.shape_cast %211 : vector<1x1x32xf32> to vector<1x32xf32>
    %213 = vector.broadcast %212 : vector<1x32xf32> to vector<16x32xf32>
    %214 = arith.addf %210, %213 : vector<16x32xf32>
    %215 = arith.addf %179, %214 : vector<16x32xf32>
    %216 = arith.addf %152, %215 : vector<16x32xf32>
    %c0_110 = arith.constant 0 : index
    %c0_111 = arith.constant 0 : index
    %c0_112 = arith.constant 0 : index
    %217 = vector.load %arg26[%c0_110, %c0_111, %c0_112] : memref<2x1x32xf32, #tpu.memory_space<vmem>>, vector<1x1x32xf32>
    %218 = vector.shape_cast %217 : vector<1x1x32xf32> to vector<1x32xf32>
    %c0_113 = arith.constant 0 : index
    %c0_114 = arith.constant 0 : index
    %c0_115 = arith.constant 0 : index
    %219 = vector.load %arg27[%c0_113, %c0_114, %c0_115] : memref<2x1x32xf32, #tpu.memory_space<vmem>>, vector<1x1x32xf32>
    %220 = vector.shape_cast %219 : vector<1x1x32xf32> to vector<1x32xf32>
    %cst_116 = arith.constant dense<0.000000e+00> : vector<16xf32>
    %221 = vector.multi_reduction <add>, %216, %cst_116 [1] : vector<16x32xf32> to vector<16xf32>
    %222 = vector.shape_cast %221 : vector<16xf32> to vector<16x1xf32>
    %cst_117 = arith.constant 3.200000e+01 : f32
    %223 = vector.broadcast %cst_117 : f32 to vector<16x1xf32>
    %224 = arith.divf %222, %223 : vector<16x1xf32>
    %225 = vector.broadcast %224 : vector<16x1xf32> to vector<16x32xf32>
    %226 = arith.subf %216, %225 : vector<16x32xf32>
    %227 = arith.mulf %226, %226 : vector<16x32xf32>
    %cst_118 = arith.constant dense<0.000000e+00> : vector<16xf32>
    %228 = vector.multi_reduction <add>, %227, %cst_118 [1] : vector<16x32xf32> to vector<16xf32>
    %229 = vector.shape_cast %228 : vector<16xf32> to vector<16x1xf32>
    %cst_119 = arith.constant 3.200000e+01 : f32
    %230 = vector.broadcast %cst_119 : f32 to vector<16x1xf32>
    %231 = arith.divf %229, %230 : vector<16x1xf32>
    %232 = vector.broadcast %224 : vector<16x1xf32> to vector<16x32xf32>
    %233 = arith.subf %216, %232 : vector<16x32xf32>
    %cst_120 = arith.constant 9.99999996E-13 : f32
    %234 = vector.broadcast %cst_120 : f32 to vector<16x1xf32>
    %235 = arith.addf %231, %234 : vector<16x1xf32>
    %236 = math.rsqrt %235 : vector<16x1xf32>
    %237 = vector.broadcast %236 : vector<16x1xf32> to vector<16x32xf32>
    %238 = arith.mulf %233, %237 : vector<16x32xf32>
    %239 = vector.broadcast %218 : vector<1x32xf32> to vector<16x32xf32>
    %240 = arith.mulf %238, %239 : vector<16x32xf32>
    %241 = vector.broadcast %220 : vector<1x32xf32> to vector<16x32xf32>
    %242 = arith.addf %240, %241 : vector<16x32xf32>
    %c1 = arith.constant 1 : index
    %c0_121 = arith.constant 0 : index
    %c0_122 = arith.constant 0 : index
    %243 = vector.load %arg11[%c1, %c0_121, %c0_122] : memref<2x32x96xf32, #tpu.memory_space<vmem>>, vector<1x32x96xf32>
    %244 = vector.shape_cast %243 : vector<1x32x96xf32> to vector<32x96xf32>
    %cst_123 = arith.constant dense<0.000000e+00> : vector<16x96xf32>
    %245 = tpu.matmul %242, %244, %cst_123 {dimension_numbers = #tpu.dot_dimension_numbers<[1], [0], [0], [1], [0, 0, 1, 1], [], []>} : vector<16x32xf32>, vector<32x96xf32>, vector<16x96xf32> -> vector<16x96xf32>
    %c1_124 = arith.constant 1 : index
    %c0_125 = arith.constant 0 : index
    %c0_126 = arith.constant 0 : index
    %246 = vector.load %arg12[%c1_124, %c0_125, %c0_126] : memref<2x1x96xf32, #tpu.memory_space<vmem>>, vector<1x1x96xf32>
    %247 = vector.shape_cast %246 : vector<1x1x96xf32> to vector<1x96xf32>
    %248 = vector.broadcast %247 : vector<1x96xf32> to vector<16x96xf32>
    %249 = arith.addf %245, %248 : vector<16x96xf32>
    %250 = vector.extract_strided_slice %249 {offsets = [0, 0], sizes = [16, 32], strides = [1, 1]} : vector<16x96xf32> to vector<16x32xf32>
    %251 = vector.shape_cast %250 : vector<16x32xf32> to vector<2x8x32xf32>
    %252 = vector.extract_strided_slice %249 {offsets = [0, 32], sizes = [16, 32], strides = [1, 1]} : vector<16x96xf32> to vector<16x32xf32>
    %253 = vector.shape_cast %252 : vector<16x32xf32> to vector<2x8x32xf32>
    %254 = vector.extract_strided_slice %249 {offsets = [0, 64], sizes = [16, 32], strides = [1, 1]} : vector<16x96xf32> to vector<16x32xf32>
    %255 = vector.shape_cast %254 : vector<16x32xf32> to vector<2x8x32xf32>
    %c1_127 = arith.constant 1 : index
    %c0_128 = arith.constant 0 : index
    %c0_129 = arith.constant 0 : index
    %256 = vector.load %arg13[%c1_127, %c0_128, %c0_129] : memref<2x32x32xf32, #tpu.memory_space<vmem>>, vector<1x32x32xf32>
    %257 = vector.shape_cast %256 : vector<1x32x32xf32> to vector<32x32xf32>
    %cst_130 = arith.constant 0.000000e+00 : f32
    %258 = vector.broadcast %cst_130 : f32 to vector<16x32xf32>
    %259 = vector.extract_strided_slice %251 {offsets = [0, 0, 0], sizes = [2, 8, 16], strides = [1, 1, 1]} : vector<2x8x32xf32> to vector<2x8x16xf32>
    %260 = vector.extract_strided_slice %253 {offsets = [0, 0, 0], sizes = [2, 8, 16], strides = [1, 1, 1]} : vector<2x8x32xf32> to vector<2x8x16xf32>
    "tpu.trace_start"() <{level = 10 : i32, message = "bqd,bkd->bqk"}> : () -> ()
    %cst_131 = arith.constant dense<0.000000e+00> : vector<2x8x8xf32>
    %261 = tpu.matmul %259, %260, %cst_131 {dimension_numbers = #tpu.dot_dimension_numbers<[2], [2], [1], [1], [0, 0, 0, 1, 1, 1], [0], [0]>} : vector<2x8x16xf32>, vector<2x8x16xf32>, vector<2x8x8xf32> -> vector<2x8x8xf32>
    "tpu.trace_stop"() : () -> ()
    %cst_132 = arith.constant 2.500000e-01 : f32
    %262 = vector.broadcast %cst_132 : f32 to vector<2x8x8xf32>
    %263 = arith.mulf %261, %262 : vector<2x8x8xf32>
    %264 = vector.broadcast %61 : vector<2x1x8xf32> to vector<2x8x8xf32>
    %265 = arith.addf %263, %264 : vector<2x8x8xf32>
    %cst_133 = arith.constant dense<0xFF800000> : vector<2x8xf32>
    %266 = vector.multi_reduction <maximumf>, %265, %cst_133 [2] : vector<2x8x8xf32> to vector<2x8xf32>
    %267 = vector.shape_cast %266 : vector<2x8xf32> to vector<2x8x1xf32>
    %268 = vector.broadcast %267 : vector<2x8x1xf32> to vector<2x8x8xf32>
    %269 = arith.subf %265, %268 : vector<2x8x8xf32>
    %270 = math.exp %269 : vector<2x8x8xf32>
    %cst_134 = arith.constant dense<0.000000e+00> : vector<2x8xf32>
    %271 = vector.multi_reduction <add>, %270, %cst_134 [2] : vector<2x8x8xf32> to vector<2x8xf32>
    %272 = vector.shape_cast %271 : vector<2x8xf32> to vector<2x8x1xf32>
    %273 = vector.broadcast %272 : vector<2x8x1xf32> to vector<2x8x8xf32>
    %274 = arith.divf %270, %273 : vector<2x8x8xf32>
    %275 = vector.extract_strided_slice %255 {offsets = [0, 0, 0], sizes = [2, 8, 16], strides = [1, 1, 1]} : vector<2x8x32xf32> to vector<2x8x16xf32>
    "tpu.trace_start"() <{level = 10 : i32, message = "bqk,bkd->bqd"}> : () -> ()
    %cst_135 = arith.constant dense<0.000000e+00> : vector<2x8x16xf32>
    %276 = tpu.matmul %274, %275, %cst_135 {dimension_numbers = #tpu.dot_dimension_numbers<[2], [1], [1], [2], [0, 0, 0, 1, 1, 2], [0], [0]>} : vector<2x8x8xf32>, vector<2x8x16xf32>, vector<2x8x16xf32> -> vector<2x8x16xf32>
    "tpu.trace_stop"() : () -> ()
    %277 = vector.shape_cast %276 : vector<2x8x16xf32> to vector<16x16xf32>
    %278 = vector.extract_strided_slice %257 {offsets = [0, 0], sizes = [16, 32], strides = [1, 1]} : vector<32x32xf32> to vector<16x32xf32>
    %cst_136 = arith.constant dense<0.000000e+00> : vector<16x32xf32>
    %279 = tpu.matmul %277, %278, %cst_136 {dimension_numbers = #tpu.dot_dimension_numbers<[1], [0], [0], [1], [0, 0, 1, 1], [], []>} : vector<16x16xf32>, vector<16x32xf32>, vector<16x32xf32> -> vector<16x32xf32>
    %280 = arith.addf %258, %279 : vector<16x32xf32>
    %281 = vector.extract_strided_slice %251 {offsets = [0, 0, 16], sizes = [2, 8, 16], strides = [1, 1, 1]} : vector<2x8x32xf32> to vector<2x8x16xf32>
    %282 = vector.extract_strided_slice %253 {offsets = [0, 0, 16], sizes = [2, 8, 16], strides = [1, 1, 1]} : vector<2x8x32xf32> to vector<2x8x16xf32>
    "tpu.trace_start"() <{level = 10 : i32, message = "bqd,bkd->bqk"}> : () -> ()
    %cst_137 = arith.constant dense<0.000000e+00> : vector<2x8x8xf32>
    %283 = tpu.matmul %281, %282, %cst_137 {dimension_numbers = #tpu.dot_dimension_numbers<[2], [2], [1], [1], [0, 0, 0, 1, 1, 1], [0], [0]>} : vector<2x8x16xf32>, vector<2x8x16xf32>, vector<2x8x8xf32> -> vector<2x8x8xf32>
    "tpu.trace_stop"() : () -> ()
    %cst_138 = arith.constant 2.500000e-01 : f32
    %284 = vector.broadcast %cst_138 : f32 to vector<2x8x8xf32>
    %285 = arith.mulf %283, %284 : vector<2x8x8xf32>
    %286 = vector.broadcast %61 : vector<2x1x8xf32> to vector<2x8x8xf32>
    %287 = arith.addf %285, %286 : vector<2x8x8xf32>
    %cst_139 = arith.constant dense<0xFF800000> : vector<2x8xf32>
    %288 = vector.multi_reduction <maximumf>, %287, %cst_139 [2] : vector<2x8x8xf32> to vector<2x8xf32>
    %289 = vector.shape_cast %288 : vector<2x8xf32> to vector<2x8x1xf32>
    %290 = vector.broadcast %289 : vector<2x8x1xf32> to vector<2x8x8xf32>
    %291 = arith.subf %287, %290 : vector<2x8x8xf32>
    %292 = math.exp %291 : vector<2x8x8xf32>
    %cst_140 = arith.constant dense<0.000000e+00> : vector<2x8xf32>
    %293 = vector.multi_reduction <add>, %292, %cst_140 [2] : vector<2x8x8xf32> to vector<2x8xf32>
    %294 = vector.shape_cast %293 : vector<2x8xf32> to vector<2x8x1xf32>
    %295 = vector.broadcast %294 : vector<2x8x1xf32> to vector<2x8x8xf32>
    %296 = arith.divf %292, %295 : vector<2x8x8xf32>
    %297 = vector.extract_strided_slice %255 {offsets = [0, 0, 16], sizes = [2, 8, 16], strides = [1, 1, 1]} : vector<2x8x32xf32> to vector<2x8x16xf32>
    "tpu.trace_start"() <{level = 10 : i32, message = "bqk,bkd->bqd"}> : () -> ()
    %cst_141 = arith.constant dense<0.000000e+00> : vector<2x8x16xf32>
    %298 = tpu.matmul %296, %297, %cst_141 {dimension_numbers = #tpu.dot_dimension_numbers<[2], [1], [1], [2], [0, 0, 0, 1, 1, 2], [0], [0]>} : vector<2x8x8xf32>, vector<2x8x16xf32>, vector<2x8x16xf32> -> vector<2x8x16xf32>
    "tpu.trace_stop"() : () -> ()
    %299 = vector.shape_cast %298 : vector<2x8x16xf32> to vector<16x16xf32>
    %300 = vector.extract_strided_slice %257 {offsets = [16, 0], sizes = [16, 32], strides = [1, 1]} : vector<32x32xf32> to vector<16x32xf32>
    %cst_142 = arith.constant dense<0.000000e+00> : vector<16x32xf32>
    %301 = tpu.matmul %299, %300, %cst_142 {dimension_numbers = #tpu.dot_dimension_numbers<[1], [0], [0], [1], [0, 0, 1, 1], [], []>} : vector<16x16xf32>, vector<16x32xf32>, vector<16x32xf32> -> vector<16x32xf32>
    %302 = arith.addf %280, %301 : vector<16x32xf32>
    %c1_143 = arith.constant 1 : index
    %c0_144 = arith.constant 0 : index
    %c0_145 = arith.constant 0 : index
    %303 = vector.load %arg14[%c1_143, %c0_144, %c0_145] : memref<2x1x32xf32, #tpu.memory_space<vmem>>, vector<1x1x32xf32>
    %304 = vector.shape_cast %303 : vector<1x1x32xf32> to vector<1x32xf32>
    %305 = vector.broadcast %304 : vector<1x32xf32> to vector<16x32xf32>
    %306 = arith.addf %302, %305 : vector<16x32xf32>
    %307 = arith.addf %242, %306 : vector<16x32xf32>
    %c1_146 = arith.constant 1 : index
    %c0_147 = arith.constant 0 : index
    %c0_148 = arith.constant 0 : index
    %308 = vector.load %arg15[%c1_146, %c0_147, %c0_148] : memref<2x1x32xf32, #tpu.memory_space<vmem>>, vector<1x1x32xf32>
    %309 = vector.shape_cast %308 : vector<1x1x32xf32> to vector<1x32xf32>
    %c1_149 = arith.constant 1 : index
    %c0_150 = arith.constant 0 : index
    %c0_151 = arith.constant 0 : index
    %310 = vector.load %arg16[%c1_149, %c0_150, %c0_151] : memref<2x1x32xf32, #tpu.memory_space<vmem>>, vector<1x1x32xf32>
    %311 = vector.shape_cast %310 : vector<1x1x32xf32> to vector<1x32xf32>
    %cst_152 = arith.constant dense<0.000000e+00> : vector<16xf32>
    %312 = vector.multi_reduction <add>, %307, %cst_152 [1] : vector<16x32xf32> to vector<16xf32>
    %313 = vector.shape_cast %312 : vector<16xf32> to vector<16x1xf32>
    %cst_153 = arith.constant 3.200000e+01 : f32
    %314 = vector.broadcast %cst_153 : f32 to vector<16x1xf32>
    %315 = arith.divf %313, %314 : vector<16x1xf32>
    %316 = vector.broadcast %315 : vector<16x1xf32> to vector<16x32xf32>
    %317 = arith.subf %307, %316 : vector<16x32xf32>
    %318 = arith.mulf %317, %317 : vector<16x32xf32>
    %cst_154 = arith.constant dense<0.000000e+00> : vector<16xf32>
    %319 = vector.multi_reduction <add>, %318, %cst_154 [1] : vector<16x32xf32> to vector<16xf32>
    %320 = vector.shape_cast %319 : vector<16xf32> to vector<16x1xf32>
    %cst_155 = arith.constant 3.200000e+01 : f32
    %321 = vector.broadcast %cst_155 : f32 to vector<16x1xf32>
    %322 = arith.divf %320, %321 : vector<16x1xf32>
    %323 = vector.broadcast %315 : vector<16x1xf32> to vector<16x32xf32>
    %324 = arith.subf %307, %323 : vector<16x32xf32>
    %cst_156 = arith.constant 9.99999996E-13 : f32
    %325 = vector.broadcast %cst_156 : f32 to vector<16x1xf32>
    %326 = arith.addf %322, %325 : vector<16x1xf32>
    %327 = math.rsqrt %326 : vector<16x1xf32>
    %328 = vector.broadcast %327 : vector<16x1xf32> to vector<16x32xf32>
    %329 = arith.mulf %324, %328 : vector<16x32xf32>
    %330 = vector.broadcast %309 : vector<1x32xf32> to vector<16x32xf32>
    %331 = arith.mulf %329, %330 : vector<16x32xf32>
    %332 = vector.broadcast %311 : vector<1x32xf32> to vector<16x32xf32>
    %333 = arith.addf %331, %332 : vector<16x32xf32>
    %c1_157 = arith.constant 1 : index
    %c0_158 = arith.constant 0 : index
    %c0_159 = arith.constant 0 : index
    %334 = vector.load %arg17[%c1_157, %c0_158, %c0_159] : memref<2x32x128xf32, #tpu.memory_space<vmem>>, vector<1x32x128xf32>
    %335 = vector.shape_cast %334 : vector<1x32x128xf32> to vector<32x128xf32>
    %cst_160 = arith.constant dense<0.000000e+00> : vector<16x128xf32>
    %336 = tpu.matmul %333, %335, %cst_160 {dimension_numbers = #tpu.dot_dimension_numbers<[1], [0], [0], [1], [0, 0, 1, 1], [], []>} : vector<16x32xf32>, vector<32x128xf32>, vector<16x128xf32> -> vector<16x128xf32>
    %c1_161 = arith.constant 1 : index
    %c0_162 = arith.constant 0 : index
    %c0_163 = arith.constant 0 : index
    %337 = vector.load %arg18[%c1_161, %c0_162, %c0_163] : memref<2x1x128xf32, #tpu.memory_space<vmem>>, vector<1x1x128xf32>
    %338 = vector.shape_cast %337 : vector<1x1x128xf32> to vector<1x128xf32>
    %339 = vector.broadcast %338 : vector<1x128xf32> to vector<16x128xf32>
    %340 = arith.addf %336, %339 : vector<16x128xf32>
    %cst_164 = arith.constant 5.000000e-01 : f32
    %341 = vector.broadcast %cst_164 : f32 to vector<16x128xf32>
    %342 = arith.mulf %341, %340 : vector<16x128xf32>
    %cst_165 = arith.constant 4.471500e-02 : f32
    %343 = vector.broadcast %cst_165 : f32 to vector<16x128xf32>
    %344 = arith.mulf %343, %340 : vector<16x128xf32>
    %345 = arith.mulf %344, %340 : vector<16x128xf32>
    %346 = arith.mulf %345, %340 : vector<16x128xf32>
    %347 = arith.addf %340, %346 : vector<16x128xf32>
    %cst_166 = arith.constant 0.797884583 : f32
    %348 = vector.broadcast %cst_166 : f32 to vector<16x128xf32>
    %349 = arith.mulf %348, %347 : vector<16x128xf32>
    %350 = math.tanh %349 : vector<16x128xf32>
    %cst_167 = arith.constant 1.000000e+00 : f32
    %351 = vector.broadcast %cst_167 : f32 to vector<16x128xf32>
    %352 = arith.addf %351, %350 : vector<16x128xf32>
    %353 = arith.mulf %342, %352 : vector<16x128xf32>
    %c1_168 = arith.constant 1 : index
    %c0_169 = arith.constant 0 : index
    %c0_170 = arith.constant 0 : index
    %354 = vector.load %arg19[%c1_168, %c0_169, %c0_170] : memref<2x128x32xf32, #tpu.memory_space<vmem>>, vector<1x128x32xf32>
    %355 = vector.shape_cast %354 : vector<1x128x32xf32> to vector<128x32xf32>
    %cst_171 = arith.constant dense<0.000000e+00> : vector<16x32xf32>
    %356 = tpu.matmul %353, %355, %cst_171 {dimension_numbers = #tpu.dot_dimension_numbers<[1], [0], [0], [1], [0, 0, 1, 1], [], []>} : vector<16x128xf32>, vector<128x32xf32>, vector<16x32xf32> -> vector<16x32xf32>
    %c1_172 = arith.constant 1 : index
    %c0_173 = arith.constant 0 : index
    %c0_174 = arith.constant 0 : index
    %357 = vector.load %arg20[%c1_172, %c0_173, %c0_174] : memref<2x1x32xf32, #tpu.memory_space<vmem>>, vector<1x1x32xf32>
    %358 = vector.shape_cast %357 : vector<1x1x32xf32> to vector<1x32xf32>
    %359 = vector.broadcast %358 : vector<1x32xf32> to vector<16x32xf32>
    %360 = arith.addf %356, %359 : vector<16x32xf32>
    %c1_175 = arith.constant 1 : index
    %c0_176 = arith.constant 0 : index
    %c0_177 = arith.constant 0 : index
    %361 = vector.load %arg22[%c1_175, %c0_176, %c0_177] : memref<2x32x16xf32, #tpu.memory_space<vmem>>, vector<1x32x16xf32>
    %362 = vector.shape_cast %361 : vector<1x32x16xf32> to vector<32x16xf32>
    %cst_178 = arith.constant dense<0.000000e+00> : vector<2x16xf32>
    %363 = tpu.matmul %8, %362, %cst_178 {dimension_numbers = #tpu.dot_dimension_numbers<[1], [0], [0], [1], [0, 0, 1, 1], [], []>} : vector<2x32xf32>, vector<32x16xf32>, vector<2x16xf32> -> vector<2x16xf32>
    %c1_179 = arith.constant 1 : index
    %c0_180 = arith.constant 0 : index
    %c0_181 = arith.constant 0 : index
    %364 = vector.load %arg23[%c1_179, %c0_180, %c0_181] : memref<2x1x16xf32, #tpu.memory_space<vmem>>, vector<1x1x16xf32>
    %365 = vector.shape_cast %364 : vector<1x1x16xf32> to vector<1x16xf32>
    %366 = vector.broadcast %365 : vector<1x16xf32> to vector<2x16xf32>
    %367 = arith.addf %363, %366 : vector<2x16xf32>
    %c1_182 = arith.constant 1 : index
    %c0_183 = arith.constant 0 : index
    %c0_184 = arith.constant 0 : index
    %368 = vector.load %arg21[%c1_182, %c0_183, %c0_184] : memref<2x32x16xf32, #tpu.memory_space<vmem>>, vector<1x32x16xf32>
    %369 = vector.shape_cast %368 : vector<1x32x16xf32> to vector<32x16xf32>
    %cst_185 = arith.constant dense<0.000000e+00> : vector<16x16xf32>
    %370 = tpu.matmul %360, %369, %cst_185 {dimension_numbers = #tpu.dot_dimension_numbers<[1], [0], [0], [1], [0, 0, 1, 1], [], []>} : vector<16x32xf32>, vector<32x16xf32>, vector<16x16xf32> -> vector<16x16xf32>
    %371 = vector.shape_cast %370 : vector<16x16xf32> to vector<2x8x16xf32>
    %372 = vector.shape_cast %367 : vector<2x16xf32> to vector<2x1x16xf32>
    %373 = vector.broadcast %372 : vector<2x1x16xf32> to vector<2x8x16xf32>
    %374 = arith.addf %371, %373 : vector<2x8x16xf32>
    %cst_186 = arith.constant 5.000000e-01 : f32
    %375 = vector.broadcast %cst_186 : f32 to vector<2x8x16xf32>
    %376 = arith.mulf %375, %374 : vector<2x8x16xf32>
    %cst_187 = arith.constant 4.471500e-02 : f32
    %377 = vector.broadcast %cst_187 : f32 to vector<2x8x16xf32>
    %378 = arith.mulf %377, %374 : vector<2x8x16xf32>
    %379 = arith.mulf %378, %374 : vector<2x8x16xf32>
    %380 = arith.mulf %379, %374 : vector<2x8x16xf32>
    %381 = arith.addf %374, %380 : vector<2x8x16xf32>
    %cst_188 = arith.constant 0.797884583 : f32
    %382 = vector.broadcast %cst_188 : f32 to vector<2x8x16xf32>
    %383 = arith.mulf %382, %381 : vector<2x8x16xf32>
    %384 = math.tanh %383 : vector<2x8x16xf32>
    %cst_189 = arith.constant 1.000000e+00 : f32
    %385 = vector.broadcast %cst_189 : f32 to vector<2x8x16xf32>
    %386 = arith.addf %385, %384 : vector<2x8x16xf32>
    %387 = arith.mulf %376, %386 : vector<2x8x16xf32>
    %388 = vector.shape_cast %387 : vector<2x8x16xf32> to vector<16x16xf32>
    %c1_190 = arith.constant 1 : index
    %c0_191 = arith.constant 0 : index
    %c0_192 = arith.constant 0 : index
    %389 = vector.load %arg24[%c1_190, %c0_191, %c0_192] : memref<2x16x32xf32, #tpu.memory_space<vmem>>, vector<1x16x32xf32>
    %390 = vector.shape_cast %389 : vector<1x16x32xf32> to vector<16x32xf32>
    %cst_193 = arith.constant dense<0.000000e+00> : vector<16x32xf32>
    %391 = tpu.matmul %388, %390, %cst_193 {dimension_numbers = #tpu.dot_dimension_numbers<[1], [0], [0], [1], [0, 0, 1, 1], [], []>} : vector<16x16xf32>, vector<16x32xf32>, vector<16x32xf32> -> vector<16x32xf32>
    %c1_194 = arith.constant 1 : index
    %c0_195 = arith.constant 0 : index
    %c0_196 = arith.constant 0 : index
    %392 = vector.load %arg25[%c1_194, %c0_195, %c0_196] : memref<2x1x32xf32, #tpu.memory_space<vmem>>, vector<1x1x32xf32>
    %393 = vector.shape_cast %392 : vector<1x1x32xf32> to vector<1x32xf32>
    %394 = vector.broadcast %393 : vector<1x32xf32> to vector<16x32xf32>
    %395 = arith.addf %391, %394 : vector<16x32xf32>
    %396 = arith.addf %360, %395 : vector<16x32xf32>
    %397 = arith.addf %333, %396 : vector<16x32xf32>
    %c1_197 = arith.constant 1 : index
    %c0_198 = arith.constant 0 : index
    %c0_199 = arith.constant 0 : index
    %398 = vector.load %arg26[%c1_197, %c0_198, %c0_199] : memref<2x1x32xf32, #tpu.memory_space<vmem>>, vector<1x1x32xf32>
    %399 = vector.shape_cast %398 : vector<1x1x32xf32> to vector<1x32xf32>
    %c1_200 = arith.constant 1 : index
    %c0_201 = arith.constant 0 : index
    %c0_202 = arith.constant 0 : index
    %400 = vector.load %arg27[%c1_200, %c0_201, %c0_202] : memref<2x1x32xf32, #tpu.memory_space<vmem>>, vector<1x1x32xf32>
    %401 = vector.shape_cast %400 : vector<1x1x32xf32> to vector<1x32xf32>
    %cst_203 = arith.constant dense<0.000000e+00> : vector<16xf32>
    %402 = vector.multi_reduction <add>, %397, %cst_203 [1] : vector<16x32xf32> to vector<16xf32>
    %403 = vector.shape_cast %402 : vector<16xf32> to vector<16x1xf32>
    %cst_204 = arith.constant 3.200000e+01 : f32
    %404 = vector.broadcast %cst_204 : f32 to vector<16x1xf32>
    %405 = arith.divf %403, %404 : vector<16x1xf32>
    %406 = vector.broadcast %405 : vector<16x1xf32> to vector<16x32xf32>
    %407 = arith.subf %397, %406 : vector<16x32xf32>
    %408 = arith.mulf %407, %407 : vector<16x32xf32>
    %cst_205 = arith.constant dense<0.000000e+00> : vector<16xf32>
    %409 = vector.multi_reduction <add>, %408, %cst_205 [1] : vector<16x32xf32> to vector<16xf32>
    %410 = vector.shape_cast %409 : vector<16xf32> to vector<16x1xf32>
    %cst_206 = arith.constant 3.200000e+01 : f32
    %411 = vector.broadcast %cst_206 : f32 to vector<16x1xf32>
    %412 = arith.divf %410, %411 : vector<16x1xf32>
    %413 = vector.broadcast %405 : vector<16x1xf32> to vector<16x32xf32>
    %414 = arith.subf %397, %413 : vector<16x32xf32>
    %cst_207 = arith.constant 9.99999996E-13 : f32
    %415 = vector.broadcast %cst_207 : f32 to vector<16x1xf32>
    %416 = arith.addf %412, %415 : vector<16x1xf32>
    %417 = math.rsqrt %416 : vector<16x1xf32>
    %418 = vector.broadcast %417 : vector<16x1xf32> to vector<16x32xf32>
    %419 = arith.mulf %414, %418 : vector<16x32xf32>
    %420 = vector.broadcast %399 : vector<1x32xf32> to vector<16x32xf32>
    %421 = arith.mulf %419, %420 : vector<16x32xf32>
    %422 = vector.broadcast %401 : vector<1x32xf32> to vector<16x32xf32>
    %423 = arith.addf %421, %422 : vector<16x32xf32>
    %424 = vector.shape_cast %423 : vector<16x32xf32> to vector<2x8x32xf32>
    %425 = vector.extract_strided_slice %424 {offsets = [0, 0, 0], sizes = [2, 1, 32], strides = [1, 1, 1]} : vector<2x8x32xf32> to vector<2x1x32xf32>
    %426 = vector.shape_cast %425 : vector<2x1x32xf32> to vector<2x32xf32>
    %c0_208 = arith.constant 0 : index
    %c0_209 = arith.constant 0 : index
    %427 = vector.load %arg28[%c0_208, %c0_209] : memref<32x32xf32, #tpu.memory_space<vmem>>, vector<32x32xf32>
    %cst_210 = arith.constant dense<0.000000e+00> : vector<2x32xf32>
    %428 = tpu.matmul %426, %427, %cst_210 {dimension_numbers = #tpu.dot_dimension_numbers<[1], [0], [0], [1], [0, 0, 1, 1], [], []>} : vector<2x32xf32>, vector<32x32xf32>, vector<2x32xf32> -> vector<2x32xf32>
    %c0_211 = arith.constant 0 : index
    %c0_212 = arith.constant 0 : index
    %429 = vector.load %arg29[%c0_211, %c0_212] : memref<1x32xf32, #tpu.memory_space<vmem>>, vector<1x32xf32>
    %430 = vector.broadcast %429 : vector<1x32xf32> to vector<2x32xf32>
    %431 = arith.addf %428, %430 : vector<2x32xf32>
    %432 = math.tanh %431 : vector<2x32xf32>
    %c0_213 = arith.constant 0 : index
    %c0_214 = arith.constant 0 : index
    %433 = vector.load %arg30[%c0_213, %c0_214] : memref<32x32xf32, #tpu.memory_space<vmem>>, vector<32x32xf32>
    %cst_215 = arith.constant dense<0.000000e+00> : vector<2x32xf32>
    %434 = tpu.matmul %432, %433, %cst_215 {dimension_numbers = #tpu.dot_dimension_numbers<[1], [0], [0], [1], [0, 0, 1, 1], [], []>} : vector<2x32xf32>, vector<32x32xf32>, vector<2x32xf32> -> vector<2x32xf32>
    %c0_216 = arith.constant 0 : index
    %c0_217 = arith.constant 0 : index
    %435 = vector.load %arg31[%c0_216, %c0_217] : memref<1x32xf32, #tpu.memory_space<vmem>>, vector<1x32xf32>
    %436 = vector.broadcast %435 : vector<1x32xf32> to vector<2x32xf32>
    %437 = arith.addf %434, %436 : vector<2x32xf32>
    %cst_218 = arith.constant 5.000000e-01 : f32
    %438 = vector.broadcast %cst_218 : f32 to vector<2x32xf32>
    %439 = arith.mulf %438, %437 : vector<2x32xf32>
    %cst_219 = arith.constant 4.471500e-02 : f32
    %440 = vector.broadcast %cst_219 : f32 to vector<2x32xf32>
    %441 = arith.mulf %440, %437 : vector<2x32xf32>
    %442 = arith.mulf %441, %437 : vector<2x32xf32>
    %443 = arith.mulf %442, %437 : vector<2x32xf32>
    %444 = arith.addf %437, %443 : vector<2x32xf32>
    %cst_220 = arith.constant 0.797884583 : f32
    %445 = vector.broadcast %cst_220 : f32 to vector<2x32xf32>
    %446 = arith.mulf %445, %444 : vector<2x32xf32>
    %447 = math.tanh %446 : vector<2x32xf32>
    %cst_221 = arith.constant 1.000000e+00 : f32
    %448 = vector.broadcast %cst_221 : f32 to vector<2x32xf32>
    %449 = arith.addf %448, %447 : vector<2x32xf32>
    %450 = arith.mulf %439, %449 : vector<2x32xf32>
    %c0_222 = arith.constant 0 : index
    %c0_223 = arith.constant 0 : index
    %451 = vector.load %arg32[%c0_222, %c0_223] : memref<1x32xf32, #tpu.memory_space<vmem>>, vector<1x32xf32>
    %c0_224 = arith.constant 0 : index
    %c0_225 = arith.constant 0 : index
    %452 = vector.load %arg33[%c0_224, %c0_225] : memref<1x32xf32, #tpu.memory_space<vmem>>, vector<1x32xf32>
    %cst_226 = arith.constant dense<0.000000e+00> : vector<2xf32>
    %453 = vector.multi_reduction <add>, %450, %cst_226 [1] : vector<2x32xf32> to vector<2xf32>
    %454 = vector.shape_cast %453 : vector<2xf32> to vector<2x1xf32>
    %cst_227 = arith.constant 3.200000e+01 : f32
    %455 = vector.broadcast %cst_227 : f32 to vector<2x1xf32>
    %456 = arith.divf %454, %455 : vector<2x1xf32>
    %457 = vector.broadcast %456 : vector<2x1xf32> to vector<2x32xf32>
    %458 = arith.subf %450, %457 : vector<2x32xf32>
    %459 = arith.mulf %458, %458 : vector<2x32xf32>
    %cst_228 = arith.constant dense<0.000000e+00> : vector<2xf32>
    %460 = vector.multi_reduction <add>, %459, %cst_228 [1] : vector<2x32xf32> to vector<2xf32>
    %461 = vector.shape_cast %460 : vector<2xf32> to vector<2x1xf32>
    %cst_229 = arith.constant 3.200000e+01 : f32
    %462 = vector.broadcast %cst_229 : f32 to vector<2x1xf32>
    %463 = arith.divf %461, %462 : vector<2x1xf32>
    %464 = vector.broadcast %456 : vector<2x1xf32> to vector<2x32xf32>
    %465 = arith.subf %450, %464 : vector<2x32xf32>
    %cst_230 = arith.constant 9.99999996E-13 : f32
    %466 = vector.broadcast %cst_230 : f32 to vector<2x1xf32>
    %467 = arith.addf %463, %466 : vector<2x1xf32>
    %468 = math.rsqrt %467 : vector<2x1xf32>
    %469 = vector.broadcast %468 : vector<2x1xf32> to vector<2x32xf32>
    %470 = arith.mulf %465, %469 : vector<2x32xf32>
    %471 = vector.broadcast %451 : vector<1x32xf32> to vector<2x32xf32>
    %472 = arith.mulf %470, %471 : vector<2x32xf32>
    %473 = vector.broadcast %452 : vector<1x32xf32> to vector<2x32xf32>
    %474 = arith.addf %472, %473 : vector<2x32xf32>
    %c0_231 = arith.constant 0 : index
    %c0_232 = arith.constant 0 : index
    %475 = vector.load %arg34[%c0_231, %c0_232] : memref<32x3xf32, #tpu.memory_space<vmem>>, vector<32x3xf32>
    %cst_233 = arith.constant dense<0.000000e+00> : vector<2x3xf32>
    %476 = tpu.matmul %474, %475, %cst_233 {dimension_numbers = #tpu.dot_dimension_numbers<[1], [0], [0], [1], [0, 0, 1, 1], [], []>} : vector<2x32xf32>, vector<32x3xf32>, vector<2x3xf32> -> vector<2x3xf32>
    %c0_234 = arith.constant 0 : index
    %c0_235 = arith.constant 0 : index
    %477 = vector.load %arg35[%c0_234, %c0_235] : memref<1x3xf32, #tpu.memory_space<vmem>>, vector<1x3xf32>
    %478 = vector.broadcast %477 : vector<1x3xf32> to vector<2x3xf32>
    %479 = arith.addf %476, %478 : vector<2x3xf32>
    %c0_236 = arith.constant 0 : index
    %c0_237 = arith.constant 0 : index
    %480 = vector.load %arg36[%c0_236, %c0_237] : memref<2x3xf32, #tpu.memory_space<vmem>>, vector<2x3xf32>
    tpu.vector_store %arg36[%c0_236, %c0_237], %479 {strides = array<i32>} : memref<2x3xf32, #tpu.memory_space<vmem>>, vector<2x3xf32>,
    return
  }
}

</mosaic_0001>

<llo_original>
// kernel: multimodal_adapter_clf.1
$region0: #{multimodal_adapter_clf.1}
  #allocation0 [shape = 'u32[]', space=smem, size = 0x4, offset = 0x4, fixed_abs, tag = 'smem constant byte address 0x4 - core index']
  #allocation1 [shape = 'u32[144,128]{1,0:T(1,128)}', space=vmem, size = 0x12000, scoped, tag = 'internal scratch']
  %s0 = inlined_call_operand.smem [shape: u32[37], index: -1, kind: input, shape index: {}]
  %s1 = sld [smem:[%s0]]
  %s2 = scalar_lea.smem %s0, 1
  %s3 = sld [smem:[%s2]]
  %s4 = scalar_lea.smem %s0, 2
  %s5 = sld [smem:[%s4]]
  %s6 = scalar_lea.smem %s0, 3
  %s7 = sld [smem:[%s6]]
  %s8 = scalar_lea.smem %s0, 4
  %s9 = sld [smem:[%s8]]
  %s10 = scalar_lea.smem %s0, 5
  %s11 = sld [smem:[%s10]]
  %s12 = scalar_lea.smem %s0, 6
  %s13 = sld [smem:[%s12]]
  %s14 = scalar_lea.smem %s0, 7
  %s15 = sld [smem:[%s14]]
  %s16 = scalar_lea.smem %s0, 8
  %s17 = sld [smem:[%s16]]
  %s18 = scalar_lea.smem %s0, 9
  %s19 = sld [smem:[%s18]]
  %s20 = scalar_lea.smem %s0, 10
  %s21 = sld [smem:[%s20]]
  %s22 = scalar_lea.smem %s0, 11
  %s23 = sld [smem:[%s22]]
  %s24 = scalar_lea.smem %s0, 12
  %s25 = sld [smem:[%s24]]
  %s26 = scalar_lea.smem %s0, 13
  %s27 = sld [smem:[%s26]]
  %s28 = scalar_lea.smem %s0, 14
  %s29 = sld [smem:[%s28]]
  %s30 = scalar_lea.smem %s0, 15
  %s31 = sld [smem:[%s30]]
  %s32 = scalar_lea.smem %s0, 16
  %s33 = sld [smem:[%s32]]
  %s34 = scalar_lea.smem %s0, 17
  %s35 = sld [smem:[%s34]]
  %s36 = scalar_lea.smem %s0, 18
  %s37 = sld [smem:[%s36]]
  %s38 = scalar_lea.smem %s0, 19
  %s39 = sld [smem:[%s38]]
  %s40 = scalar_lea.smem %s0, 20
  %s41 = sld [smem:[%s40]]
  %s42 = scalar_lea.smem %s0, 21
  %s43 = sld [smem:[%s42]]
  %s44 = scalar_lea.smem %s0, 22
  %s45 = sld [smem:[%s44]]
  %s46 = scalar_lea.smem %s0, 23
  %s47 = sld [smem:[%s46]]
  %s48 = scalar_lea.smem %s0, 24
  %s49 = sld [smem:[%s48]]
  %s50 = scalar_lea.smem %s0, 25
  %s51 = sld [smem:[%s50]]
  %s52 = scalar_lea.smem %s0, 26
  %s53 = sld [smem:[%s52]]
  %s54 = scalar_lea.smem %s0, 27
  %s55 = sld [smem:[%s54]]
  %s56 = scalar_lea.smem %s0, 28
  %s57 = sld [smem:[%s56]]
  %s58 = scalar_lea.smem %s0, 29
  %s59 = sld [smem:[%s58]]
  %s60 = scalar_lea.smem %s0, 30
  %s61 = sld [smem:[%s60]]
  %s62 = scalar_lea.smem %s0, 31
  %s63 = sld [smem:[%s62]]
  %s64 = scalar_lea.smem %s0, 32
  %s65 = sld [smem:[%s64]]
  %s66 = scalar_lea.smem %s0, 33
  %s67 = sld [smem:[%s66]]
  %s68 = scalar_lea.smem %s0, 34
  %s69 = sld [smem:[%s68]]
  %s70 = scalar_lea.smem %s0, 35
  %s71 = sld [smem:[%s70]]
  %s72 = scalar_lea.smem %s0, 36
  %s73 = sld [smem:[%s72]]
  %s74 = sld [smem:[#allocation0]]
  $region154: #{multimodal_adapter_clf.1} parent=0
    _
  %s76 = ssub.s32 1, %s74
  %s77 = scalar_select 0, %s76, %s74
  $region1: #{multimodal_adapter_clf.1} parent=0
    #allocation2 [shape = 'u8[1024]{0}', space=vmem, size = 0x400, scoped, tag = 'output window, operand 0, single buffered']
    #allocation3 [shape = 's32[1]{0}', space=sflag, size = 0x4, scoped, tag = 'scoped memory for multimodal_adapter_clf.1']
    %78 = vsyncpa [#allocation3], 0
    // Predicated region
    $region2: #{multimodal_adapter_clf.1} parent=1 // pred_check
      _
    $region3: #{multimodal_adapter_clf.1} parent=1 // pred_check_branch
      %80 = sbr.rel (0) target = $region5
    $region4: #{multimodal_adapter_clf.1} parent=1 // pred_region
      _
    $region5: #{multimodal_adapter_clf.1} parent=1 // pred_fallthru
      _
    // Predicated region
    $region6: #{multimodal_adapter_clf.1} parent=1 // pred_check
      _
    $region7: #{multimodal_adapter_clf.1} parent=1 // pred_check_branch
      %82 = sbr.rel (0) target = $region9
    $region8: #{multimodal_adapter_clf.1} parent=1 // pred_region
      _
    $region9: #{multimodal_adapter_clf.1} parent=1 // pred_fallthru
      _
    // Predicated region
    $region10: #{multimodal_adapter_clf.1} parent=1 // pred_check
      _
    $region11: #{multimodal_adapter_clf.1} parent=1 // pred_check_branch
      %84 = sbr.rel (0) target = $region13
    $region12: #{multimodal_adapter_clf.1} parent=1 // pred_region
      _
    $region13: #{multimodal_adapter_clf.1} parent=1 // pred_fallthru
      _
    // Predicated region
    $region14: #{multimodal_adapter_clf.1} parent=1 // pred_check
      _
    $region15: #{multimodal_adapter_clf.1} parent=1 // pred_check_branch
      %86 = sbr.rel (0) target = $region17
    $region16: #{multimodal_adapter_clf.1} parent=1 // pred_region
      _
    $region17: #{multimodal_adapter_clf.1} parent=1 // pred_fallthru
      _
    // Predicated region
    $region18: #{multimodal_adapter_clf.1} parent=1 // pred_check
      _
    $region19: #{multimodal_adapter_clf.1} parent=1 // pred_check_branch
      %88 = sbr.rel (0) target = $region21
    $region20: #{multimodal_adapter_clf.1} parent=1 // pred_region
      _
    $region21: #{multimodal_adapter_clf.1} parent=1 // pred_fallthru
      _
    // Predicated region
    $region22: #{multimodal_adapter_clf.1} parent=1 // pred_check
      _
    $region23: #{multimodal_adapter_clf.1} parent=1 // pred_check_branch
      %90 = sbr.rel (0) target = $region25
    $region24: #{multimodal_adapter_clf.1} parent=1 // pred_region
      _
    $region25: #{multimodal_adapter_clf.1} parent=1 // pred_fallthru
      _
    // Predicated region
    $region26: #{multimodal_adapter_clf.1} parent=1 // pred_check
      _
    $region27: #{multimodal_adapter_clf.1} parent=1 // pred_check_branch
      %92 = sbr.rel (0) target = $region29
    $region28: #{multimodal_adapter_clf.1} parent=1 // pred_region
      _
    $region29: #{multimodal_adapter_clf.1} parent=1 // pred_fallthru
      _
    // Predicated region
    $region30: #{multimodal_adapter_clf.1} parent=1 // pred_check
      _
    $region31: #{multimodal_adapter_clf.1} parent=1 // pred_check_branch
      %94 = sbr.rel (0) target = $region33
    $region32: #{multimodal_adapter_clf.1} parent=1 // pred_region
      _
    $region33: #{multimodal_adapter_clf.1} parent=1 // pred_fallthru
      _
    // Predicated region
    $region34: #{multimodal_adapter_clf.1} parent=1 // pred_check
      _
    $region35: #{multimodal_adapter_clf.1} parent=1 // pred_check_branch
      %96 = sbr.rel (0) target = $region37
    $region36: #{multimodal_adapter_clf.1} parent=1 // pred_region
      _
    $region37: #{multimodal_adapter_clf.1} parent=1 // pred_fallthru
      _
    // Predicated region
    $region38: #{multimodal_adapter_clf.1} parent=1 // pred_check
      _
    $region39: #{multimodal_adapter_clf.1} parent=1 // pred_check_branch
      %98 = sbr.rel (0) target = $region41
    $region40: #{multimodal_adapter_clf.1} parent=1 // pred_region
      _
    $region41: #{multimodal_adapter_clf.1} parent=1 // pred_fallthru
      _
    // Predicated region
    $region42: #{multimodal_adapter_clf.1} parent=1 // pred_check
      _
    $region43: #{multimodal_adapter_clf.1} parent=1 // pred_check_branch
      %100 = sbr.rel (0) target = $region45
    $region44: #{multimodal_adapter_clf.1} parent=1 // pred_region
      _
    $region45: #{multimodal_adapter_clf.1} parent=1 // pred_fallthru
      _
    // Predicated region
    $region46: #{multimodal_adapter_clf.1} parent=1 // pred_check
      _
    $region47: #{multimodal_adapter_clf.1} parent=1 // pred_check_branch
      %102 = sbr.rel (0) target = $region49
    $region48: #{multimodal_adapter_clf.1} parent=1 // pred_region
      _
    $region49: #{multimodal_adapter_clf.1} parent=1 // pred_fallthru
      _
    // Predicated region
    $region50: #{multimodal_adapter_clf.1} parent=1 // pred_check
      _
    $region51: #{multimodal_adapter_clf.1} parent=1 // pred_check_branch
      %104 = sbr.rel (0) target = $region53
    $region52: #{multimodal_adapter_clf.1} parent=1 // pred_region
      _
    $region53: #{multimodal_adapter_clf.1} parent=1 // pred_fallthru
      _
    // Predicated region
    $region54: #{multimodal_adapter_clf.1} parent=1 // pred_check
      _
    $region55: #{multimodal_adapter_clf.1} parent=1 // pred_check_branch
      %106 = sbr.rel (0) target = $region57
    $region56: #{multimodal_adapter_clf.1} parent=1 // pred_region
      _
    $region57: #{multimodal_adapter_clf.1} parent=1 // pred_fallthru
      _
    // Predicated region
    $region58: #{multimodal_adapter_clf.1} parent=1 // pred_check
      _
    $region59: #{multimodal_adapter_clf.1} parent=1 // pred_check_branch
      %108 = sbr.rel (0) target = $region61
    $region60: #{multimodal_adapter_clf.1} parent=1 // pred_region
      _
    $region61: #{multimodal_adapter_clf.1} parent=1 // pred_fallthru
      _
    // Predicated region
    $region62: #{multimodal_adapter_clf.1} parent=1 // pred_check
      _
    $region63: #{multimodal_adapter_clf.1} parent=1 // pred_check_branch
      %110 = sbr.rel (0) target = $region65
    $region64: #{multimodal_adapter_clf.1} parent=1 // pred_region
      _
    $region65: #{multimodal_adapter_clf.1} parent=1 // pred_fallthru
      _
    // Predicated region
    $region66: #{multimodal_adapter_clf.1} parent=1 // pred_check
      _
    $region67: #{multimodal_adapter_clf.1} parent=1 // pred_check_branch
      %112 = sbr.rel (0) target = $region69
    $region68: #{multimodal_adapter_clf.1} parent=1 // pred_region
      _
    $region69: #{multimodal_adapter_clf.1} parent=1 // pred_fallthru
      _
    // Predicated region
    $region70: #{multimodal_adapter_clf.1} parent=1 // pred_check
      _
    $region71: #{multimodal_adapter_clf.1} parent=1 // pred_check_branch
      %114 = sbr.rel (0) target = $region73
    $region72: #{multimodal_adapter_clf.1} parent=1 // pred_region
      _
    $region73: #{multimodal_adapter_clf.1} parent=1 // pred_fallthru
      _
    // Predicated region
    $region74: #{multimodal_adapter_clf.1} parent=1 // pred_check
      _
    $region75: #{multimodal_adapter_clf.1} parent=1 // pred_check_branch
      %116 = sbr.rel (0) target = $region77
    $region76: #{multimodal_adapter_clf.1} parent=1 // pred_region
      _
    $region77: #{multimodal_adapter_clf.1} parent=1 // pred_fallthru
      _
    // Predicated region
    $region78: #{multimodal_adapter_clf.1} parent=1 // pred_check
      _
    $region79: #{multimodal_adapter_clf.1} parent=1 // pred_check_branch
      %118 = sbr.rel (0) target = $region81
    $region80: #{multimodal_adapter_clf.1} parent=1 // pred_region
      _
    $region81: #{multimodal_adapter_clf.1} parent=1 // pred_fallthru
      _
    // Predicated region
    $region82: #{multimodal_adapter_clf.1} parent=1 // pred_check
      _
    $region83: #{multimodal_adapter_clf.1} parent=1 // pred_check_branch
      %120 = sbr.rel (0) target = $region85
    $region84: #{multimodal_adapter_clf.1} parent=1 // pred_region
      _
    $region85: #{multimodal_adapter_clf.1} parent=1 // pred_fallthru
      _
    // Predicated region
    $region86: #{multimodal_adapter_clf.1} parent=1 // pred_check
      _
    $region87: #{multimodal_adapter_clf.1} parent=1 // pred_check_branch
      %122 = sbr.rel (0) target = $region89
    $region88: #{multimodal_adapter_clf.1} parent=1 // pred_region
      _
    $region89: #{multimodal_adapter_clf.1} parent=1 // pred_fallthru
      _
    // Predicated region
    $region90: #{multimodal_adapter_clf.1} parent=1 // pred_check
      _
    $region91: #{multimodal_adapter_clf.1} parent=1 // pred_check_branch
      %124 = sbr.rel (0) target = $region93
    $region92: #{multimodal_adapter_clf.1} parent=1 // pred_region
      _
    $region93: #{multimodal_adapter_clf.1} parent=1 // pred_fallthru
      _
    // Predicated region
    $region94: #{multimodal_adapter_clf.1} parent=1 // pred_check
      _
    $region95: #{multimodal_adapter_clf.1} parent=1 // pred_check_branch
      %126 = sbr.rel (0) target = $region97
    $region96: #{multimodal_adapter_clf.1} parent=1 // pred_region
      _
    $region97: #{multimodal_adapter_clf.1} parent=1 // pred_fallthru
      _
    // Predicated region
    $region98: #{multimodal_adapter_clf.1} parent=1 // pred_check
      _
    $region99: #{multimodal_adapter_clf.1} parent=1 // pred_check_branch
      %128 = sbr.rel (0) target = $region101
    $region100: #{multimodal_adapter_clf.1} parent=1 // pred_region
      _
    $region101: #{multimodal_adapter_clf.1} parent=1 // pred_fallthru
      _
    // Predicated region
    $region102: #{multimodal_adapter_clf.1} parent=1 // pred_check
      _
    $region103: #{multimodal_adapter_clf.1} parent=1 // pred_check_branch
      %130 = sbr.rel (0) target = $region105
    $region104: #{multimodal_adapter_clf.1} parent=1 // pred_region
      _
    $region105: #{multimodal_adapter_clf.1} parent=1 // pred_fallthru
      _
    // Predicated region
    $region106: #{multimodal_adapter_clf.1} parent=1 // pred_check
      _
    $region107: #{multimodal_adapter_clf.1} parent=1 // pred_check_branch
      %132 = sbr.rel (0) target = $region109
    $region108: #{multimodal_adapter_clf.1} parent=1 // pred_region
      _
    $region109: #{multimodal_adapter_clf.1} parent=1 // pred_fallthru
      _
    // Predicated region
    $region110: #{multimodal_adapter_clf.1} parent=1 // pred_check
      _
    $region111: #{multimodal_adapter_clf.1} parent=1 // pred_check_branch
      %134 = sbr.rel (0) target = $region113
    $region112: #{multimodal_adapter_clf.1} parent=1 // pred_region
      _
    $region113: #{multimodal_adapter_clf.1} parent=1 // pred_fallthru
      _
    // Predicated region
    $region114: #{multimodal_adapter_clf.1} parent=1 // pred_check
      _
    $region115: #{multimodal_adapter_clf.1} parent=1 // pred_check_branch
      %136 = sbr.rel (0) target = $region117
    $region116: #{multimodal_adapter_clf.1} parent=1 // pred_region
      _
    $region117: #{multimodal_adapter_clf.1} parent=1 // pred_fallthru
      _
    // Predicated region
    $region118: #{multimodal_adapter_clf.1} parent=1 // pred_check
      _
    $region119: #{multimodal_adapter_clf.1} parent=1 // pred_check_branch
      %138 = sbr.rel (0) target = $region121
    $region120: #{multimodal_adapter_clf.1} parent=1 // pred_region
      _
    $region121: #{multimodal_adapter_clf.1} parent=1 // pred_fallthru
      _
    // Predicated region
    $region122: #{multimodal_adapter_clf.1} parent=1 // pred_check
      _
    $region123: #{multimodal_adapter_clf.1} parent=1 // pred_check_branch
      %140 = sbr.rel (0) target = $region125
    $region124: #{multimodal_adapter_clf.1} parent=1 // pred_region
      _
    $region125: #{multimodal_adapter_clf.1} parent=1 // pred_fallthru
      _
    // Predicated region
    $region126: #{multimodal_adapter_clf.1} parent=1 // pred_check
      _
    $region127: #{multimodal_adapter_clf.1} parent=1 // pred_check_branch
      %142 = sbr.rel (0) target = $region129
    $region128: #{multimodal_adapter_clf.1} parent=1 // pred_region
      _
    $region129: #{multimodal_adapter_clf.1} parent=1 // pred_fallthru
      _
    // Predicated region
    $region130: #{multimodal_adapter_clf.1} parent=1 // pred_check
      _
    $region131: #{multimodal_adapter_clf.1} parent=1 // pred_check_branch
      %144 = sbr.rel (0) target = $region133
    $region132: #{multimodal_adapter_clf.1} parent=1 // pred_region
      _
    $region133: #{multimodal_adapter_clf.1} parent=1 // pred_fallthru
      _
    // Predicated region
    $region134: #{multimodal_adapter_clf.1} parent=1 // pred_check
      _
    $region135: #{multimodal_adapter_clf.1} parent=1 // pred_check_branch
      %146 = sbr.rel (0) target = $region137
    $region136: #{multimodal_adapter_clf.1} parent=1 // pred_region
      _
    $region137: #{multimodal_adapter_clf.1} parent=1 // pred_fallthru
      _
    // Predicated region
    $region138: #{multimodal_adapter_clf.1} parent=1 // pred_check
      _
    $region139: #{multimodal_adapter_clf.1} parent=1 // pred_check_branch
      %148 = sbr.rel (0) target = $region141
    $region140: #{multimodal_adapter_clf.1} parent=1 // pred_region
      _
    $region141: #{multimodal_adapter_clf.1} parent=1 // pred_fallthru
      _
    // Predicated region
    $region142: #{multimodal_adapter_clf.1} parent=1 // pred_check
      _
    $region143: #{multimodal_adapter_clf.1} parent=1 // pred_check_branch
      %150 = sbr.rel (0) target = $region145
    $region144: #{multimodal_adapter_clf.1} parent=1 // pred_region
      _
    $region145: #{multimodal_adapter_clf.1} parent=1 // pred_fallthru
      _
    %v151 = vld [vmem:[%s7] sm:$0xf]
    %v152 = vld [vmem:[%s7 + $0x4] sm:$0xf]
    %vm153 = vcmask 519168
    %v154 = vsel %vm153, %v151, 0.0
    %v155 = vrot.slane %v154, 4
    %v156 = vadd.f32 %v154, %v155
    %v157 = vrot.slane %v156, 2
    %v158 = vadd.f32 %v156, %v157
    %v159 = vrot.slane %v158, 1
    %v160 = vadd.f32 %v158, %v159
    %v161 = vsel %vm153, %v152, 0.0
    %v162 = vrot.slane %v161, 4
    %v163 = vadd.f32 %v161, %v162
    %v164 = vrot.slane %v163, 2
    %v165 = vadd.f32 %v163, %v164
    %v166 = vrot.slane %v165, 1
    %v167 = vadd.f32 %v165, %v166
    %v168 = vrcp.pop 4.0
    %v169 = vmul.f32 %v160, %v168
    %v170 = vmul.f32 %v167, %v168
    %v171 = vld [vmem:[%s19] sm:$0xff]
    %v172 = vld [vmem:[%s19 + $0x8] sm:$0xff]
    %v173 = vld [vmem:[%s19 + $0x10] sm:$0xff]
    %v174 = vld [vmem:[%s19 + $0x18] sm:$0xff]
    %v175 = vld [vmem:[%s19 + $0x20] sm:$0xff]
    %v176 = vld [vmem:[%s19 + $0x28] sm:$0xff]
    %v177 = vld [vmem:[%s19 + $0x30] sm:$0xff]
    %v178 = vld [vmem:[%s19 + $0x38] sm:$0xff]
    %v179 = vld [vmem:[%s21] sm:$0x1]
    %v181 = vlaneseq
    %v182 = vshrl.u32 %v181, 7
    %v183 = vsub.s32 0, %v182
    %v184 = vrot.slane %v179, %v183
    %vm188 = vcmask 1041409
    %v189 = vsel %vm188, %v170, %v169
    %vm190 = vcmask 523264
    %v191 = vsel %vm190, %v189, 0
    %193 = vmatprep.subr.mxu0 0.0
    %194 = vmatpush1.msra.mxu0 %v171
    %195 = vmatprep.subr.mxu0 0.0
    %196 = vmatpush1.msra.mxu0 %v172
    %197 = vmatprep.subr.mxu0 0.0
    %198 = vmatpush1.msra.mxu0 %v173
    %199 = vmatprep.subr.mxu0 0.0
    %200 = vmatpush1.msra.mxu0 %v174
    %201 = vmatprep.subr.mxu0 0.0
    %202 = vmatpush1.msra.mxu0 %v175
    %203 = vmatprep.subr.mxu0 0.0
    %204 = vmatpush1.msra.mxu0 %v176
    %205 = vmatprep.subr.mxu0 0.0
    %206 = vmatpush1.msra.mxu0 %v177
    %207 = vmatprep.subr.mxu0 0.0
    %208 = vmatpush1.msra.mxu0 %v178
    %209 = vmatprep.subr.mxu0 0.0
    %210 = vmatpush1.msra.mxu0 0.0
    %211 = vmatprep.subr.mxu0 0.0
    %212 = vmatpush1.msra.mxu0 0.0
    %213 = vmatprep.subr.mxu0 0.0
    %214 = vmatpush1.msra.mxu0 0.0
    %215 = vmatprep.subr.mxu0 0.0
    %216 = vmatpush1.msra.mxu0 0.0
    %217 = vmatprep.subr.mxu0 0.0
    %218 = vmatpush1.msra.mxu0 0.0
    %219 = vmatprep.subr.mxu0 0.0
    %220 = vmatpush1.msra.mxu0 0.0
    %221 = vmatprep.subr.mxu0 0.0
    %222 = vmatpush1.msra.mxu0 0.0
    %223 = vmatprep.subr.mxu0 0.0
    %224 = vmatpush1.msra.mxu0 0.0
    %225 = vmatprep.subr.mxu0 0.0
    %226 = vmatpush1.msra.mxu0 0.0
    %227 = vmatprep.subr.mxu0 0.0
    %228 = vmatpush1.msra.mxu0 0.0
    %229 = vmatprep.subr.mxu0 0.0
    %230 = vmatpush1.msra.mxu0 0.0
    %231 = vmatprep.subr.mxu0 0.0
    %232 = vmatpush1.msra.mxu0 0.0
    %233 = vmatprep.subr.mxu0 0.0
    %234 = vmatpush1.msra.mxu0 0.0
    %235 = vmatprep.subr.mxu0 0.0
    %236 = vmatpush1.msra.mxu0 0.0
    %237 = vmatprep.subr.mxu0 0.0
    %238 = vmatpush1.msra.mxu0 0.0
    %239 = vmatprep.subr.mxu0 0.0
    %240 = vmatpush1.msra.mxu0 0.0
    %241 = vmatprep.subr.mxu0 0.0
    %242 = vmatpush1.msra.mxu0 0.0
    %243 = vmatprep.subr.mxu0 0.0
    %244 = vmatpush1.msra.mxu0 0.0
    %245 = vmatprep.subr.mxu0 0.0
    %246 = vmatpush1.msra.mxu0 0.0
    %247 = vmatprep.subr.mxu0 0.0
    %248 = vmatpush1.msra.mxu0 0.0
    %249 = vmatprep.subr.mxu0 0.0
    %250 = vmatpush1.msra.mxu0 0.0
    %251 = vmatprep.subr.mxu0 0.0
    %252 = vmatpush1.msra.mxu0 0.0
    %253 = vmatprep.subr.mxu0 0.0
    %254 = vmatpush1.msra.mxu0 0.0
    %255 = vmatprep.subr.mxu0 0.0
    %256 = vmatpush1.msra.mxu0 0.0
    %257 = vmatprep.mubr.f32.mxu0 0.0
    %258 = vmatmul.mubr.f32.gmra.mrb[0].mxu0 %v191
    %v259 = vpop.f32.mrb[0].mxu0
    %v260 = vadd.f32 %v184, %v259
    %v261 = vpop.f32.mrb[0].mxu0
    %262 = vdwg.mxu0
    %v263 = vld [vmem:[%s1] sm:$0xff]
    %v264 = vld [vmem:[%s1 + $0x8] sm:$0xff]
    %v265 = vld [vmem:[%s3] sm:$0xff]
    %v266 = vld [vmem:[%s3 + $0x8] sm:$0xff]
    %v267 = vlaneseq
    %v268 = vand.u32 %v267, 127
    %269 = vset.pattern.permute.xlu0 0
    %270 = vperm.xlu0 %269, %v263
    %v271 = vpop.permute.xlu0 %270
    %272 = vset.pattern.permute.xlu0 0
    %273 = vperm.xlu0 %272, %v264
    %v274 = vpop.permute.xlu0 %273
    %vm275 = vcmp.eq.s32.totalorder %v271, %v268
    %vm276 = vcmp.eq.s32.totalorder %v274, %v268
    %v277 = vsel %vm275, 1, 0
    %v278 = vsel %vm276, 1, 0
    %v279 = vcvt.s32.f32 %v277
    %v280 = vcvt.s32.f32 %v278
    %281 = vset.pattern.permute.xlu0 0
    %282 = vperm.xlu0 %281, %v265
    %v283 = vpop.permute.xlu0 %282
    %284 = vset.pattern.permute.xlu0 0
    %285 = vperm.xlu0 %284, %v266
    %v286 = vpop.permute.xlu0 %285
    %vm287 = vcmp.eq.s32.totalorder %v283, %v268
    %vm288 = vcmp.eq.s32.totalorder %v286, %v268
    %v289 = vsel %vm287, 1, 0
    %v290 = vsel %vm288, 1, 0
    %v291 = vcvt.s32.f32 %v289
    %v292 = vcvt.s32.f32 %v290
    %v293 = vld [vmem:[%s9] sm:$0xff]
    %v294 = vld [vmem:[%s9 + $0x8] sm:$0xff]
    %v295 = vld [vmem:[%s9 + $0x10] sm:$0xff]
    %v296 = vld [vmem:[%s9 + $0x18] sm:$0xff]
    %v297 = vld [vmem:[%s9 + $0x20] sm:$0xff]
    %v298 = vld [vmem:[%s9 + $0x28] sm:$0xff]
    %v299 = vld [vmem:[%s9 + $0x30] sm:$0x3]
    %v300 = vld [vmem:[%s13] sm:$0x3]
    %vm301 = vcmask 15360
    %v303 = vsel %vm301, %v291, 0
    %v306 = vsel %vm301, %v292, 0
    %vm308 = vcmask 1041408
    %v310 = vsel %vm308, %v300, 0
    %312 = vmatprep.subr.mxu0 0.0
    %313 = vmatpush1.msra.mxu0 %v310
    %314 = vmatprep.subr.mxu0 0.0
    %315 = vmatpush1.msra.mxu0 0.0
    %316 = vmatprep.subr.mxu0 0.0
    %317 = vmatpush1.msra.mxu0 0.0
    %318 = vmatprep.subr.mxu0 0.0
    %319 = vmatpush1.msra.mxu0 0.0
    %320 = vmatprep.subr.mxu0 0.0
    %321 = vmatpush1.msra.mxu0 0.0
    %322 = vmatprep.subr.mxu0 0.0
    %323 = vmatpush1.msra.mxu0 0.0
    %324 = vmatprep.subr.mxu0 0.0
    %325 = vmatpush1.msra.mxu0 0.0
    %326 = vmatprep.subr.mxu0 0.0
    %327 = vmatpush1.msra.mxu0 0.0
    %328 = vmatprep.subr.mxu0 0.0
    %329 = vmatpush1.msra.mxu0 0.0
    %330 = vmatprep.subr.mxu0 0.0
    %331 = vmatpush1.msra.mxu0 0.0
    %332 = vmatprep.subr.mxu0 0.0
    %333 = vmatpush1.msra.mxu0 0.0
    %334 = vmatprep.subr.mxu0 0.0
    %335 = vmatpush1.msra.mxu0 0.0
    %336 = vmatprep.subr.mxu0 0.0
    %337 = vmatpush1.msra.mxu0 0.0
    %338 = vmatprep.subr.mxu0 0.0
    %339 = vmatpush1.msra.mxu0 0.0
    %340 = vmatprep.subr.mxu0 0.0
    %341 = vmatpush1.msra.mxu0 0.0
    %342 = vmatprep.subr.mxu0 0.0
    %343 = vmatpush1.msra.mxu0 0.0
    %344 = vmatprep.subr.mxu0 0.0
    %345 = vmatpush1.msra.mxu0 0.0
    %346 = vmatprep.subr.mxu0 0.0
    %347 = vmatpush1.msra.mxu0 0.0
    %348 = vmatprep.subr.mxu0 0.0
    %349 = vmatpush1.msra.mxu0 0.0
    %350 = vmatprep.subr.mxu0 0.0
    %351 = vmatpush1.msra.mxu0 0.0
    %352 = vmatprep.subr.mxu0 0.0
    %353 = vmatpush1.msra.mxu0 0.0
    %354 = vmatprep.subr.mxu0 0.0
    %355 = vmatpush1.msra.mxu0 0.0
    %356 = vmatprep.subr.mxu0 0.0
    %357 = vmatpush1.msra.mxu0 0.0
    %358 = vmatprep.subr.mxu0 0.0
    %359 = vmatpush1.msra.mxu0 0.0
    %360 = vmatprep.subr.mxu0 0.0
    %361 = vmatpush1.msra.mxu0 0.0
    %362 = vmatprep.subr.mxu0 0.0
    %363 = vmatpush1.msra.mxu0 0.0
    %364 = vmatprep.subr.mxu0 0.0
    %365 = vmatpush1.msra.mxu0 0.0
    %366 = vmatprep.subr.mxu0 0.0
    %367 = vmatpush1.msra.mxu0 0.0
    %368 = vmatprep.subr.mxu0 0.0
    %369 = vmatpush1.msra.mxu0 0.0
    %370 = vmatprep.subr.mxu0 0.0
    %371 = vmatpush1.msra.mxu0 0.0
    %372 = vmatprep.subr.mxu0 0.0
    %373 = vmatpush1.msra.mxu0 0.0
    %374 = vmatprep.subr.mxu0 0.0
    %375 = vmatpush1.msra.mxu0 0.0
    %376 = vmatprep.mubr.f32.mxu0 0.0
    %377 = vmatmul.mubr.f32.gmra.mrb[0].mxu0 %v303
    %v378 = vpop.f32.mrb[0].mxu0
    %v379 = vadd.f32 0.0, %v378
    %v380 = vpop.f32.mrb[0].mxu0
    %381 = vmatprep.mubr.f32.mxu0 0.0
    %382 = vmatmul.mubr.f32.gmra.mrb[0].mxu0 %v306
    %v383 = vpop.f32.mrb[0].mxu0
    %v384 = vadd.f32 0.0, %v383
    %v385 = vpop.f32.mrb[0].mxu0
    %386 = vdwg.mxu0
    %vm387 = vcmask 408576
    %v389 = vsel %vm387, %v279, 0
    %v392 = vsel %vm387, %v280, 0
    %v395 = vsel %vm308, %v299, 0
    %397 = vmatprep.subr.mxu0 0.0
    %398 = vmatpush1.msra.mxu0 %v293
    %399 = vmatprep.subr.mxu0 0.0
    %400 = vmatpush1.msra.mxu0 %v294
    %401 = vmatprep.subr.mxu0 0.0
    %402 = vmatpush1.msra.mxu0 %v295
    %403 = vmatprep.subr.mxu0 0.0
    %404 = vmatpush1.msra.mxu0 %v296
    %405 = vmatprep.subr.mxu0 0.0
    %406 = vmatpush1.msra.mxu0 %v297
    %407 = vmatprep.subr.mxu0 0.0
    %408 = vmatpush1.msra.mxu0 %v298
    %409 = vmatprep.subr.mxu0 0.0
    %410 = vmatpush1.msra.mxu0 %v395
    %411 = vmatprep.subr.mxu0 0.0
    %412 = vmatpush1.msra.mxu0 0.0
    %413 = vmatprep.subr.mxu0 0.0
    %414 = vmatpush1.msra.mxu0 0.0
    %415 = vmatprep.subr.mxu0 0.0
    %416 = vmatpush1.msra.mxu0 0.0
    %417 = vmatprep.subr.mxu0 0.0
    %418 = vmatpush1.msra.mxu0 0.0
    %419 = vmatprep.subr.mxu0 0.0
    %420 = vmatpush1.msra.mxu0 0.0
    %421 = vmatprep.subr.mxu0 0.0
    %422 = vmatpush1.msra.mxu0 0.0
    %423 = vmatprep.subr.mxu0 0.0
    %424 = vmatpush1.msra.mxu0 0.0
    %425 = vmatprep.subr.mxu0 0.0
    %426 = vmatpush1.msra.mxu0 0.0
    %427 = vmatprep.subr.mxu0 0.0
    %428 = vmatpush1.msra.mxu0 0.0
    %429 = vmatprep.subr.mxu0 0.0
    %430 = vmatpush1.msra.mxu0 0.0
    %431 = vmatprep.subr.mxu0 0.0
    %432 = vmatpush1.msra.mxu0 0.0
    %433 = vmatprep.subr.mxu0 0.0
    %434 = vmatpush1.msra.mxu0 0.0
    %435 = vmatprep.subr.mxu0 0.0
    %436 = vmatpush1.msra.mxu0 0.0
    %437 = vmatprep.subr.mxu0 0.0
    %438 = vmatpush1.msra.mxu0 0.0
    %439 = vmatprep.subr.mxu0 0.0
    %440 = vmatpush1.msra.mxu0 0.0
    %441 = vmatprep.subr.mxu0 0.0
    %442 = vmatpush1.msra.mxu0 0.0
    %443 = vmatprep.subr.mxu0 0.0
    %444 = vmatpush1.msra.mxu0 0.0
    %445 = vmatprep.subr.mxu0 0.0
    %446 = vmatpush1.msra.mxu0 0.0
    %447 = vmatprep.subr.mxu0 0.0
    %448 = vmatpush1.msra.mxu0 0.0
    %449 = vmatprep.subr.mxu0 0.0
    %450 = vmatpush1.msra.mxu0 0.0
    %451 = vmatprep.subr.mxu0 0.0
    %452 = vmatpush1.msra.mxu0 0.0
    %453 = vmatprep.subr.mxu0 0.0
    %454 = vmatpush1.msra.mxu0 0.0
    %455 = vmatprep.subr.mxu0 0.0
    %456 = vmatpush1.msra.mxu0 0.0
    %457 = vmatprep.subr.mxu0 0.0
    %458 = vmatpush1.msra.mxu0 0.0
    %459 = vmatprep.subr.mxu0 0.0
    %460 = vmatpush1.msra.mxu0 0.0
    %461 = vmatprep.mubr.f32.mxu0 0.0
    %462 = vmatmul.mubr.f32.gmra.mrb[0].mxu0 %v389
    %v463 = vpop.f32.mrb[0].mxu0
    %v464 = vadd.f32 %v379, %v463
    %v465 = vpop.f32.mrb[0].mxu0
    %466 = vmatprep.mubr.f32.mxu0 0.0
    %467 = vmatmul.mubr.f32.gmra.mrb[0].mxu0 %v392
    %v468 = vpop.f32.mrb[0].mxu0
    %v469 = vadd.f32 %v384, %v468
    %v470 = vpop.f32.mrb[0].mxu0
    %471 = vdwg.mxu0
    %v472 = vld [vmem:[%s11] sm:$0xff]
    %v473 = vadd.f32 %v464, %v472
    %v474 = vadd.f32 %v469, %v472
    %v475 = vld [vmem:[%s15] sm:$0x1]
    %v476 = vld [vmem:[%s17] sm:$0x1]
    %vm477 = vcmask 261120
    %v478 = vsel %vm477, %v473, 0.0
    %479 = vadd.xlane.f32.xlu0 %v478
    %v480 = vpop.xlane.xlu0 %479
    %v481 = vsel %vm477, %v474, 0.0
    %482 = vadd.xlane.f32.xlu0 %v481
    %v483 = vpop.xlane.xlu0 %482
    %v484 = vrcp.pop 32.0
    %v485 = vmul.f32 %v480, %v484
    %v486 = vmul.f32 %v483, %v484
    %v487 = vsub.f32 %v473, %v485
    %v488 = vsub.f32 %v474, %v486
    %v489 = vmul.f32 %v487, %v487
    %v490 = vmul.f32 %v488, %v488
    %v491 = vsel %vm477, %v489, 0.0
    %492 = vadd.xlane.f32.xlu0 %v491
    %v493 = vpop.xlane.xlu0 %492
    %v494 = vsel %vm477, %v490, 0.0
    %495 = vadd.xlane.f32.xlu0 %v494
    %v496 = vpop.xlane.xlu0 %495
    %v497 = vmul.f32 %v493, %v484
    %v498 = vmul.f32 %v496, %v484
    %v499 = vadd.f32 %v497, 1e-12
    %v500 = vadd.f32 %v498, 1e-12
    %v501 = vrsqrt.pop %v499
    %v502 = vrsqrt.pop %v500
    %v503 = vmul.f32 %v487, %v501
    %v504 = vmul.f32 %v488, %v502
    %v506 = vlaneseq
    %v507 = vshrl.u32 %v506, 7
    %v508 = vsub.s32 0, %v507
    %v509 = vrot.slane %v475, %v508
    %v511 = vmul.f32 %v503, %v509
    %v512 = vmul.f32 %v504, %v509
    %v514 = vlaneseq
    %v515 = vshrl.u32 %v514, 7
    %v516 = vsub.s32 0, %v515
    %v517 = vrot.slane %v476, %v516
    %v519 = vadd.f32 %v511, %v517
    %v520 = vadd.f32 %v512, %v517
    %v521 = vld [vmem:[%s5] sm:$0x3]
    %v522 = vsub.f32 1.0, %v521
    %v523 = vmul.f32 %v522, -10000.0
    %v526 = vunpack.c.l.s4 1966171168
    %v527 = vunpack.c.0.s8 %v526
    %v528 = vlaneseq
    %v529 = vshrl.u32 %v528, 7
    %v530 = vsub.s32 %v527, %v529
    %v531 = vrot.slane %v523, %v530
    %v532 = vcombine.high %v531, %v531
    %v534 = vunpack.c.l.s4 1966171168
    %v535 = vunpack.c.0.s8 %v534
    %v536 = vlaneseq
    %v537 = vshrl.u32 %v536, 7
    %v538 = vsub.s32 %v535, %v537
    %v539 = vrot.slane %v531, %v538
    %v541 = vunpack.c.l.s4 1966171168
    %v542 = vunpack.c.0.s8 %v541
    %v543 = vlaneseq
    %v544 = vshrl.u32 %v543, 7
    %v545 = vsub.s32 %v542, %v544
    %v546 = vrot.slane %v532, %v545
    %v547 = vld [vmem:[%s23] sm:$0xff]
    %v548 = vld [vmem:[%s23 + $0x8] sm:$0xff]
    %v549 = vld [vmem:[%s23 + $0x10] sm:$0xff]
    %v550 = vld [vmem:[%s23 + $0x18] sm:$0xff]
    %v551 = vld [vmem:[%s25] sm:$0x1]
    %v553 = vlaneseq
    %v554 = vshrl.u32 %v553, 7
    %v555 = vsub.s32 0, %v554
    %v556 = vrot.slane %v551, %v555
    %v559 = vsel %vm477, %v519, 0
    %v562 = vsel %vm477, %v520, 0
    %564 = vmatprep.subr.mxu0 0.0
    %565 = vmatpush1.msra.mxu0 %v547
    %566 = vmatprep.subr.mxu0 0.0
    %567 = vmatpush1.msra.mxu0 %v548
    %568 = vmatprep.subr.mxu0 0.0
    %569 = vmatpush1.msra.mxu0 %v549
    %570 = vmatprep.subr.mxu0 0.0
    %571 = vmatpush1.msra.mxu0 %v550
    %572 = vmatprep.subr.mxu0 0.0
    %573 = vmatpush1.msra.mxu0 0.0
    %574 = vmatprep.subr.mxu0 0.0
    %575 = vmatpush1.msra.mxu0 0.0
    %576 = vmatprep.subr.mxu0 0.0
    %577 = vmatpush1.msra.mxu0 0.0
    %578 = vmatprep.subr.mxu0 0.0
    %579 = vmatpush1.msra.mxu0 0.0
    %580 = vmatprep.subr.mxu0 0.0
    %581 = vmatpush1.msra.mxu0 0.0
    %582 = vmatprep.subr.mxu0 0.0
    %583 = vmatpush1.msra.mxu0 0.0
    %584 = vmatprep.subr.mxu0 0.0
    %585 = vmatpush1.msra.mxu0 0.0
    %586 = vmatprep.subr.mxu0 0.0
    %587 = vmatpush1.msra.mxu0 0.0
    %588 = vmatprep.subr.mxu0 0.0
    %589 = vmatpush1.msra.mxu0 0.0
    %590 = vmatprep.subr.mxu0 0.0
    %591 = vmatpush1.msra.mxu0 0.0
    %592 = vmatprep.subr.mxu0 0.0
    %593 = vmatpush1.msra.mxu0 0.0
    %594 = vmatprep.subr.mxu0 0.0
    %595 = vmatpush1.msra.mxu0 0.0
    %596 = vmatprep.subr.mxu0 0.0
    %597 = vmatpush1.msra.mxu0 0.0
    %598 = vmatprep.subr.mxu0 0.0
    %599 = vmatpush1.msra.mxu0 0.0
    %600 = vmatprep.subr.mxu0 0.0
    %601 = vmatpush1.msra.mxu0 0.0
    %602 = vmatprep.subr.mxu0 0.0
    %603 = vmatpush1.msra.mxu0 0.0
    %604 = vmatprep.subr.mxu0 0.0
    %605 = vmatpush1.msra.mxu0 0.0
    %606 = vmatprep.subr.mxu0 0.0
    %607 = vmatpush1.msra.mxu0 0.0
    %608 = vmatprep.subr.mxu0 0.0
    %609 = vmatpush1.msra.mxu0 0.0
    %610 = vmatprep.subr.mxu0 0.0
    %611 = vmatpush1.msra.mxu0 0.0
    %612 = vmatprep.subr.mxu0 0.0
    %613 = vmatpush1.msra.mxu0 0.0
    %614 = vmatprep.subr.mxu0 0.0
    %615 = vmatpush1.msra.mxu0 0.0
    %616 = vmatprep.subr.mxu0 0.0
    %617 = vmatpush1.msra.mxu0 0.0
    %618 = vmatprep.subr.mxu0 0.0
    %619 = vmatpush1.msra.mxu0 0.0
    %620 = vmatprep.subr.mxu0 0.0
    %621 = vmatpush1.msra.mxu0 0.0
    %622 = vmatprep.subr.mxu0 0.0
    %623 = vmatpush1.msra.mxu0 0.0
    %624 = vmatprep.subr.mxu0 0.0
    %625 = vmatpush1.msra.mxu0 0.0
    %626 = vmatprep.subr.mxu0 0.0
    %627 = vmatpush1.msra.mxu0 0.0
    %628 = vmatprep.mubr.f32.mxu0 0.0
    %629 = vmatmul.mubr.f32.gmra.mrb[0].mxu0 %v559
    %v630 = vpop.f32.mrb[0].mxu0
    %v631 = vadd.f32 %v556, %v630
    %v632 = vpop.f32.mrb[0].mxu0
    %633 = vmatprep.mubr.f32.mxu0 0.0
    %634 = vmatmul.mubr.f32.gmra.mrb[0].mxu0 %v562
    %v635 = vpop.f32.mrb[0].mxu0
    %v636 = vadd.f32 %v556, %v635
    %v637 = vpop.f32.mrb[0].mxu0
    %638 = vdwg.mxu0
    %v639 = vld [vmem:[%s27] sm:$0xff]
    %v640 = vld [vmem:[%s27 + $0x8] sm:$0xff]
    %v641 = vld [vmem:[%s27 + $0x10] sm:$0xff]
    %v642 = vld [vmem:[%s27 + $0x18] sm:$0xff]
    %644 = vrot.lane.b32.xlu0 %v631, 96
    %v645 = vpop.permute.xlu0 %644
    %vm646 = vcmask 130048
    %v647 = vsel %vm646, %v631, 0
    %v649 = vsel %vm646, %v645, 0
    %651 = vmatprep.subr.mxu0 0.0
    %652 = vmatpush1.xpose.msra.mxu0 %v649
    %653 = vmatprep.subr.mxu0 0.0
    %654 = vmatpush1.xpose.msra.mxu0 0.0
    %655 = vmatprep.subr.mxu0 0.0
    %656 = vmatpush1.xpose.msra.mxu0 0.0
    %657 = vmatprep.subr.mxu0 0.0
    %658 = vmatpush1.xpose.msra.mxu0 0.0
    %659 = vmatprep.subr.mxu0 0.0
    %660 = vmatpush1.xpose.msra.mxu0 0.0
    %661 = vmatprep.subr.mxu0 0.0
    %662 = vmatpush1.xpose.msra.mxu0 0.0
    %663 = vmatprep.subr.mxu0 0.0
    %664 = vmatpush1.xpose.msra.mxu0 0.0
    %665 = vmatprep.subr.mxu0 0.0
    %666 = vmatpush1.xpose.msra.mxu0 0.0
    %667 = vmatprep.subr.mxu0 0.0
    %668 = vmatpush1.xpose.msra.mxu0 0.0
    %669 = vmatprep.subr.mxu0 0.0
    %670 = vmatpush1.xpose.msra.mxu0 0.0
    %671 = vmatprep.subr.mxu0 0.0
    %672 = vmatpush1.xpose.msra.mxu0 0.0
    %673 = vmatprep.subr.mxu0 0.0
    %674 = vmatpush1.xpose.msra.mxu0 0.0
    %675 = vmatprep.subr.mxu0 0.0
    %676 = vmatpush1.xpose.msra.mxu0 0.0
    %677 = vmatprep.subr.mxu0 0.0
    %678 = vmatpush1.xpose.msra.mxu0 0.0
    %679 = vmatprep.subr.mxu0 0.0
    %680 = vmatpush1.xpose.msra.mxu0 0.0
    %681 = vmatprep.subr.mxu0 0.0
    %682 = vmatpush1.xpose.msra.mxu0 0.0
    %683 = vmatprep.subr.mxu0 0.0
    %684 = vmatpush1.xpose.msra.mxu0 0.0
    %685 = vmatprep.subr.mxu0 0.0
    %686 = vmatpush1.xpose.msra.mxu0 0.0
    %687 = vmatprep.subr.mxu0 0.0
    %688 = vmatpush1.xpose.msra.mxu0 0.0
    %689 = vmatprep.subr.mxu0 0.0
    %690 = vmatpush1.xpose.msra.mxu0 0.0
    %691 = vmatprep.subr.mxu0 0.0
    %692 = vmatpush1.xpose.msra.mxu0 0.0
    %693 = vmatprep.subr.mxu0 0.0
    %694 = vmatpush1.xpose.msra.mxu0 0.0
    %695 = vmatprep.subr.mxu0 0.0
    %696 = vmatpush1.xpose.msra.mxu0 0.0
    %697 = vmatprep.subr.mxu0 0.0
    %698 = vmatpush1.xpose.msra.mxu0 0.0
    %699 = vmatprep.subr.mxu0 0.0
    %700 = vmatpush1.xpose.msra.mxu0 0.0
    %701 = vmatprep.subr.mxu0 0.0
    %702 = vmatpush1.xpose.msra.mxu0 0.0
    %703 = vmatprep.subr.mxu0 0.0
    %704 = vmatpush1.xpose.msra.mxu0 0.0
    %705 = vmatprep.subr.mxu0 0.0
    %706 = vmatpush1.xpose.msra.mxu0 0.0
    %707 = vmatprep.subr.mxu0 0.0
    %708 = vmatpush1.xpose.msra.mxu0 0.0
    %709 = vmatprep.subr.mxu0 0.0
    %710 = vmatpush1.xpose.msra.mxu0 0.0
    %711 = vmatprep.subr.mxu0 0.0
    %712 = vmatpush1.xpose.msra.mxu0 0.0
    %713 = vmatprep.subr.mxu0 0.0
    %714 = vmatpush1.xpose.msra.mxu0 0.0
    %715 = vmatprep.mubr.f32.mxu0 0.0
    %716 = vmatmul.mubr.f32.gmra.mrb[0].mxu0 %v647
    %v717 = vpop.f32.mrb[0].mxu0
    %v718 = vadd.f32 0.0, %v717
    %v719 = vpop.f32.mrb[0].mxu0
    %720 = vdwg.mxu0
    %722 = vrot.lane.b32.xlu0 %v636, 96
    %v723 = vpop.permute.xlu0 %722
    %v724 = vsel %vm646, %v636, 0
    %v726 = vsel %vm646, %v723, 0
    %728 = vmatprep.subr.mxu0 0.0
    %729 = vmatpush1.xpose.msra.mxu0 %v726
    %730 = vmatprep.subr.mxu0 0.0
    %731 = vmatpush1.xpose.msra.mxu0 0.0
    %732 = vmatprep.subr.mxu0 0.0
    %733 = vmatpush1.xpose.msra.mxu0 0.0
    %734 = vmatprep.subr.mxu0 0.0
    %735 = vmatpush1.xpose.msra.mxu0 0.0
    %736 = vmatprep.subr.mxu0 0.0
    %737 = vmatpush1.xpose.msra.mxu0 0.0
    %738 = vmatprep.subr.mxu0 0.0
    %739 = vmatpush1.xpose.msra.mxu0 0.0
    %740 = vmatprep.subr.mxu0 0.0
    %741 = vmatpush1.xpose.msra.mxu0 0.0
    %742 = vmatprep.subr.mxu0 0.0
    %743 = vmatpush1.xpose.msra.mxu0 0.0
    %744 = vmatprep.subr.mxu0 0.0
    %745 = vmatpush1.xpose.msra.mxu0 0.0
    %746 = vmatprep.subr.mxu0 0.0
    %747 = vmatpush1.xpose.msra.mxu0 0.0
    %748 = vmatprep.subr.mxu0 0.0
    %749 = vmatpush1.xpose.msra.mxu0 0.0
    %750 = vmatprep.subr.mxu0 0.0
    %751 = vmatpush1.xpose.msra.mxu0 0.0
    %752 = vmatprep.subr.mxu0 0.0
    %753 = vmatpush1.xpose.msra.mxu0 0.0
    %754 = vmatprep.subr.mxu0 0.0
    %755 = vmatpush1.xpose.msra.mxu0 0.0
    %756 = vmatprep.subr.mxu0 0.0
    %757 = vmatpush1.xpose.msra.mxu0 0.0
    %758 = vmatprep.subr.mxu0 0.0
    %759 = vmatpush1.xpose.msra.mxu0 0.0
    %760 = vmatprep.subr.mxu0 0.0
    %761 = vmatpush1.xpose.msra.mxu0 0.0
    %762 = vmatprep.subr.mxu0 0.0
    %763 = vmatpush1.xpose.msra.mxu0 0.0
    %764 = vmatprep.subr.mxu0 0.0
    %765 = vmatpush1.xpose.msra.mxu0 0.0
    %766 = vmatprep.subr.mxu0 0.0
    %767 = vmatpush1.xpose.msra.mxu0 0.0
    %768 = vmatprep.subr.mxu0 0.0
    %769 = vmatpush1.xpose.msra.mxu0 0.0
    %770 = vmatprep.subr.mxu0 0.0
    %771 = vmatpush1.xpose.msra.mxu0 0.0
    %772 = vmatprep.subr.mxu0 0.0
    %773 = vmatpush1.xpose.msra.mxu0 0.0
    %774 = vmatprep.subr.mxu0 0.0
    %775 = vmatpush1.xpose.msra.mxu0 0.0
    %776 = vmatprep.subr.mxu0 0.0
    %777 = vmatpush1.xpose.msra.mxu0 0.0
    %778 = vmatprep.subr.mxu0 0.0
    %779 = vmatpush1.xpose.msra.mxu0 0.0
    %780 = vmatprep.subr.mxu0 0.0
    %781 = vmatpush1.xpose.msra.mxu0 0.0
    %782 = vmatprep.subr.mxu0 0.0
    %783 = vmatpush1.xpose.msra.mxu0 0.0
    %784 = vmatprep.subr.mxu0 0.0
    %785 = vmatpush1.xpose.msra.mxu0 0.0
    %786 = vmatprep.subr.mxu0 0.0
    %787 = vmatpush1.xpose.msra.mxu0 0.0
    %788 = vmatprep.subr.mxu0 0.0
    %789 = vmatpush1.xpose.msra.mxu0 0.0
    %790 = vmatprep.subr.mxu0 0.0
    %791 = vmatpush1.xpose.msra.mxu0 0.0
    %792 = vmatprep.mubr.f32.mxu0 0.0
    %793 = vmatmul.mubr.f32.gmra.mrb[0].mxu0 %v724
    %v794 = vpop.f32.mrb[0].mxu0
    %v795 = vadd.f32 0.0, %v794
    %v796 = vpop.f32.mrb[0].mxu0
    %797 = vdwg.mxu0
    %v798 = vmul.f32 %v718, 0.25
    %v799 = vmul.f32 %v795, 0.25
    %v800 = vlaneseq
    %v801 = vshrl.u32 %v800, 7
    %v802 = vsub.s32 0, %v801
    %v803 = vrot.slane %v539, %v802
    %v804 = vlaneseq
    %v805 = vshrl.u32 %v804, 7
    %v806 = vsub.s32 0, %v805
    %v807 = vrot.slane %v546, %v806
    %v810 = vadd.f32 %v798, %v803
    %v811 = vadd.f32 %v799, %v807
    %vm812 = vcmask 64512
    %v813 = vsel %vm812, %v810, -inf
    %814 = vmax.xlane.f32.xlu0 %v813
    %v815 = vpop.xlane.xlu0 %814
    %v816 = vsel %vm812, %v811, -inf
    %817 = vmax.xlane.f32.xlu0 %v816
    %v818 = vpop.xlane.xlu0 %817
    %v819 = vsub.f32 %v810, %v815
    %v820 = vsub.f32 %v811, %v818
    %v821 = vmul.f32 %v819, 1.442695
    %v822 = vpow.pop %v821
    %v823 = vmul.f32 %v820, 1.442695
    %v824 = vpow.pop %v823
    %v825 = vsel %vm812, %v822, 0.0
    %826 = vadd.xlane.f32.xlu0 %v825
    %v827 = vpop.xlane.xlu0 %826
    %v828 = vsel %vm812, %v824, 0.0
    %829 = vadd.xlane.f32.xlu0 %v828
    %v830 = vpop.xlane.xlu0 %829
    %v831 = vrcp.pop %v827
    %v832 = vmul.f32 %v822, %v831
    %v833 = vrcp.pop %v830
    %v834 = vmul.f32 %v824, %v833
    %835 = vrot.lane.b32.xlu0 %v631, 64
    %v836 = vpop.permute.xlu0 %835
    %v839 = vsel %vm812, %v832, 0
    %841 = vmatprep.subr.mxu0 0.0
    %842 = vmatpush1.msra.mxu0 %v836
    %843 = vmatprep.subr.mxu0 0.0
    %844 = vmatpush1.msra.mxu0 0.0
    %845 = vmatprep.subr.mxu0 0.0
    %846 = vmatpush1.msra.mxu0 0.0
    %847 = vmatprep.subr.mxu0 0.0
    %848 = vmatpush1.msra.mxu0 0.0
    %849 = vmatprep.subr.mxu0 0.0
    %850 = vmatpush1.msra.mxu0 0.0
    %851 = vmatprep.subr.mxu0 0.0
    %852 = vmatpush1.msra.mxu0 0.0
    %853 = vmatprep.subr.mxu0 0.0
    %854 = vmatpush1.msra.mxu0 0.0
    %855 = vmatprep.subr.mxu0 0.0
    %856 = vmatpush1.msra.mxu0 0.0
    %857 = vmatprep.subr.mxu0 0.0
    %858 = vmatpush1.msra.mxu0 0.0
    %859 = vmatprep.subr.mxu0 0.0
    %860 = vmatpush1.msra.mxu0 0.0
    %861 = vmatprep.subr.mxu0 0.0
    %862 = vmatpush1.msra.mxu0 0.0
    %863 = vmatprep.subr.mxu0 0.0
    %864 = vmatpush1.msra.mxu0 0.0
    %865 = vmatprep.subr.mxu0 0.0
    %866 = vmatpush1.msra.mxu0 0.0
    %867 = vmatprep.subr.mxu0 0.0
    %868 = vmatpush1.msra.mxu0 0.0
    %869 = vmatprep.subr.mxu0 0.0
    %870 = vmatpush1.msra.mxu0 0.0
    %871 = vmatprep.subr.mxu0 0.0
    %872 = vmatpush1.msra.mxu0 0.0
    %873 = vmatprep.subr.mxu0 0.0
    %874 = vmatpush1.msra.mxu0 0.0
    %875 = vmatprep.subr.mxu0 0.0
    %876 = vmatpush1.msra.mxu0 0.0
    %877 = vmatprep.subr.mxu0 0.0
    %878 = vmatpush1.msra.mxu0 0.0
    %879 = vmatprep.subr.mxu0 0.0
    %880 = vmatpush1.msra.mxu0 0.0
    %881 = vmatprep.subr.mxu0 0.0
    %882 = vmatpush1.msra.mxu0 0.0
    %883 = vmatprep.subr.mxu0 0.0
    %884 = vmatpush1.msra.mxu0 0.0
    %885 = vmatprep.subr.mxu0 0.0
    %886 = vmatpush1.msra.mxu0 0.0
    %887 = vmatprep.subr.mxu0 0.0
    %888 = vmatpush1.msra.mxu0 0.0
    %889 = vmatprep.subr.mxu0 0.0
    %890 = vmatpush1.msra.mxu0 0.0
    %891 = vmatprep.subr.mxu0 0.0
    %892 = vmatpush1.msra.mxu0 0.0
    %893 = vmatprep.subr.mxu0 0.0
    %894 = vmatpush1.msra.mxu0 0.0
    %895 = vmatprep.subr.mxu0 0.0
    %896 = vmatpush1.msra.mxu0 0.0
    %897 = vmatprep.subr.mxu0 0.0
    %898 = vmatpush1.msra.mxu0 0.0
    %899 = vmatprep.subr.mxu0 0.0
    %900 = vmatpush1.msra.mxu0 0.0
    %901 = vmatprep.subr.mxu0 0.0
    %902 = vmatpush1.msra.mxu0 0.0
    %903 = vmatprep.subr.mxu0 0.0
    %904 = vmatpush1.msra.mxu0 0.0
    %905 = vmatprep.mubr.f32.mxu0 0.0
    %906 = vmatmul.mubr.f32.gmra.mrb[0].mxu0 %v839
    %v907 = vpop.f32.mrb[0].mxu0
    %v908 = vadd.f32 0.0, %v907
    %v909 = vpop.f32.mrb[0].mxu0
    %910 = vdwg.mxu0
    %911 = vrot.lane.b32.xlu0 %v636, 64
    %v912 = vpop.permute.xlu0 %911
    %v915 = vsel %vm812, %v834, 0
    %917 = vmatprep.subr.mxu0 0.0
    %918 = vmatpush1.msra.mxu0 %v912
    %919 = vmatprep.subr.mxu0 0.0
    %920 = vmatpush1.msra.mxu0 0.0
    %921 = vmatprep.subr.mxu0 0.0
    %922 = vmatpush1.msra.mxu0 0.0
    %923 = vmatprep.subr.mxu0 0.0
    %924 = vmatpush1.msra.mxu0 0.0
    %925 = vmatprep.subr.mxu0 0.0
    %926 = vmatpush1.msra.mxu0 0.0
    %927 = vmatprep.subr.mxu0 0.0
    %928 = vmatpush1.msra.mxu0 0.0
    %929 = vmatprep.subr.mxu0 0.0
    %930 = vmatpush1.msra.mxu0 0.0
    %931 = vmatprep.subr.mxu0 0.0
    %932 = vmatpush1.msra.mxu0 0.0
    %933 = vmatprep.subr.mxu0 0.0
    %934 = vmatpush1.msra.mxu0 0.0
    %935 = vmatprep.subr.mxu0 0.0
    %936 = vmatpush1.msra.mxu0 0.0
    %937 = vmatprep.subr.mxu0 0.0
    %938 = vmatpush1.msra.mxu0 0.0
    %939 = vmatprep.subr.mxu0 0.0
    %940 = vmatpush1.msra.mxu0 0.0
    %941 = vmatprep.subr.mxu0 0.0
    %942 = vmatpush1.msra.mxu0 0.0
    %943 = vmatprep.subr.mxu0 0.0
    %944 = vmatpush1.msra.mxu0 0.0
    %945 = vmatprep.subr.mxu0 0.0
    %946 = vmatpush1.msra.mxu0 0.0
    %947 = vmatprep.subr.mxu0 0.0
    %948 = vmatpush1.msra.mxu0 0.0
    %949 = vmatprep.subr.mxu0 0.0
    %950 = vmatpush1.msra.mxu0 0.0
    %951 = vmatprep.subr.mxu0 0.0
    %952 = vmatpush1.msra.mxu0 0.0
    %953 = vmatprep.subr.mxu0 0.0
    %954 = vmatpush1.msra.mxu0 0.0
    %955 = vmatprep.subr.mxu0 0.0
    %956 = vmatpush1.msra.mxu0 0.0
    %957 = vmatprep.subr.mxu0 0.0
    %958 = vmatpush1.msra.mxu0 0.0
    %959 = vmatprep.subr.mxu0 0.0
    %960 = vmatpush1.msra.mxu0 0.0
    %961 = vmatprep.subr.mxu0 0.0
    %962 = vmatpush1.msra.mxu0 0.0
    %963 = vmatprep.subr.mxu0 0.0
    %964 = vmatpush1.msra.mxu0 0.0
    %965 = vmatprep.subr.mxu0 0.0
    %966 = vmatpush1.msra.mxu0 0.0
    %967 = vmatprep.subr.mxu0 0.0
    %968 = vmatpush1.msra.mxu0 0.0
    %969 = vmatprep.subr.mxu0 0.0
    %970 = vmatpush1.msra.mxu0 0.0
    %971 = vmatprep.subr.mxu0 0.0
    %972 = vmatpush1.msra.mxu0 0.0
    %973 = vmatprep.subr.mxu0 0.0
    %974 = vmatpush1.msra.mxu0 0.0
    %975 = vmatprep.subr.mxu0 0.0
    %976 = vmatpush1.msra.mxu0 0.0
    %977 = vmatprep.subr.mxu0 0.0
    %978 = vmatpush1.msra.mxu0 0.0
    %979 = vmatprep.subr.mxu0 0.0
    %980 = vmatpush1.msra.mxu0 0.0
    %981 = vmatprep.mubr.f32.mxu0 0.0
    %982 = vmatmul.mubr.f32.gmra.mrb[0].mxu0 %v915
    %v983 = vpop.f32.mrb[0].mxu0
    %v984 = vadd.f32 0.0, %v983
    %v985 = vpop.f32.mrb[0].mxu0
    %986 = vdwg.mxu0
    %987 = vrot.lane.b32.xlu0 %v631, 112
    %v988 = vpop.permute.xlu0 %987
    %989 = vrot.lane.b32.xlu0 %v631, 80
    %v990 = vpop.permute.xlu0 %989
    %v991 = vsel %vm646, %v988, 0
    %v993 = vsel %vm646, %v990, 0
    %995 = vmatprep.subr.mxu0 0.0
    %996 = vmatpush1.xpose.msra.mxu0 %v993
    %997 = vmatprep.subr.mxu0 0.0
    %998 = vmatpush1.xpose.msra.mxu0 0.0
    %999 = vmatprep.subr.mxu0 0.0
    %1000 = vmatpush1.xpose.msra.mxu0 0.0
    %1001 = vmatprep.subr.mxu0 0.0
    %1002 = vmatpush1.xpose.msra.mxu0 0.0
    %1003 = vmatprep.subr.mxu0 0.0
    %1004 = vmatpush1.xpose.msra.mxu0 0.0
    %1005 = vmatprep.subr.mxu0 0.0
    %1006 = vmatpush1.xpose.msra.mxu0 0.0
    %1007 = vmatprep.subr.mxu0 0.0
    %1008 = vmatpush1.xpose.msra.mxu0 0.0
    %1009 = vmatprep.subr.mxu0 0.0
    %1010 = vmatpush1.xpose.msra.mxu0 0.0
    %1011 = vmatprep.subr.mxu0 0.0
    %1012 = vmatpush1.xpose.msra.mxu0 0.0
    %1013 = vmatprep.subr.mxu0 0.0
    %1014 = vmatpush1.xpose.msra.mxu0 0.0
    %1015 = vmatprep.subr.mxu0 0.0
    %1016 = vmatpush1.xpose.msra.mxu0 0.0
    %1017 = vmatprep.subr.mxu0 0.0
    %1018 = vmatpush1.xpose.msra.mxu0 0.0
    %1019 = vmatprep.subr.mxu0 0.0
    %1020 = vmatpush1.xpose.msra.mxu0 0.0
    %1021 = vmatprep.subr.mxu0 0.0
    %1022 = vmatpush1.xpose.msra.mxu0 0.0
    %1023 = vmatprep.subr.mxu0 0.0
    %1024 = vmatpush1.xpose.msra.mxu0 0.0
    %1025 = vmatprep.subr.mxu0 0.0
    %1026 = vmatpush1.xpose.msra.mxu0 0.0
    %1027 = vmatprep.subr.mxu0 0.0
    %1028 = vmatpush1.xpose.msra.mxu0 0.0
    %1029 = vmatprep.subr.mxu0 0.0
    %1030 = vmatpush1.xpose.msra.mxu0 0.0
    %1031 = vmatprep.subr.mxu0 0.0
    %1032 = vmatpush1.xpose.msra.mxu0 0.0
    %1033 = vmatprep.subr.mxu0 0.0
    %1034 = vmatpush1.xpose.msra.mxu0 0.0
    %1035 = vmatprep.subr.mxu0 0.0
    %1036 = vmatpush1.xpose.msra.mxu0 0.0
    %1037 = vmatprep.subr.mxu0 0.0
    %1038 = vmatpush1.xpose.msra.mxu0 0.0
    %1039 = vmatprep.subr.mxu0 0.0
    %1040 = vmatpush1.xpose.msra.mxu0 0.0
    %1041 = vmatprep.subr.mxu0 0.0
    %1042 = vmatpush1.xpose.msra.mxu0 0.0
    %1043 = vmatprep.subr.mxu0 0.0
    %1044 = vmatpush1.xpose.msra.mxu0 0.0
    %1045 = vmatprep.subr.mxu0 0.0
    %1046 = vmatpush1.xpose.msra.mxu0 0.0
    %1047 = vmatprep.subr.mxu0 0.0
    %1048 = vmatpush1.xpose.msra.mxu0 0.0
    %1049 = vmatprep.subr.mxu0 0.0
    %1050 = vmatpush1.xpose.msra.mxu0 0.0
    %1051 = vmatprep.subr.mxu0 0.0
    %1052 = vmatpush1.xpose.msra.mxu0 0.0
    %1053 = vmatprep.subr.mxu0 0.0
    %1054 = vmatpush1.xpose.msra.mxu0 0.0
    %1055 = vmatprep.subr.mxu0 0.0
    %1056 = vmatpush1.xpose.msra.mxu0 0.0
    %1057 = vmatprep.subr.mxu0 0.0
    %1058 = vmatpush1.xpose.msra.mxu0 0.0
    %1059 = vmatprep.mubr.f32.mxu0 0.0
    %1060 = vmatmul.mubr.f32.gmra.mrb[0].mxu0 %v991
    %v1061 = vpop.f32.mrb[0].mxu0
    %v1062 = vadd.f32 0.0, %v1061
    %v1063 = vpop.f32.mrb[0].mxu0
    %1064 = vdwg.mxu0
    %1065 = vrot.lane.b32.xlu0 %v636, 112
    %v1066 = vpop.permute.xlu0 %1065
    %1067 = vrot.lane.b32.xlu0 %v636, 80
    %v1068 = vpop.permute.xlu0 %1067
    %v1069 = vsel %vm646, %v1066, 0
    %v1071 = vsel %vm646, %v1068, 0
    %1073 = vmatprep.subr.mxu0 0.0
    %1074 = vmatpush1.xpose.msra.mxu0 %v1071
    %1075 = vmatprep.subr.mxu0 0.0
    %1076 = vmatpush1.xpose.msra.mxu0 0.0
    %1077 = vmatprep.subr.mxu0 0.0
    %1078 = vmatpush1.xpose.msra.mxu0 0.0
    %1079 = vmatprep.subr.mxu0 0.0
    %1080 = vmatpush1.xpose.msra.mxu0 0.0
    %1081 = vmatprep.subr.mxu0 0.0
    %1082 = vmatpush1.xpose.msra.mxu0 0.0
    %1083 = vmatprep.subr.mxu0 0.0
    %1084 = vmatpush1.xpose.msra.mxu0 0.0
    %1085 = vmatprep.subr.mxu0 0.0
    %1086 = vmatpush1.xpose.msra.mxu0 0.0
    %1087 = vmatprep.subr.mxu0 0.0
    %1088 = vmatpush1.xpose.msra.mxu0 0.0
    %1089 = vmatprep.subr.mxu0 0.0
    %1090 = vmatpush1.xpose.msra.mxu0 0.0
    %1091 = vmatprep.subr.mxu0 0.0
    %1092 = vmatpush1.xpose.msra.mxu0 0.0
    %1093 = vmatprep.subr.mxu0 0.0
    %1094 = vmatpush1.xpose.msra.mxu0 0.0
    %1095 = vmatprep.subr.mxu0 0.0
    %1096 = vmatpush1.xpose.msra.mxu0 0.0
    %1097 = vmatprep.subr.mxu0 0.0
    %1098 = vmatpush1.xpose.msra.mxu0 0.0
    %1099 = vmatprep.subr.mxu0 0.0
    %1100 = vmatpush1.xpose.msra.mxu0 0.0
    %1101 = vmatprep.subr.mxu0 0.0
    %1102 = vmatpush1.xpose.msra.mxu0 0.0
    %1103 = vmatprep.subr.mxu0 0.0
    %1104 = vmatpush1.xpose.msra.mxu0 0.0
    %1105 = vmatprep.subr.mxu0 0.0
    %1106 = vmatpush1.xpose.msra.mxu0 0.0
    %1107 = vmatprep.subr.mxu0 0.0
    %1108 = vmatpush1.xpose.msra.mxu0 0.0
    %1109 = vmatprep.subr.mxu0 0.0
    %1110 = vmatpush1.xpose.msra.mxu0 0.0
    %1111 = vmatprep.subr.mxu0 0.0
    %1112 = vmatpush1.xpose.msra.mxu0 0.0
    %1113 = vmatprep.subr.mxu0 0.0
    %1114 = vmatpush1.xpose.msra.mxu0 0.0
    %1115 = vmatprep.subr.mxu0 0.0
    %1116 = vmatpush1.xpose.msra.mxu0 0.0
    %1117 = vmatprep.subr.mxu0 0.0
    %1118 = vmatpush1.xpose.msra.mxu0 0.0
    %1119 = vmatprep.subr.mxu0 0.0
    %1120 = vmatpush1.xpose.msra.mxu0 0.0
    %1121 = vmatprep.subr.mxu0 0.0
    %1122 = vmatpush1.xpose.msra.mxu0 0.0
    %1123 = vmatprep.subr.mxu0 0.0
    %1124 = vmatpush1.xpose.msra.mxu0 0.0
    %1125 = vmatprep.subr.mxu0 0.0
    %1126 = vmatpush1.xpose.msra.mxu0 0.0
    %1127 = vmatprep.subr.mxu0 0.0
    %1128 = vmatpush1.xpose.msra.mxu0 0.0
    %1129 = vmatprep.subr.mxu0 0.0
    %1130 = vmatpush1.xpose.msra.mxu0 0.0
    %1131 = vmatprep.subr.mxu0 0.0
    %1132 = vmatpush1.xpose.msra.mxu0 0.0
    %1133 = vmatprep.subr.mxu0 0.0
    %1134 = vmatpush1.xpose.msra.mxu0 0.0
    %1135 = vmatprep.subr.mxu0 0.0
    %1136 = vmatpush1.xpose.msra.mxu0 0.0
    %1137 = vmatprep.mubr.f32.mxu0 0.0
    %1138 = vmatmul.mubr.f32.gmra.mrb[0].mxu0 %v1069
    %v1139 = vpop.f32.mrb[0].mxu0
    %v1140 = vadd.f32 0.0, %v1139
    %v1141 = vpop.f32.mrb[0].mxu0
    %1142 = vdwg.mxu0
    %v1143 = vmul.f32 %v1062, 0.25
    %v1144 = vmul.f32 %v1140, 0.25
    %v1145 = vadd.f32 %v1143, %v803
    %v1146 = vadd.f32 %v1144, %v807
    %v1147 = vsel %vm812, %v1145, -inf
    %1148 = vmax.xlane.f32.xlu0 %v1147
    %v1149 = vpop.xlane.xlu0 %1148
    %v1150 = vsel %vm812, %v1146, -inf
    %1151 = vmax.xlane.f32.xlu0 %v1150
    %v1152 = vpop.xlane.xlu0 %1151
    %v1153 = vsub.f32 %v1145, %v1149
    %v1154 = vsub.f32 %v1146, %v1152
    %v1155 = vmul.f32 %v1153, 1.442695
    %v1156 = vpow.pop %v1155
    %v1157 = vmul.f32 %v1154, 1.442695
    %v1158 = vpow.pop %v1157
    %v1159 = vsel %vm812, %v1156, 0.0
    %1160 = vadd.xlane.f32.xlu0 %v1159
    %v1161 = vpop.xlane.xlu0 %1160
    %v1162 = vsel %vm812, %v1158, 0.0
    %1163 = vadd.xlane.f32.xlu0 %v1162
    %v1164 = vpop.xlane.xlu0 %1163
    %v1165 = vrcp.pop %v1161
    %v1166 = vmul.f32 %v1156, %v1165
    %v1167 = vrcp.pop %v1164
    %v1168 = vmul.f32 %v1158, %v1167
    %1169 = vrot.lane.b32.xlu0 %v631, 48
    %v1170 = vpop.permute.xlu0 %1169
    %v1173 = vsel %vm812, %v1166, 0
    %1175 = vmatprep.subr.mxu0 0.0
    %1176 = vmatpush1.msra.mxu0 %v1170
    %1177 = vmatprep.subr.mxu0 0.0
    %1178 = vmatpush1.msra.mxu0 0.0
    %1179 = vmatprep.subr.mxu0 0.0
    %1180 = vmatpush1.msra.mxu0 0.0
    %1181 = vmatprep.subr.mxu0 0.0
    %1182 = vmatpush1.msra.mxu0 0.0
    %1183 = vmatprep.subr.mxu0 0.0
    %1184 = vmatpush1.msra.mxu0 0.0
    %1185 = vmatprep.subr.mxu0 0.0
    %1186 = vmatpush1.msra.mxu0 0.0
    %1187 = vmatprep.subr.mxu0 0.0
    %1188 = vmatpush1.msra.mxu0 0.0
    %1189 = vmatprep.subr.mxu0 0.0
    %1190 = vmatpush1.msra.mxu0 0.0
    %1191 = vmatprep.subr.mxu0 0.0
    %1192 = vmatpush1.msra.mxu0 0.0
    %1193 = vmatprep.subr.mxu0 0.0
    %1194 = vmatpush1.msra.mxu0 0.0
    %1195 = vmatprep.subr.mxu0 0.0
    %1196 = vmatpush1.msra.mxu0 0.0
    %1197 = vmatprep.subr.mxu0 0.0
    %1198 = vmatpush1.msra.mxu0 0.0
    %1199 = vmatprep.subr.mxu0 0.0
    %1200 = vmatpush1.msra.mxu0 0.0
    %1201 = vmatprep.subr.mxu0 0.0
    %1202 = vmatpush1.msra.mxu0 0.0
    %1203 = vmatprep.subr.mxu0 0.0
    %1204 = vmatpush1.msra.mxu0 0.0
    %1205 = vmatprep.subr.mxu0 0.0
    %1206 = vmatpush1.msra.mxu0 0.0
    %1207 = vmatprep.subr.mxu0 0.0
    %1208 = vmatpush1.msra.mxu0 0.0
    %1209 = vmatprep.subr.mxu0 0.0
    %1210 = vmatpush1.msra.mxu0 0.0
    %1211 = vmatprep.subr.mxu0 0.0
    %1212 = vmatpush1.msra.mxu0 0.0
    %1213 = vmatprep.subr.mxu0 0.0
    %1214 = vmatpush1.msra.mxu0 0.0
    %1215 = vmatprep.subr.mxu0 0.0
    %1216 = vmatpush1.msra.mxu0 0.0
    %1217 = vmatprep.subr.mxu0 0.0
    %1218 = vmatpush1.msra.mxu0 0.0
    %1219 = vmatprep.subr.mxu0 0.0
    %1220 = vmatpush1.msra.mxu0 0.0
    %1221 = vmatprep.subr.mxu0 0.0
    %1222 = vmatpush1.msra.mxu0 0.0
    %1223 = vmatprep.subr.mxu0 0.0
    %1224 = vmatpush1.msra.mxu0 0.0
    %1225 = vmatprep.subr.mxu0 0.0
    %1226 = vmatpush1.msra.mxu0 0.0
    %1227 = vmatprep.subr.mxu0 0.0
    %1228 = vmatpush1.msra.mxu0 0.0
    %1229 = vmatprep.subr.mxu0 0.0
    %1230 = vmatpush1.msra.mxu0 0.0
    %1231 = vmatprep.subr.mxu0 0.0
    %1232 = vmatpush1.msra.mxu0 0.0
    %1233 = vmatprep.subr.mxu0 0.0
    %1234 = vmatpush1.msra.mxu0 0.0
    %1235 = vmatprep.subr.mxu0 0.0
    %1236 = vmatpush1.msra.mxu0 0.0
    %1237 = vmatprep.subr.mxu0 0.0
    %1238 = vmatpush1.msra.mxu0 0.0
    %1239 = vmatprep.mubr.f32.mxu0 0.0
    %1240 = vmatmul.mubr.f32.gmra.mrb[0].mxu0 %v1173
    %v1241 = vpop.f32.mrb[0].mxu0
    %v1242 = vadd.f32 0.0, %v1241
    %v1243 = vpop.f32.mrb[0].mxu0
    %1244 = vdwg.mxu0
    %1245 = vrot.lane.b32.xlu0 %v636, 48
    %v1246 = vpop.permute.xlu0 %1245
    %v1249 = vsel %vm812, %v1168, 0
    %1251 = vmatprep.subr.mxu0 0.0
    %1252 = vmatpush1.msra.mxu0 %v1246
    %1253 = vmatprep.subr.mxu0 0.0
    %1254 = vmatpush1.msra.mxu0 0.0
    %1255 = vmatprep.subr.mxu0 0.0
    %1256 = vmatpush1.msra.mxu0 0.0
    %1257 = vmatprep.subr.mxu0 0.0
    %1258 = vmatpush1.msra.mxu0 0.0
    %1259 = vmatprep.subr.mxu0 0.0
    %1260 = vmatpush1.msra.mxu0 0.0
    %1261 = vmatprep.subr.mxu0 0.0
    %1262 = vmatpush1.msra.mxu0 0.0
    %1263 = vmatprep.subr.mxu0 0.0
    %1264 = vmatpush1.msra.mxu0 0.0
    %1265 = vmatprep.subr.mxu0 0.0
    %1266 = vmatpush1.msra.mxu0 0.0
    %1267 = vmatprep.subr.mxu0 0.0
    %1268 = vmatpush1.msra.mxu0 0.0
    %1269 = vmatprep.subr.mxu0 0.0
    %1270 = vmatpush1.msra.mxu0 0.0
    %1271 = vmatprep.subr.mxu0 0.0
    %1272 = vmatpush1.msra.mxu0 0.0
    %1273 = vmatprep.subr.mxu0 0.0
    %1274 = vmatpush1.msra.mxu0 0.0
    %1275 = vmatprep.subr.mxu0 0.0
    %1276 = vmatpush1.msra.mxu0 0.0
    %1277 = vmatprep.subr.mxu0 0.0
    %1278 = vmatpush1.msra.mxu0 0.0
    %1279 = vmatprep.subr.mxu0 0.0
    %1280 = vmatpush1.msra.mxu0 0.0
    %1281 = vmatprep.subr.mxu0 0.0
    %1282 = vmatpush1.msra.mxu0 0.0
    %1283 = vmatprep.subr.mxu0 0.0
    %1284 = vmatpush1.msra.mxu0 0.0
    %1285 = vmatprep.subr.mxu0 0.0
    %1286 = vmatpush1.msra.mxu0 0.0
    %1287 = vmatprep.subr.mxu0 0.0
    %1288 = vmatpush1.msra.mxu0 0.0
    %1289 = vmatprep.subr.mxu0 0.0
    %1290 = vmatpush1.msra.mxu0 0.0
    %1291 = vmatprep.subr.mxu0 0.0
    %1292 = vmatpush1.msra.mxu0 0.0
    %1293 = vmatprep.subr.mxu0 0.0
    %1294 = vmatpush1.msra.mxu0 0.0
    %1295 = vmatprep.subr.mxu0 0.0
    %1296 = vmatpush1.msra.mxu0 0.0
    %1297 = vmatprep.subr.mxu0 0.0
    %1298 = vmatpush1.msra.mxu0 0.0
    %1299 = vmatprep.subr.mxu0 0.0
    %1300 = vmatpush1.msra.mxu0 0.0
    %1301 = vmatprep.subr.mxu0 0.0
    %1302 = vmatpush1.msra.mxu0 0.0
    %1303 = vmatprep.subr.mxu0 0.0
    %1304 = vmatpush1.msra.mxu0 0.0
    %1305 = vmatprep.subr.mxu0 0.0
    %1306 = vmatpush1.msra.mxu0 0.0
    %1307 = vmatprep.subr.mxu0 0.0
    %1308 = vmatpush1.msra.mxu0 0.0
    %1309 = vmatprep.subr.mxu0 0.0
    %1310 = vmatpush1.msra.mxu0 0.0
    %1311 = vmatprep.subr.mxu0 0.0
    %1312 = vmatpush1.msra.mxu0 0.0
    %1313 = vmatprep.subr.mxu0 0.0
    %1314 = vmatpush1.msra.mxu0 0.0
    %1315 = vmatprep.mubr.f32.mxu0 0.0
    %1316 = vmatmul.mubr.f32.gmra.mrb[0].mxu0 %v1249
    %v1317 = vpop.f32.mrb[0].mxu0
    %v1318 = vadd.f32 0.0, %v1317
    %v1319 = vpop.f32.mrb[0].mxu0
    %1320 = vdwg.mxu0
    %v1322 = vsel %vm646, %v1242, 0
    %v1325 = vsel %vm646, %v1318, 0
    %1327 = vmatprep.subr.mxu0 0.0
    %1328 = vmatpush1.msra.mxu0 %v641
    %1329 = vmatprep.subr.mxu0 0.0
    %1330 = vmatpush1.msra.mxu0 %v642
    %1331 = vmatprep.subr.mxu0 0.0
    %1332 = vmatpush1.msra.mxu0 0.0
    %1333 = vmatprep.subr.mxu0 0.0
    %1334 = vmatpush1.msra.mxu0 0.0
    %1335 = vmatprep.subr.mxu0 0.0
    %1336 = vmatpush1.msra.mxu0 0.0
    %1337 = vmatprep.subr.mxu0 0.0
    %1338 = vmatpush1.msra.mxu0 0.0
    %1339 = vmatprep.subr.mxu0 0.0
    %1340 = vmatpush1.msra.mxu0 0.0
    %1341 = vmatprep.subr.mxu0 0.0
    %1342 = vmatpush1.msra.mxu0 0.0
    %1343 = vmatprep.subr.mxu0 0.0
    %1344 = vmatpush1.msra.mxu0 0.0
    %1345 = vmatprep.subr.mxu0 0.0
    %1346 = vmatpush1.msra.mxu0 0.0
    %1347 = vmatprep.subr.mxu0 0.0
    %1348 = vmatpush1.msra.mxu0 0.0
    %1349 = vmatprep.subr.mxu0 0.0
    %1350 = vmatpush1.msra.mxu0 0.0
    %1351 = vmatprep.subr.mxu0 0.0
    %1352 = vmatpush1.msra.mxu0 0.0
    %1353 = vmatprep.subr.mxu0 0.0
    %1354 = vmatpush1.msra.mxu0 0.0
    %1355 = vmatprep.subr.mxu0 0.0
    %1356 = vmatpush1.msra.mxu0 0.0
    %1357 = vmatprep.subr.mxu0 0.0
    %1358 = vmatpush1.msra.mxu0 0.0
    %1359 = vmatprep.subr.mxu0 0.0
    %1360 = vmatpush1.msra.mxu0 0.0
    %1361 = vmatprep.subr.mxu0 0.0
    %1362 = vmatpush1.msra.mxu0 0.0
    %1363 = vmatprep.subr.mxu0 0.0
    %1364 = vmatpush1.msra.mxu0 0.0
    %1365 = vmatprep.subr.mxu0 0.0
    %1366 = vmatpush1.msra.mxu0 0.0
    %1367 = vmatprep.subr.mxu0 0.0
    %1368 = vmatpush1.msra.mxu0 0.0
    %1369 = vmatprep.subr.mxu0 0.0
    %1370 = vmatpush1.msra.mxu0 0.0
    %1371 = vmatprep.subr.mxu0 0.0
    %1372 = vmatpush1.msra.mxu0 0.0
    %1373 = vmatprep.subr.mxu0 0.0
    %1374 = vmatpush1.msra.mxu0 0.0
    %1375 = vmatprep.subr.mxu0 0.0
    %1376 = vmatpush1.msra.mxu0 0.0
    %1377 = vmatprep.subr.mxu0 0.0
    %1378 = vmatpush1.msra.mxu0 0.0
    %1379 = vmatprep.subr.mxu0 0.0
    %1380 = vmatpush1.msra.mxu0 0.0
    %1381 = vmatprep.subr.mxu0 0.0
    %1382 = vmatpush1.msra.mxu0 0.0
    %1383 = vmatprep.subr.mxu0 0.0
    %1384 = vmatpush1.msra.mxu0 0.0
    %1385 = vmatprep.subr.mxu0 0.0
    %1386 = vmatpush1.msra.mxu0 0.0
    %1387 = vmatprep.subr.mxu0 0.0
    %1388 = vmatpush1.msra.mxu0 0.0
    %1389 = vmatprep.subr.mxu0 0.0
    %1390 = vmatpush1.msra.mxu0 0.0
    %1391 = vmatprep.mubr.f32.mxu0 0.0
    %1392 = vmatmul.mubr.f32.gmra.mrb[0].mxu0 %v1322
    %v1393 = vpop.f32.mrb[0].mxu0
    %v1394 = vadd.f32 0.0, %v1393
    %v1395 = vpop.f32.mrb[0].mxu0
    %1396 = vmatprep.mubr.f32.mxu0 0.0
    %1397 = vmatmul.mubr.f32.gmra.mrb[0].mxu0 %v1325
    %v1398 = vpop.f32.mrb[0].mxu0
    %v1399 = vadd.f32 0.0, %v1398
    %v1400 = vpop.f32.mrb[0].mxu0
    %1401 = vdwg.mxu0
    %v1403 = vsel %vm646, %v908, 0
    %v1406 = vsel %vm646, %v984, 0
    %1408 = vmatprep.subr.mxu0 0.0
    %1409 = vmatpush1.msra.mxu0 %v639
    %1410 = vmatprep.subr.mxu0 0.0
    %1411 = vmatpush1.msra.mxu0 %v640
    %1412 = vmatprep.subr.mxu0 0.0
    %1413 = vmatpush1.msra.mxu0 0.0
    %1414 = vmatprep.subr.mxu0 0.0
    %1415 = vmatpush1.msra.mxu0 0.0
    %1416 = vmatprep.subr.mxu0 0.0
    %1417 = vmatpush1.msra.mxu0 0.0
    %1418 = vmatprep.subr.mxu0 0.0
    %1419 = vmatpush1.msra.mxu0 0.0
    %1420 = vmatprep.subr.mxu0 0.0
    %1421 = vmatpush1.msra.mxu0 0.0
    %1422 = vmatprep.subr.mxu0 0.0
    %1423 = vmatpush1.msra.mxu0 0.0
    %1424 = vmatprep.subr.mxu0 0.0
    %1425 = vmatpush1.msra.mxu0 0.0
    %1426 = vmatprep.subr.mxu0 0.0
    %1427 = vmatpush1.msra.mxu0 0.0
    %1428 = vmatprep.subr.mxu0 0.0
    %1429 = vmatpush1.msra.mxu0 0.0
    %1430 = vmatprep.subr.mxu0 0.0
    %1431 = vmatpush1.msra.mxu0 0.0
    %1432 = vmatprep.subr.mxu0 0.0
    %1433 = vmatpush1.msra.mxu0 0.0
    %1434 = vmatprep.subr.mxu0 0.0
    %1435 = vmatpush1.msra.mxu0 0.0
    %1436 = vmatprep.subr.mxu0 0.0
    %1437 = vmatpush1.msra.mxu0 0.0
    %1438 = vmatprep.subr.mxu0 0.0
    %1439 = vmatpush1.msra.mxu0 0.0
    %1440 = vmatprep.subr.mxu0 0.0
    %1441 = vmatpush1.msra.mxu0 0.0
    %1442 = vmatprep.subr.mxu0 0.0
    %1443 = vmatpush1.msra.mxu0 0.0
    %1444 = vmatprep.subr.mxu0 0.0
    %1445 = vmatpush1.msra.mxu0 0.0
    %1446 = vmatprep.subr.mxu0 0.0
    %1447 = vmatpush1.msra.mxu0 0.0
    %1448 = vmatprep.subr.mxu0 0.0
    %1449 = vmatpush1.msra.mxu0 0.0
    %1450 = vmatprep.subr.mxu0 0.0
    %1451 = vmatpush1.msra.mxu0 0.0
    %1452 = vmatprep.subr.mxu0 0.0
    %1453 = vmatpush1.msra.mxu0 0.0
    %1454 = vmatprep.subr.mxu0 0.0
    %1455 = vmatpush1.msra.mxu0 0.0
    %1456 = vmatprep.subr.mxu0 0.0
    %1457 = vmatpush1.msra.mxu0 0.0
    %1458 = vmatprep.subr.mxu0 0.0
    %1459 = vmatpush1.msra.mxu0 0.0
    %1460 = vmatprep.subr.mxu0 0.0
    %1461 = vmatpush1.msra.mxu0 0.0
    %1462 = vmatprep.subr.mxu0 0.0
    %1463 = vmatpush1.msra.mxu0 0.0
    %1464 = vmatprep.subr.mxu0 0.0
    %1465 = vmatpush1.msra.mxu0 0.0
    %1466 = vmatprep.subr.mxu0 0.0
    %1467 = vmatpush1.msra.mxu0 0.0
    %1468 = vmatprep.subr.mxu0 0.0
    %1469 = vmatpush1.msra.mxu0 0.0
    %1470 = vmatprep.subr.mxu0 0.0
    %1471 = vmatpush1.msra.mxu0 0.0
    %1472 = vmatprep.mubr.f32.mxu0 0.0
    %1473 = vmatmul.mubr.f32.gmra.mrb[0].mxu0 %v1403
    %v1474 = vpop.f32.mrb[0].mxu0
    %v1475 = vadd.f32 %v1394, %v1474
    %v1476 = vpop.f32.mrb[0].mxu0
    %1477 = vmatprep.mubr.f32.mxu0 0.0
    %1478 = vmatmul.mubr.f32.gmra.mrb[0].mxu0 %v1406
    %v1479 = vpop.f32.mrb[0].mxu0
    %v1480 = vadd.f32 %v1399, %v1479
    %v1481 = vpop.f32.mrb[0].mxu0
    %1482 = vdwg.mxu0
    %v1483 = vld [vmem:[%s29] sm:$0x1]
    %v1485 = vlaneseq
    %v1486 = vshrl.u32 %v1485, 7
    %v1487 = vsub.s32 0, %v1486
    %v1488 = vrot.slane %v1483, %v1487
    %v1490 = vadd.f32 %v1475, %v1488
    %v1491 = vadd.f32 %v1480, %v1488
    %v1492 = vadd.f32 %v519, %v1490
    %v1493 = vadd.f32 %v520, %v1491
    %v1494 = vld [vmem:[%s31] sm:$0x1]
    %v1495 = vld [vmem:[%s33] sm:$0x1]
    %v1496 = vsel %vm477, %v1492, 0.0
    %1497 = vadd.xlane.f32.xlu0 %v1496
    %v1498 = vpop.xlane.xlu0 %1497
    %v1499 = vsel %vm477, %v1493, 0.0
    %1500 = vadd.xlane.f32.xlu0 %v1499
    %v1501 = vpop.xlane.xlu0 %1500
    %v1502 = vmul.f32 %v1498, %v484
    %v1503 = vmul.f32 %v1501, %v484
    %v1504 = vsub.f32 %v1492, %v1502
    %v1505 = vsub.f32 %v1493, %v1503
    %v1506 = vmul.f32 %v1504, %v1504
    %v1507 = vmul.f32 %v1505, %v1505
    %v1508 = vsel %vm477, %v1506, 0.0
    %1509 = vadd.xlane.f32.xlu0 %v1508
    %v1510 = vpop.xlane.xlu0 %1509
    %v1511 = vsel %vm477, %v1507, 0.0
    %1512 = vadd.xlane.f32.xlu0 %v1511
    %v1513 = vpop.xlane.xlu0 %1512
    %v1514 = vmul.f32 %v1510, %v484
    %v1515 = vmul.f32 %v1513, %v484
    %v1516 = vadd.f32 %v1514, 1e-12
    %v1517 = vadd.f32 %v1515, 1e-12
    %v1518 = vrsqrt.pop %v1516
    %v1519 = vrsqrt.pop %v1517
    %v1520 = vmul.f32 %v1504, %v1518
    %v1521 = vmul.f32 %v1505, %v1519
    %v1523 = vlaneseq
    %v1524 = vshrl.u32 %v1523, 7
    %v1525 = vsub.s32 0, %v1524
    %v1526 = vrot.slane %v1494, %v1525
    %v1528 = vmul.f32 %v1520, %v1526
    %v1529 = vmul.f32 %v1521, %v1526
    %v1531 = vlaneseq
    %v1532 = vshrl.u32 %v1531, 7
    %v1533 = vsub.s32 0, %v1532
    %v1534 = vrot.slane %v1495, %v1533
    %v1536 = vadd.f32 %v1528, %v1534
    %v1537 = vadd.f32 %v1529, %v1534
    %v1538 = vld [vmem:[%s35] sm:$0xff]
    %v1539 = vld [vmem:[%s35 + $0x8] sm:$0xff]
    %v1540 = vld [vmem:[%s35 + $0x10] sm:$0xff]
    %v1541 = vld [vmem:[%s35 + $0x18] sm:$0xff]
    %v1542 = vld [vmem:[%s37] sm:$0x1]
    %v1544 = vlaneseq
    %v1545 = vshrl.u32 %v1544, 7
    %v1546 = vsub.s32 0, %v1545
    %v1547 = vrot.slane %v1542, %v1546
    %v1550 = vsel %vm477, %v1536, 0
    %v1553 = vsel %vm477, %v1537, 0
    %1555 = vmatprep.subr.mxu0 0.0
    %1556 = vmatpush1.msra.mxu0 %v1538
    %1557 = vmatprep.subr.mxu0 0.0
    %1558 = vmatpush1.msra.mxu0 %v1539
    %1559 = vmatprep.subr.mxu0 0.0
    %1560 = vmatpush1.msra.mxu0 %v1540
    %1561 = vmatprep.subr.mxu0 0.0
    %1562 = vmatpush1.msra.mxu0 %v1541
    %1563 = vmatprep.subr.mxu0 0.0
    %1564 = vmatpush1.msra.mxu0 0.0
    %1565 = vmatprep.subr.mxu0 0.0
    %1566 = vmatpush1.msra.mxu0 0.0
    %1567 = vmatprep.subr.mxu0 0.0
    %1568 = vmatpush1.msra.mxu0 0.0
    %1569 = vmatprep.subr.mxu0 0.0
    %1570 = vmatpush1.msra.mxu0 0.0
    %1571 = vmatprep.subr.mxu0 0.0
    %1572 = vmatpush1.msra.mxu0 0.0
    %1573 = vmatprep.subr.mxu0 0.0
    %1574 = vmatpush1.msra.mxu0 0.0
    %1575 = vmatprep.subr.mxu0 0.0
    %1576 = vmatpush1.msra.mxu0 0.0
    %1577 = vmatprep.subr.mxu0 0.0
    %1578 = vmatpush1.msra.mxu0 0.0
    %1579 = vmatprep.subr.mxu0 0.0
    %1580 = vmatpush1.msra.mxu0 0.0
    %1581 = vmatprep.subr.mxu0 0.0
    %1582 = vmatpush1.msra.mxu0 0.0
    %1583 = vmatprep.subr.mxu0 0.0
    %1584 = vmatpush1.msra.mxu0 0.0
    %1585 = vmatprep.subr.mxu0 0.0
    %1586 = vmatpush1.msra.mxu0 0.0
    %1587 = vmatprep.subr.mxu0 0.0
    %1588 = vmatpush1.msra.mxu0 0.0
    %1589 = vmatprep.subr.mxu0 0.0
    %1590 = vmatpush1.msra.mxu0 0.0
    %1591 = vmatprep.subr.mxu0 0.0
    %1592 = vmatpush1.msra.mxu0 0.0
    %1593 = vmatprep.subr.mxu0 0.0
    %1594 = vmatpush1.msra.mxu0 0.0
    %1595 = vmatprep.subr.mxu0 0.0
    %1596 = vmatpush1.msra.mxu0 0.0
    %1597 = vmatprep.subr.mxu0 0.0
    %1598 = vmatpush1.msra.mxu0 0.0
    %1599 = vmatprep.subr.mxu0 0.0
    %1600 = vmatpush1.msra.mxu0 0.0
    %1601 = vmatprep.subr.mxu0 0.0
    %1602 = vmatpush1.msra.mxu0 0.0
    %1603 = vmatprep.subr.mxu0 0.0
    %1604 = vmatpush1.msra.mxu0 0.0
    %1605 = vmatprep.subr.mxu0 0.0
    %1606 = vmatpush1.msra.mxu0 0.0
    %1607 = vmatprep.subr.mxu0 0.0
    %1608 = vmatpush1.msra.mxu0 0.0
    %1609 = vmatprep.subr.mxu0 0.0
    %1610 = vmatpush1.msra.mxu0 0.0
    %1611 = vmatprep.subr.mxu0 0.0
    %1612 = vmatpush1.msra.mxu0 0.0
    %1613 = vmatprep.subr.mxu0 0.0
    %1614 = vmatpush1.msra.mxu0 0.0
    %1615 = vmatprep.subr.mxu0 0.0
    %1616 = vmatpush1.msra.mxu0 0.0
    %1617 = vmatprep.subr.mxu0 0.0
    %1618 = vmatpush1.msra.mxu0 0.0
    %1619 = vmatprep.mubr.f32.mxu0 0.0
    %1620 = vmatmul.mubr.f32.gmra.mrb[0].mxu0 %v1550
    %v1621 = vpop.f32.mrb[0].mxu0
    %v1622 = vadd.f32 %v1547, %v1621
    %v1623 = vpop.f32.mrb[0].mxu0
    %1624 = vmatprep.mubr.f32.mxu0 0.0
    %1625 = vmatmul.mubr.f32.gmra.mrb[0].mxu0 %v1553
    %v1626 = vpop.f32.mrb[0].mxu0
    %v1627 = vadd.f32 %v1547, %v1626
    %v1628 = vpop.f32.mrb[0].mxu0
    %1629 = vdwg.mxu0
    %v1630 = vmul.f32 %v1622, 0.5
    %v1631 = vmul.f32 %v1627, 0.5
    %v1632 = vmul.f32 %v1622, 0.044715
    %v1633 = vmul.f32 %v1627, 0.044715
    %v1634 = vmul.f32 %v1632, %v1622
    %v1635 = vmul.f32 %v1633, %v1627
    %v1636 = vmul.f32 %v1634, %v1622
    %v1637 = vmul.f32 %v1635, %v1627
    %v1638 = vadd.f32 %v1622, %v1636
    %v1639 = vadd.f32 %v1627, %v1637
    %v1640 = vmul.f32 %v1638, 0.7978846
    %v1641 = vmul.f32 %v1639, 0.7978846
    %v1642 = vtanh.pop %v1640
    %v1643 = vtanh.pop %v1641
    %v1644 = vadd.f32 %v1642, 1.0
    %v1645 = vadd.f32 %v1643, 1.0
    %v1646 = vmul.f32 %v1630, %v1644
    %v1647 = vmul.f32 %v1631, %v1645
    %v1648 = vld [vmem:[%s39] sm:$0xff]
    %v1649 = vld [vmem:[%s39 + $0x8] sm:$0xff]
    %v1650 = vld [vmem:[%s39 + $0x10] sm:$0xff]
    %v1651 = vld [vmem:[%s39 + $0x18] sm:$0xff]
    %v1652 = vld [vmem:[%s39 + $0x20] sm:$0xff]
    %v1653 = vld [vmem:[%s39 + $0x28] sm:$0xff]
    %v1654 = vld [vmem:[%s39 + $0x30] sm:$0xff]
    %v1655 = vld [vmem:[%s39 + $0x38] sm:$0xff]
    %v1656 = vld [vmem:[%s39 + $0x40] sm:$0xff]
    %v1657 = vld [vmem:[%s39 + $0x48] sm:$0xff]
    %v1658 = vld [vmem:[%s39 + $0x50] sm:$0xff]
    %v1659 = vld [vmem:[%s39 + $0x58] sm:$0xff]
    %v1660 = vld [vmem:[%s39 + $0x60] sm:$0xff]
    %v1661 = vld [vmem:[%s39 + $0x68] sm:$0xff]
    %v1662 = vld [vmem:[%s39 + $0x70] sm:$0xff]
    %v1663 = vld [vmem:[%s39 + $0x78] sm:$0xff]
    %v1664 = vld [vmem:[%s41] sm:$0x1]
    %v1666 = vlaneseq
    %v1667 = vshrl.u32 %v1666, 7
    %v1668 = vsub.s32 0, %v1667
    %v1669 = vrot.slane %v1664, %v1668
    %1671 = vmatprep.subr.mxu0 0.0
    %1672 = vmatpush1.msra.mxu0 %v1648
    %1673 = vmatprep.subr.mxu0 0.0
    %1674 = vmatpush1.msra.mxu0 %v1649
    %1675 = vmatprep.subr.mxu0 0.0
    %1676 = vmatpush1.msra.mxu0 %v1650
    %1677 = vmatprep.subr.mxu0 0.0
    %1678 = vmatpush1.msra.mxu0 %v1651
    %1679 = vmatprep.subr.mxu0 0.0
    %1680 = vmatpush1.msra.mxu0 %v1652
    %1681 = vmatprep.subr.mxu0 0.0
    %1682 = vmatpush1.msra.mxu0 %v1653
    %1683 = vmatprep.subr.mxu0 0.0
    %1684 = vmatpush1.msra.mxu0 %v1654
    %1685 = vmatprep.subr.mxu0 0.0
    %1686 = vmatpush1.msra.mxu0 %v1655
    %1687 = vmatprep.subr.mxu0 0.0
    %1688 = vmatpush1.msra.mxu0 %v1656
    %1689 = vmatprep.subr.mxu0 0.0
    %1690 = vmatpush1.msra.mxu0 %v1657
    %1691 = vmatprep.subr.mxu0 0.0
    %1692 = vmatpush1.msra.mxu0 %v1658
    %1693 = vmatprep.subr.mxu0 0.0
    %1694 = vmatpush1.msra.mxu0 %v1659
    %1695 = vmatprep.subr.mxu0 0.0
    %1696 = vmatpush1.msra.mxu0 %v1660
    %1697 = vmatprep.subr.mxu0 0.0
    %1698 = vmatpush1.msra.mxu0 %v1661
    %1699 = vmatprep.subr.mxu0 0.0
    %1700 = vmatpush1.msra.mxu0 %v1662
    %1701 = vmatprep.subr.mxu0 0.0
    %1702 = vmatpush1.msra.mxu0 %v1663
    %1703 = vmatprep.subr.mxu0 0.0
    %1704 = vmatpush1.msra.mxu0 0.0
    %1705 = vmatprep.subr.mxu0 0.0
    %1706 = vmatpush1.msra.mxu0 0.0
    %1707 = vmatprep.subr.mxu0 0.0
    %1708 = vmatpush1.msra.mxu0 0.0
    %1709 = vmatprep.subr.mxu0 0.0
    %1710 = vmatpush1.msra.mxu0 0.0
    %1711 = vmatprep.subr.mxu0 0.0
    %1712 = vmatpush1.msra.mxu0 0.0
    %1713 = vmatprep.subr.mxu0 0.0
    %1714 = vmatpush1.msra.mxu0 0.0
    %1715 = vmatprep.subr.mxu0 0.0
    %1716 = vmatpush1.msra.mxu0 0.0
    %1717 = vmatprep.subr.mxu0 0.0
    %1718 = vmatpush1.msra.mxu0 0.0
    %1719 = vmatprep.subr.mxu0 0.0
    %1720 = vmatpush1.msra.mxu0 0.0
    %1721 = vmatprep.subr.mxu0 0.0
    %1722 = vmatpush1.msra.mxu0 0.0
    %1723 = vmatprep.subr.mxu0 0.0
    %1724 = vmatpush1.msra.mxu0 0.0
    %1725 = vmatprep.subr.mxu0 0.0
    %1726 = vmatpush1.msra.mxu0 0.0
    %1727 = vmatprep.subr.mxu0 0.0
    %1728 = vmatpush1.msra.mxu0 0.0
    %1729 = vmatprep.subr.mxu0 0.0
    %1730 = vmatpush1.msra.mxu0 0.0
    %1731 = vmatprep.subr.mxu0 0.0
    %1732 = vmatpush1.msra.mxu0 0.0
    %1733 = vmatprep.subr.mxu0 0.0
    %1734 = vmatpush1.msra.mxu0 0.0
    %1735 = vmatprep.mubr.f32.mxu0 0.0
    %1736 = vmatmul.mubr.f32.gmra.mrb[0].mxu0 %v1646
    %v1737 = vpop.f32.mrb[0].mxu0
    %v1738 = vadd.f32 %v1669, %v1737
    %v1739 = vpop.f32.mrb[0].mxu0
    %1740 = vmatprep.mubr.f32.mxu0 0.0
    %1741 = vmatmul.mubr.f32.gmra.mrb[0].mxu0 %v1647
    %v1742 = vpop.f32.mrb[0].mxu0
    %v1743 = vadd.f32 %v1669, %v1742
    %v1744 = vpop.f32.mrb[0].mxu0
    %1745 = vdwg.mxu0
    %v1746 = vld [vmem:[%s45] sm:$0xff]
    %v1747 = vld [vmem:[%s45 + $0x8] sm:$0xff]
    %v1748 = vld [vmem:[%s45 + $0x10] sm:$0xff]
    %v1749 = vld [vmem:[%s45 + $0x18] sm:$0xff]
    %v1750 = vld [vmem:[%s47] sm:$0x1]
    %v1752 = vlaneseq
    %v1753 = vshrl.u32 %v1752, 7
    %v1754 = vsub.s32 0, %v1753
    %v1755 = vrot.slane %v1750, %v1754
    %v1758 = vsel %vm477, %v260, 0
    %1760 = vmatprep.subr.mxu0 0.0
    %1761 = vmatpush1.msra.mxu0 %v1746
    %1762 = vmatprep.subr.mxu0 0.0
    %1763 = vmatpush1.msra.mxu0 %v1747
    %1764 = vmatprep.subr.mxu0 0.0
    %1765 = vmatpush1.msra.mxu0 %v1748
    %1766 = vmatprep.subr.mxu0 0.0
    %1767 = vmatpush1.msra.mxu0 %v1749
    %1768 = vmatprep.subr.mxu0 0.0
    %1769 = vmatpush1.msra.mxu0 0.0
    %1770 = vmatprep.subr.mxu0 0.0
    %1771 = vmatpush1.msra.mxu0 0.0
    %1772 = vmatprep.subr.mxu0 0.0
    %1773 = vmatpush1.msra.mxu0 0.0
    %1774 = vmatprep.subr.mxu0 0.0
    %1775 = vmatpush1.msra.mxu0 0.0
    %1776 = vmatprep.subr.mxu0 0.0
    %1777 = vmatpush1.msra.mxu0 0.0
    %1778 = vmatprep.subr.mxu0 0.0
    %1779 = vmatpush1.msra.mxu0 0.0
    %1780 = vmatprep.subr.mxu0 0.0
    %1781 = vmatpush1.msra.mxu0 0.0
    %1782 = vmatprep.subr.mxu0 0.0
    %1783 = vmatpush1.msra.mxu0 0.0
    %1784 = vmatprep.subr.mxu0 0.0
    %1785 = vmatpush1.msra.mxu0 0.0
    %1786 = vmatprep.subr.mxu0 0.0
    %1787 = vmatpush1.msra.mxu0 0.0
    %1788 = vmatprep.subr.mxu0 0.0
    %1789 = vmatpush1.msra.mxu0 0.0
    %1790 = vmatprep.subr.mxu0 0.0
    %1791 = vmatpush1.msra.mxu0 0.0
    %1792 = vmatprep.subr.mxu0 0.0
    %1793 = vmatpush1.msra.mxu0 0.0
    %1794 = vmatprep.subr.mxu0 0.0
    %1795 = vmatpush1.msra.mxu0 0.0
    %1796 = vmatprep.subr.mxu0 0.0
    %1797 = vmatpush1.msra.mxu0 0.0
    %1798 = vmatprep.subr.mxu0 0.0
    %1799 = vmatpush1.msra.mxu0 0.0
    %1800 = vmatprep.subr.mxu0 0.0
    %1801 = vmatpush1.msra.mxu0 0.0
    %1802 = vmatprep.subr.mxu0 0.0
    %1803 = vmatpush1.msra.mxu0 0.0
    %1804 = vmatprep.subr.mxu0 0.0
    %1805 = vmatpush1.msra.mxu0 0.0
    %1806 = vmatprep.subr.mxu0 0.0
    %1807 = vmatpush1.msra.mxu0 0.0
    %1808 = vmatprep.subr.mxu0 0.0
    %1809 = vmatpush1.msra.mxu0 0.0
    %1810 = vmatprep.subr.mxu0 0.0
    %1811 = vmatpush1.msra.mxu0 0.0
    %1812 = vmatprep.subr.mxu0 0.0
    %1813 = vmatpush1.msra.mxu0 0.0
    %1814 = vmatprep.subr.mxu0 0.0
    %1815 = vmatpush1.msra.mxu0 0.0
    %1816 = vmatprep.subr.mxu0 0.0
    %1817 = vmatpush1.msra.mxu0 0.0
    %1818 = vmatprep.subr.mxu0 0.0
    %1819 = vmatpush1.msra.mxu0 0.0
    %1820 = vmatprep.subr.mxu0 0.0
    %1821 = vmatpush1.msra.mxu0 0.0
    %1822 = vmatprep.subr.mxu0 0.0
    %1823 = vmatpush1.msra.mxu0 0.0
    %1824 = vmatprep.mubr.f32.mxu0 0.0
    %1825 = vmatmul.mubr.f32.gmra.mrb[0].mxu0 %v1758
    %v1826 = vpop.f32.mrb[0].mxu0
    %v1827 = vadd.f32 %v1755, %v1826
    %v1828 = vpop.f32.mrb[0].mxu0
    %1829 = vdwg.mxu0
    %v1830 = vld [vmem:[%s43] sm:$0xff]
    %v1831 = vld [vmem:[%s43 + $0x8] sm:$0xff]
    %v1832 = vld [vmem:[%s43 + $0x10] sm:$0xff]
    %v1833 = vld [vmem:[%s43 + $0x18] sm:$0xff]
    %v1835 = vsel %vm477, %v1738, 0
    %v1838 = vsel %vm477, %v1743, 0
    %1840 = vmatprep.subr.mxu0 0.0
    %1841 = vmatpush1.msra.mxu0 %v1830
    %1842 = vmatprep.subr.mxu0 0.0
    %1843 = vmatpush1.msra.mxu0 %v1831
    %1844 = vmatprep.subr.mxu0 0.0
    %1845 = vmatpush1.msra.mxu0 %v1832
    %1846 = vmatprep.subr.mxu0 0.0
    %1847 = vmatpush1.msra.mxu0 %v1833
    %1848 = vmatprep.subr.mxu0 0.0
    %1849 = vmatpush1.msra.mxu0 0.0
    %1850 = vmatprep.subr.mxu0 0.0
    %1851 = vmatpush1.msra.mxu0 0.0
    %1852 = vmatprep.subr.mxu0 0.0
    %1853 = vmatpush1.msra.mxu0 0.0
    %1854 = vmatprep.subr.mxu0 0.0
    %1855 = vmatpush1.msra.mxu0 0.0
    %1856 = vmatprep.subr.mxu0 0.0
    %1857 = vmatpush1.msra.mxu0 0.0
    %1858 = vmatprep.subr.mxu0 0.0
    %1859 = vmatpush1.msra.mxu0 0.0
    %1860 = vmatprep.subr.mxu0 0.0
    %1861 = vmatpush1.msra.mxu0 0.0
    %1862 = vmatprep.subr.mxu0 0.0
    %1863 = vmatpush1.msra.mxu0 0.0
    %1864 = vmatprep.subr.mxu0 0.0
    %1865 = vmatpush1.msra.mxu0 0.0
    %1866 = vmatprep.subr.mxu0 0.0
    %1867 = vmatpush1.msra.mxu0 0.0
    %1868 = vmatprep.subr.mxu0 0.0
    %1869 = vmatpush1.msra.mxu0 0.0
    %1870 = vmatprep.subr.mxu0 0.0
    %1871 = vmatpush1.msra.mxu0 0.0
    %1872 = vmatprep.subr.mxu0 0.0
    %1873 = vmatpush1.msra.mxu0 0.0
    %1874 = vmatprep.subr.mxu0 0.0
    %1875 = vmatpush1.msra.mxu0 0.0
    %1876 = vmatprep.subr.mxu0 0.0
    %1877 = vmatpush1.msra.mxu0 0.0
    %1878 = vmatprep.subr.mxu0 0.0
    %1879 = vmatpush1.msra.mxu0 0.0
    %1880 = vmatprep.subr.mxu0 0.0
    %1881 = vmatpush1.msra.mxu0 0.0
    %1882 = vmatprep.subr.mxu0 0.0
    %1883 = vmatpush1.msra.mxu0 0.0
    %1884 = vmatprep.subr.mxu0 0.0
    %1885 = vmatpush1.msra.mxu0 0.0
    %1886 = vmatprep.subr.mxu0 0.0
    %1887 = vmatpush1.msra.mxu0 0.0
    %1888 = vmatprep.subr.mxu0 0.0
    %1889 = vmatpush1.msra.mxu0 0.0
    %1890 = vmatprep.subr.mxu0 0.0
    %1891 = vmatpush1.msra.mxu0 0.0
    %1892 = vmatprep.subr.mxu0 0.0
    %1893 = vmatpush1.msra.mxu0 0.0
    %1894 = vmatprep.subr.mxu0 0.0
    %1895 = vmatpush1.msra.mxu0 0.0
    %1896 = vmatprep.subr.mxu0 0.0
    %1897 = vmatpush1.msra.mxu0 0.0
    %1898 = vmatprep.subr.mxu0 0.0
    %1899 = vmatpush1.msra.mxu0 0.0
    %1900 = vmatprep.subr.mxu0 0.0
    %1901 = vmatpush1.msra.mxu0 0.0
    %1902 = vmatprep.subr.mxu0 0.0
    %1903 = vmatpush1.msra.mxu0 0.0
    %1904 = vmatprep.mubr.f32.mxu0 0.0
    %1905 = vmatmul.mubr.f32.gmra.mrb[0].mxu0 %v1835
    %v1906 = vpop.f32.mrb[0].mxu0
    %v1907 = vadd.f32 0.0, %v1906
    %v1908 = vpop.f32.mrb[0].mxu0
    %1909 = vmatprep.mubr.f32.mxu0 0.0
    %1910 = vmatmul.mubr.f32.gmra.mrb[0].mxu0 %v1838
    %v1911 = vpop.f32.mrb[0].mxu0
    %v1912 = vadd.f32 0.0, %v1911
    %v1913 = vpop.f32.mrb[0].mxu0
    %1914 = vdwg.mxu0
    %v1917 = vunpack.c.l.s4 1966171168
    %v1918 = vunpack.c.0.s8 %v1917
    %v1919 = vlaneseq
    %v1920 = vshrl.u32 %v1919, 7
    %v1921 = vsub.s32 %v1918, %v1920
    %v1922 = vrot.slane %v1827, %v1921
    %v1923 = vcombine.high %v1922, %v1922
    %v1925 = vunpack.c.l.s4 1966171168
    %v1926 = vunpack.c.0.s8 %v1925
    %v1927 = vlaneseq
    %v1928 = vshrl.u32 %v1927, 7
    %v1929 = vsub.s32 %v1926, %v1928
    %v1930 = vrot.slane %v1922, %v1929
    %v1932 = vunpack.c.l.s4 1966171168
    %v1933 = vunpack.c.0.s8 %v1932
    %v1934 = vlaneseq
    %v1935 = vshrl.u32 %v1934, 7
    %v1936 = vsub.s32 %v1933, %v1935
    %v1937 = vrot.slane %v1923, %v1936
    %v1938 = vlaneseq
    %v1939 = vshrl.u32 %v1938, 7
    %v1940 = vsub.s32 0, %v1939
    %v1941 = vrot.slane %v1930, %v1940
    %v1942 = vlaneseq
    %v1943 = vshrl.u32 %v1942, 7
    %v1944 = vsub.s32 0, %v1943
    %v1945 = vrot.slane %v1937, %v1944
    %v1948 = vadd.f32 %v1907, %v1941
    %v1949 = vadd.f32 %v1912, %v1945
    %v1950 = vmul.f32 %v1948, 0.5
    %v1951 = vmul.f32 %v1949, 0.5
    %v1952 = vmul.f32 %v1948, 0.044715
    %v1953 = vmul.f32 %v1949, 0.044715
    %v1954 = vmul.f32 %v1952, %v1948
    %v1955 = vmul.f32 %v1953, %v1949
    %v1956 = vmul.f32 %v1954, %v1948
    %v1957 = vmul.f32 %v1955, %v1949
    %v1958 = vadd.f32 %v1948, %v1956
    %v1959 = vadd.f32 %v1949, %v1957
    %v1960 = vmul.f32 %v1958, 0.7978846
    %v1961 = vmul.f32 %v1959, 0.7978846
    %v1962 = vtanh.pop %v1960
    %v1963 = vtanh.pop %v1961
    %v1964 = vadd.f32 %v1962, 1.0
    %v1965 = vadd.f32 %v1963, 1.0
    %v1966 = vmul.f32 %v1950, %v1964
    %v1967 = vmul.f32 %v1951, %v1965
    %v1968 = vld [vmem:[%s49] sm:$0xff]
    %v1969 = vld [vmem:[%s49 + $0x8] sm:$0xff]
    %v1970 = vld [vmem:[%s51] sm:$0x1]
    %v1972 = vlaneseq
    %v1973 = vshrl.u32 %v1972, 7
    %v1974 = vsub.s32 0, %v1973
    %v1975 = vrot.slane %v1970, %v1974
    %v1978 = vsel %vm646, %v1966, 0
    %v1981 = vsel %vm646, %v1967, 0
    %1983 = vmatprep.subr.mxu0 0.0
    %1984 = vmatpush1.msra.mxu0 %v1968
    %1985 = vmatprep.subr.mxu0 0.0
    %1986 = vmatpush1.msra.mxu0 %v1969
    %1987 = vmatprep.subr.mxu0 0.0
    %1988 = vmatpush1.msra.mxu0 0.0
    %1989 = vmatprep.subr.mxu0 0.0
    %1990 = vmatpush1.msra.mxu0 0.0
    %1991 = vmatprep.subr.mxu0 0.0
    %1992 = vmatpush1.msra.mxu0 0.0
    %1993 = vmatprep.subr.mxu0 0.0
    %1994 = vmatpush1.msra.mxu0 0.0
    %1995 = vmatprep.subr.mxu0 0.0
    %1996 = vmatpush1.msra.mxu0 0.0
    %1997 = vmatprep.subr.mxu0 0.0
    %1998 = vmatpush1.msra.mxu0 0.0
    %1999 = vmatprep.subr.mxu0 0.0
    %2000 = vmatpush1.msra.mxu0 0.0
    %2001 = vmatprep.subr.mxu0 0.0
    %2002 = vmatpush1.msra.mxu0 0.0
    %2003 = vmatprep.subr.mxu0 0.0
    %2004 = vmatpush1.msra.mxu0 0.0
    %2005 = vmatprep.subr.mxu0 0.0
    %2006 = vmatpush1.msra.mxu0 0.0
    %2007 = vmatprep.subr.mxu0 0.0
    %2008 = vmatpush1.msra.mxu0 0.0
    %2009 = vmatprep.subr.mxu0 0.0
    %2010 = vmatpush1.msra.mxu0 0.0
    %2011 = vmatprep.subr.mxu0 0.0
    %2012 = vmatpush1.msra.mxu0 0.0
    %2013 = vmatprep.subr.mxu0 0.0
    %2014 = vmatpush1.msra.mxu0 0.0
    %2015 = vmatprep.subr.mxu0 0.0
    %2016 = vmatpush1.msra.mxu0 0.0
    %2017 = vmatprep.subr.mxu0 0.0
    %2018 = vmatpush1.msra.mxu0 0.0
    %2019 = vmatprep.subr.mxu0 0.0
    %2020 = vmatpush1.msra.mxu0 0.0
    %2021 = vmatprep.subr.mxu0 0.0
    %2022 = vmatpush1.msra.mxu0 0.0
    %2023 = vmatprep.subr.mxu0 0.0
    %2024 = vmatpush1.msra.mxu0 0.0
    %2025 = vmatprep.subr.mxu0 0.0
    %2026 = vmatpush1.msra.mxu0 0.0
    %2027 = vmatprep.subr.mxu0 0.0
    %2028 = vmatpush1.msra.mxu0 0.0
    %2029 = vmatprep.subr.mxu0 0.0
    %2030 = vmatpush1.msra.mxu0 0.0
    %2031 = vmatprep.subr.mxu0 0.0
    %2032 = vmatpush1.msra.mxu0 0.0
    %2033 = vmatprep.subr.mxu0 0.0
    %2034 = vmatpush1.msra.mxu0 0.0
    %2035 = vmatprep.subr.mxu0 0.0
    %2036 = vmatpush1.msra.mxu0 0.0
    %2037 = vmatprep.subr.mxu0 0.0
    %2038 = vmatpush1.msra.mxu0 0.0
    %2039 = vmatprep.subr.mxu0 0.0
    %2040 = vmatpush1.msra.mxu0 0.0
    %2041 = vmatprep.subr.mxu0 0.0
    %2042 = vmatpush1.msra.mxu0 0.0
    %2043 = vmatprep.subr.mxu0 0.0
    %2044 = vmatpush1.msra.mxu0 0.0
    %2045 = vmatprep.subr.mxu0 0.0
    %2046 = vmatpush1.msra.mxu0 0.0
    %2047 = vmatprep.mubr.f32.mxu0 0.0
    %2048 = vmatmul.mubr.f32.gmra.mrb[0].mxu0 %v1978
    %v2049 = vpop.f32.mrb[0].mxu0
    %v2050 = vadd.f32 %v1975, %v2049
    %v2051 = vpop.f32.mrb[0].mxu0
    %2052 = vmatprep.mubr.f32.mxu0 0.0
    %2053 = vmatmul.mubr.f32.gmra.mrb[0].mxu0 %v1981
    %v2054 = vpop.f32.mrb[0].mxu0
    %v2055 = vadd.f32 %v1975, %v2054
    %v2056 = vpop.f32.mrb[0].mxu0
    %2057 = vdwg.mxu0
    %v2058 = vadd.f32 %v1738, %v2050
    %v2059 = vadd.f32 %v1743, %v2055
    %v2060 = vadd.f32 %v1536, %v2058
    %v2061 = vadd.f32 %v1537, %v2059
    %v2062 = vld [vmem:[%s53] sm:$0x1]
    %v2063 = vld [vmem:[%s55] sm:$0x1]
    %v2064 = vsel %vm477, %v2060, 0.0
    %2065 = vadd.xlane.f32.xlu0 %v2064
    %v2066 = vpop.xlane.xlu0 %2065
    %v2067 = vsel %vm477, %v2061, 0.0
    %2068 = vadd.xlane.f32.xlu0 %v2067
    %v2069 = vpop.xlane.xlu0 %2068
    %v2070 = vmul.f32 %v2066, %v484
    %v2071 = vmul.f32 %v2069, %v484
    %v2072 = vsub.f32 %v2060, %v2070
    %v2073 = vsub.f32 %v2061, %v2071
    %v2074 = vmul.f32 %v2072, %v2072
    %v2075 = vmul.f32 %v2073, %v2073
    %v2076 = vsel %vm477, %v2074, 0.0
    %2077 = vadd.xlane.f32.xlu0 %v2076
    %v2078 = vpop.xlane.xlu0 %2077
    %v2079 = vsel %vm477, %v2075, 0.0
    %2080 = vadd.xlane.f32.xlu0 %v2079
    %v2081 = vpop.xlane.xlu0 %2080
    %v2082 = vmul.f32 %v2078, %v484
    %v2083 = vmul.f32 %v2081, %v484
    %v2084 = vadd.f32 %v2082, 1e-12
    %v2085 = vadd.f32 %v2083, 1e-12
    %v2086 = vrsqrt.pop %v2084
    %v2087 = vrsqrt.pop %v2085
    %v2088 = vmul.f32 %v2072, %v2086
    %v2089 = vmul.f32 %v2073, %v2087
    %v2091 = vlaneseq
    %v2092 = vshrl.u32 %v2091, 7
    %v2093 = vsub.s32 0, %v2092
    %v2094 = vrot.slane %v2062, %v2093
    %v2096 = vmul.f32 %v2088, %v2094
    %v2097 = vmul.f32 %v2089, %v2094
    %v2099 = vlaneseq
    %v2100 = vshrl.u32 %v2099, 7
    %v2101 = vsub.s32 0, %v2100
    %v2102 = vrot.slane %v2063, %v2101
    %v2104 = vadd.f32 %v2096, %v2102
    %v2105 = vadd.f32 %v2097, %v2102
    %s2106 = scalar_lea.vmem %s23, 32
    %v2107 = vld [vmem:[%s2106] sm:$0xff]
    %v2108 = vld [vmem:[%s2106 + $0x8] sm:$0xff]
    %v2109 = vld [vmem:[%s2106 + $0x10] sm:$0xff]
    %v2110 = vld [vmem:[%s2106 + $0x18] sm:$0xff]
    %s2111 = scalar_lea.vmem %s25, 1
    %v2112 = vld [vmem:[%s2111] sm:$0x1]
    %v2114 = vlaneseq
    %v2115 = vshrl.u32 %v2114, 7
    %v2116 = vsub.s32 0, %v2115
    %v2117 = vrot.slane %v2112, %v2116
    %v2120 = vsel %vm477, %v2104, 0
    %v2123 = vsel %vm477, %v2105, 0
    %2125 = vmatprep.subr.mxu0 0.0
    %2126 = vmatpush1.msra.mxu0 %v2107
    %2127 = vmatprep.subr.mxu0 0.0
    %2128 = vmatpush1.msra.mxu0 %v2108
    %2129 = vmatprep.subr.mxu0 0.0
    %2130 = vmatpush1.msra.mxu0 %v2109
    %2131 = vmatprep.subr.mxu0 0.0
    %2132 = vmatpush1.msra.mxu0 %v2110
    %2133 = vmatprep.subr.mxu0 0.0
    %2134 = vmatpush1.msra.mxu0 0.0
    %2135 = vmatprep.subr.mxu0 0.0
    %2136 = vmatpush1.msra.mxu0 0.0
    %2137 = vmatprep.subr.mxu0 0.0
    %2138 = vmatpush1.msra.mxu0 0.0
    %2139 = vmatprep.subr.mxu0 0.0
    %2140 = vmatpush1.msra.mxu0 0.0
    %2141 = vmatprep.subr.mxu0 0.0
    %2142 = vmatpush1.msra.mxu0 0.0
    %2143 = vmatprep.subr.mxu0 0.0
    %2144 = vmatpush1.msra.mxu0 0.0
    %2145 = vmatprep.subr.mxu0 0.0
    %2146 = vmatpush1.msra.mxu0 0.0
    %2147 = vmatprep.subr.mxu0 0.0
    %2148 = vmatpush1.msra.mxu0 0.0
    %2149 = vmatprep.subr.mxu0 0.0
    %2150 = vmatpush1.msra.mxu0 0.0
    %2151 = vmatprep.subr.mxu0 0.0
    %2152 = vmatpush1.msra.mxu0 0.0
    %2153 = vmatprep.subr.mxu0 0.0
    %2154 = vmatpush1.msra.mxu0 0.0
    %2155 = vmatprep.subr.mxu0 0.0
    %2156 = vmatpush1.msra.mxu0 0.0
    %2157 = vmatprep.subr.mxu0 0.0
    %2158 = vmatpush1.msra.mxu0 0.0
    %2159 = vmatprep.subr.mxu0 0.0
    %2160 = vmatpush1.msra.mxu0 0.0
    %2161 = vmatprep.subr.mxu0 0.0
    %2162 = vmatpush1.msra.mxu0 0.0
    %2163 = vmatprep.subr.mxu0 0.0
    %2164 = vmatpush1.msra.mxu0 0.0
    %2165 = vmatprep.subr.mxu0 0.0
    %2166 = vmatpush1.msra.mxu0 0.0
    %2167 = vmatprep.subr.mxu0 0.0
    %2168 = vmatpush1.msra.mxu0 0.0
    %2169 = vmatprep.subr.mxu0 0.0
    %2170 = vmatpush1.msra.mxu0 0.0
    %2171 = vmatprep.subr.mxu0 0.0
    %2172 = vmatpush1.msra.mxu0 0.0
    %2173 = vmatprep.subr.mxu0 0.0
    %2174 = vmatpush1.msra.mxu0 0.0
    %2175 = vmatprep.subr.mxu0 0.0
    %2176 = vmatpush1.msra.mxu0 0.0
    %2177 = vmatprep.subr.mxu0 0.0
    %2178 = vmatpush1.msra.mxu0 0.0
    %2179 = vmatprep.subr.mxu0 0.0
    %2180 = vmatpush1.msra.mxu0 0.0
    %2181 = vmatprep.subr.mxu0 0.0
    %2182 = vmatpush1.msra.mxu0 0.0
    %2183 = vmatprep.subr.mxu0 0.0
    %2184 = vmatpush1.msra.mxu0 0.0
    %2185 = vmatprep.subr.mxu0 0.0
    %2186 = vmatpush1.msra.mxu0 0.0
    %2187 = vmatprep.subr.mxu0 0.0
    %2188 = vmatpush1.msra.mxu0 0.0
    %2189 = vmatprep.mubr.f32.mxu0 0.0
    %2190 = vmatmul.mubr.f32.gmra.mrb[0].mxu0 %v2120
    %v2191 = vpop.f32.mrb[0].mxu0
    %v2192 = vadd.f32 %v2117, %v2191
    %v2193 = vpop.f32.mrb[0].mxu0
    %2194 = vmatprep.mubr.f32.mxu0 0.0
    %2195 = vmatmul.mubr.f32.gmra.mrb[0].mxu0 %v2123
    %v2196 = vpop.f32.mrb[0].mxu0
    %v2197 = vadd.f32 %v2117, %v2196
    %v2198 = vpop.f32.mrb[0].mxu0
    %2199 = vdwg.mxu0
    %s2200 = scalar_lea.vmem %s27, 32
    %v2201 = vld [vmem:[%s2200] sm:$0xff]
    %v2202 = vld [vmem:[%s2200 + $0x8] sm:$0xff]
    %v2203 = vld [vmem:[%s2200 + $0x10] sm:$0xff]
    %v2204 = vld [vmem:[%s2200 + $0x18] sm:$0xff]
    %2206 = vrot.lane.b32.xlu0 %v2192, 96
    %v2207 = vpop.permute.xlu0 %2206
    %v2208 = vsel %vm646, %v2192, 0
    %v2210 = vsel %vm646, %v2207, 0
    %2212 = vmatprep.subr.mxu0 0.0
    %2213 = vmatpush1.xpose.msra.mxu0 %v2210
    %2214 = vmatprep.subr.mxu0 0.0
    %2215 = vmatpush1.xpose.msra.mxu0 0.0
    %2216 = vmatprep.subr.mxu0 0.0
    %2217 = vmatpush1.xpose.msra.mxu0 0.0
    %2218 = vmatprep.subr.mxu0 0.0
    %2219 = vmatpush1.xpose.msra.mxu0 0.0
    %2220 = vmatprep.subr.mxu0 0.0
    %2221 = vmatpush1.xpose.msra.mxu0 0.0
    %2222 = vmatprep.subr.mxu0 0.0
    %2223 = vmatpush1.xpose.msra.mxu0 0.0
    %2224 = vmatprep.subr.mxu0 0.0
    %2225 = vmatpush1.xpose.msra.mxu0 0.0
    %2226 = vmatprep.subr.mxu0 0.0
    %2227 = vmatpush1.xpose.msra.mxu0 0.0
    %2228 = vmatprep.subr.mxu0 0.0
    %2229 = vmatpush1.xpose.msra.mxu0 0.0
    %2230 = vmatprep.subr.mxu0 0.0
    %2231 = vmatpush1.xpose.msra.mxu0 0.0
    %2232 = vmatprep.subr.mxu0 0.0
    %2233 = vmatpush1.xpose.msra.mxu0 0.0
    %2234 = vmatprep.subr.mxu0 0.0
    %2235 = vmatpush1.xpose.msra.mxu0 0.0
    %2236 = vmatprep.subr.mxu0 0.0
    %2237 = vmatpush1.xpose.msra.mxu0 0.0
    %2238 = vmatprep.subr.mxu0 0.0
    %2239 = vmatpush1.xpose.msra.mxu0 0.0
    %2240 = vmatprep.subr.mxu0 0.0
    %2241 = vmatpush1.xpose.msra.mxu0 0.0
    %2242 = vmatprep.subr.mxu0 0.0
    %2243 = vmatpush1.xpose.msra.mxu0 0.0
    %2244 = vmatprep.subr.mxu0 0.0
    %2245 = vmatpush1.xpose.msra.mxu0 0.0
    %2246 = vmatprep.subr.mxu0 0.0
    %2247 = vmatpush1.xpose.msra.mxu0 0.0
    %2248 = vmatprep.subr.mxu0 0.0
    %2249 = vmatpush1.xpose.msra.mxu0 0.0
    %2250 = vmatprep.subr.mxu0 0.0
    %2251 = vmatpush1.xpose.msra.mxu0 0.0
    %2252 = vmatprep.subr.mxu0 0.0
    %2253 = vmatpush1.xpose.msra.mxu0 0.0
    %2254 = vmatprep.subr.mxu0 0.0
    %2255 = vmatpush1.xpose.msra.mxu0 0.0
    %2256 = vmatprep.subr.mxu0 0.0
    %2257 = vmatpush1.xpose.msra.mxu0 0.0
    %2258 = vmatprep.subr.mxu0 0.0
    %2259 = vmatpush1.xpose.msra.mxu0 0.0
    %2260 = vmatprep.subr.mxu0 0.0
    %2261 = vmatpush1.xpose.msra.mxu0 0.0
    %2262 = vmatprep.subr.mxu0 0.0
    %2263 = vmatpush1.xpose.msra.mxu0 0.0
    %2264 = vmatprep.subr.mxu0 0.0
    %2265 = vmatpush1.xpose.msra.mxu0 0.0
    %2266 = vmatprep.subr.mxu0 0.0
    %2267 = vmatpush1.xpose.msra.mxu0 0.0
    %2268 = vmatprep.subr.mxu0 0.0
    %2269 = vmatpush1.xpose.msra.mxu0 0.0
    %2270 = vmatprep.subr.mxu0 0.0
    %2271 = vmatpush1.xpose.msra.mxu0 0.0
    %2272 = vmatprep.subr.mxu0 0.0
    %2273 = vmatpush1.xpose.msra.mxu0 0.0
    %2274 = vmatprep.subr.mxu0 0.0
    %2275 = vmatpush1.xpose.msra.mxu0 0.0
    %2276 = vmatprep.mubr.f32.mxu0 0.0
    %2277 = vmatmul.mubr.f32.gmra.mrb[0].mxu0 %v2208
    %v2278 = vpop.f32.mrb[0].mxu0
    %v2279 = vadd.f32 0.0, %v2278
    %v2280 = vpop.f32.mrb[0].mxu0
    %2281 = vdwg.mxu0
    %2283 = vrot.lane.b32.xlu0 %v2197, 96
    %v2284 = vpop.permute.xlu0 %2283
    %v2285 = vsel %vm646, %v2197, 0
    %v2287 = vsel %vm646, %v2284, 0
    %2289 = vmatprep.subr.mxu0 0.0
    %2290 = vmatpush1.xpose.msra.mxu0 %v2287
    %2291 = vmatprep.subr.mxu0 0.0
    %2292 = vmatpush1.xpose.msra.mxu0 0.0
    %2293 = vmatprep.subr.mxu0 0.0
    %2294 = vmatpush1.xpose.msra.mxu0 0.0
    %2295 = vmatprep.subr.mxu0 0.0
    %2296 = vmatpush1.xpose.msra.mxu0 0.0
    %2297 = vmatprep.subr.mxu0 0.0
    %2298 = vmatpush1.xpose.msra.mxu0 0.0
    %2299 = vmatprep.subr.mxu0 0.0
    %2300 = vmatpush1.xpose.msra.mxu0 0.0
    %2301 = vmatprep.subr.mxu0 0.0
    %2302 = vmatpush1.xpose.msra.mxu0 0.0
    %2303 = vmatprep.subr.mxu0 0.0
    %2304 = vmatpush1.xpose.msra.mxu0 0.0
    %2305 = vmatprep.subr.mxu0 0.0
    %2306 = vmatpush1.xpose.msra.mxu0 0.0
    %2307 = vmatprep.subr.mxu0 0.0
    %2308 = vmatpush1.xpose.msra.mxu0 0.0
    %2309 = vmatprep.subr.mxu0 0.0
    %2310 = vmatpush1.xpose.msra.mxu0 0.0
    %2311 = vmatprep.subr.mxu0 0.0
    %2312 = vmatpush1.xpose.msra.mxu0 0.0
    %2313 = vmatprep.subr.mxu0 0.0
    %2314 = vmatpush1.xpose.msra.mxu0 0.0
    %2315 = vmatprep.subr.mxu0 0.0
    %2316 = vmatpush1.xpose.msra.mxu0 0.0
    %2317 = vmatprep.subr.mxu0 0.0
    %2318 = vmatpush1.xpose.msra.mxu0 0.0
    %2319 = vmatprep.subr.mxu0 0.0
    %2320 = vmatpush1.xpose.msra.mxu0 0.0
    %2321 = vmatprep.subr.mxu0 0.0
    %2322 = vmatpush1.xpose.msra.mxu0 0.0
    %2323 = vmatprep.subr.mxu0 0.0
    %2324 = vmatpush1.xpose.msra.mxu0 0.0
    %2325 = vmatprep.subr.mxu0 0.0
    %2326 = vmatpush1.xpose.msra.mxu0 0.0
    %2327 = vmatprep.subr.mxu0 0.0
    %2328 = vmatpush1.xpose.msra.mxu0 0.0
    %2329 = vmatprep.subr.mxu0 0.0
    %2330 = vmatpush1.xpose.msra.mxu0 0.0
    %2331 = vmatprep.subr.mxu0 0.0
    %2332 = vmatpush1.xpose.msra.mxu0 0.0
    %2333 = vmatprep.subr.mxu0 0.0
    %2334 = vmatpush1.xpose.msra.mxu0 0.0
    %2335 = vmatprep.subr.mxu0 0.0
    %2336 = vmatpush1.xpose.msra.mxu0 0.0
    %2337 = vmatprep.subr.mxu0 0.0
    %2338 = vmatpush1.xpose.msra.mxu0 0.0
    %2339 = vmatprep.subr.mxu0 0.0
    %2340 = vmatpush1.xpose.msra.mxu0 0.0
    %2341 = vmatprep.subr.mxu0 0.0
    %2342 = vmatpush1.xpose.msra.mxu0 0.0
    %2343 = vmatprep.subr.mxu0 0.0
    %2344 = vmatpush1.xpose.msra.mxu0 0.0
    %2345 = vmatprep.subr.mxu0 0.0
    %2346 = vmatpush1.xpose.msra.mxu0 0.0
    %2347 = vmatprep.subr.mxu0 0.0
    %2348 = vmatpush1.xpose.msra.mxu0 0.0
    %2349 = vmatprep.subr.mxu0 0.0
    %2350 = vmatpush1.xpose.msra.mxu0 0.0
    %2351 = vmatprep.subr.mxu0 0.0
    %2352 = vmatpush1.xpose.msra.mxu0 0.0
    %2353 = vmatprep.mubr.f32.mxu0 0.0
    %2354 = vmatmul.mubr.f32.gmra.mrb[0].mxu0 %v2285
    %v2355 = vpop.f32.mrb[0].mxu0
    %v2356 = vadd.f32 0.0, %v2355
    %v2357 = vpop.f32.mrb[0].mxu0
    %2358 = vdwg.mxu0
    %v2359 = vmul.f32 %v2279, 0.25
    %v2360 = vmul.f32 %v2356, 0.25
    %v2361 = vadd.f32 %v2359, %v803
    %v2362 = vadd.f32 %v2360, %v807
    %v2363 = vsel %vm812, %v2361, -inf
    %2364 = vmax.xlane.f32.xlu0 %v2363
    %v2365 = vpop.xlane.xlu0 %2364
    %v2366 = vsel %vm812, %v2362, -inf
    %2367 = vmax.xlane.f32.xlu0 %v2366
    %v2368 = vpop.xlane.xlu0 %2367
    %v2369 = vsub.f32 %v2361, %v2365
    %v2370 = vsub.f32 %v2362, %v2368
    %v2371 = vmul.f32 %v2369, 1.442695
    %v2372 = vpow.pop %v2371
    %v2373 = vmul.f32 %v2370, 1.442695
    %v2374 = vpow.pop %v2373
    %v2375 = vsel %vm812, %v2372, 0.0
    %2376 = vadd.xlane.f32.xlu0 %v2375
    %v2377 = vpop.xlane.xlu0 %2376
    %v2378 = vsel %vm812, %v2374, 0.0
    %2379 = vadd.xlane.f32.xlu0 %v2378
    %v2380 = vpop.xlane.xlu0 %2379
    %v2381 = vrcp.pop %v2377
    %v2382 = vmul.f32 %v2372, %v2381
    %v2383 = vrcp.pop %v2380
    %v2384 = vmul.f32 %v2374, %v2383
    %2385 = vrot.lane.b32.xlu0 %v2192, 64
    %v2386 = vpop.permute.xlu0 %2385
    %v2389 = vsel %vm812, %v2382, 0
    %2391 = vmatprep.subr.mxu0 0.0
    %2392 = vmatpush1.msra.mxu0 %v2386
    %2393 = vmatprep.subr.mxu0 0.0
    %2394 = vmatpush1.msra.mxu0 0.0
    %2395 = vmatprep.subr.mxu0 0.0
    %2396 = vmatpush1.msra.mxu0 0.0
    %2397 = vmatprep.subr.mxu0 0.0
    %2398 = vmatpush1.msra.mxu0 0.0
    %2399 = vmatprep.subr.mxu0 0.0
    %2400 = vmatpush1.msra.mxu0 0.0
    %2401 = vmatprep.subr.mxu0 0.0
    %2402 = vmatpush1.msra.mxu0 0.0
    %2403 = vmatprep.subr.mxu0 0.0
    %2404 = vmatpush1.msra.mxu0 0.0
    %2405 = vmatprep.subr.mxu0 0.0
    %2406 = vmatpush1.msra.mxu0 0.0
    %2407 = vmatprep.subr.mxu0 0.0
    %2408 = vmatpush1.msra.mxu0 0.0
    %2409 = vmatprep.subr.mxu0 0.0
    %2410 = vmatpush1.msra.mxu0 0.0
    %2411 = vmatprep.subr.mxu0 0.0
    %2412 = vmatpush1.msra.mxu0 0.0
    %2413 = vmatprep.subr.mxu0 0.0
    %2414 = vmatpush1.msra.mxu0 0.0
    %2415 = vmatprep.subr.mxu0 0.0
    %2416 = vmatpush1.msra.mxu0 0.0
    %2417 = vmatprep.subr.mxu0 0.0
    %2418 = vmatpush1.msra.mxu0 0.0
    %2419 = vmatprep.subr.mxu0 0.0
    %2420 = vmatpush1.msra.mxu0 0.0
    %2421 = vmatprep.subr.mxu0 0.0
    %2422 = vmatpush1.msra.mxu0 0.0
    %2423 = vmatprep.subr.mxu0 0.0
    %2424 = vmatpush1.msra.mxu0 0.0
    %2425 = vmatprep.subr.mxu0 0.0
    %2426 = vmatpush1.msra.mxu0 0.0
    %2427 = vmatprep.subr.mxu0 0.0
    %2428 = vmatpush1.msra.mxu0 0.0
    %2429 = vmatprep.subr.mxu0 0.0
    %2430 = vmatpush1.msra.mxu0 0.0
    %2431 = vmatprep.subr.mxu0 0.0
    %2432 = vmatpush1.msra.mxu0 0.0
    %2433 = vmatprep.subr.mxu0 0.0
    %2434 = vmatpush1.msra.mxu0 0.0
    %2435 = vmatprep.subr.mxu0 0.0
    %2436 = vmatpush1.msra.mxu0 0.0
    %2437 = vmatprep.subr.mxu0 0.0
    %2438 = vmatpush1.msra.mxu0 0.0
    %2439 = vmatprep.subr.mxu0 0.0
    %2440 = vmatpush1.msra.mxu0 0.0
    %2441 = vmatprep.subr.mxu0 0.0
    %2442 = vmatpush1.msra.mxu0 0.0
    %2443 = vmatprep.subr.mxu0 0.0
    %2444 = vmatpush1.msra.mxu0 0.0
    %2445 = vmatprep.subr.mxu0 0.0
    %2446 = vmatpush1.msra.mxu0 0.0
    %2447 = vmatprep.subr.mxu0 0.0
    %2448 = vmatpush1.msra.mxu0 0.0
    %2449 = vmatprep.subr.mxu0 0.0
    %2450 = vmatpush1.msra.mxu0 0.0
    %2451 = vmatprep.subr.mxu0 0.0
    %2452 = vmatpush1.msra.mxu0 0.0
    %2453 = vmatprep.subr.mxu0 0.0
    %2454 = vmatpush1.msra.mxu0 0.0
    %2455 = vmatprep.mubr.f32.mxu0 0.0
    %2456 = vmatmul.mubr.f32.gmra.mrb[0].mxu0 %v2389
    %v2457 = vpop.f32.mrb[0].mxu0
    %v2458 = vadd.f32 0.0, %v2457
    %v2459 = vpop.f32.mrb[0].mxu0
    %2460 = vdwg.mxu0
    %2461 = vrot.lane.b32.xlu0 %v2197, 64
    %v2462 = vpop.permute.xlu0 %2461
    %v2465 = vsel %vm812, %v2384, 0
    %2467 = vmatprep.subr.mxu0 0.0
    %2468 = vmatpush1.msra.mxu0 %v2462
    %2469 = vmatprep.subr.mxu0 0.0
    %2470 = vmatpush1.msra.mxu0 0.0
    %2471 = vmatprep.subr.mxu0 0.0
    %2472 = vmatpush1.msra.mxu0 0.0
    %2473 = vmatprep.subr.mxu0 0.0
    %2474 = vmatpush1.msra.mxu0 0.0
    %2475 = vmatprep.subr.mxu0 0.0
    %2476 = vmatpush1.msra.mxu0 0.0
    %2477 = vmatprep.subr.mxu0 0.0
    %2478 = vmatpush1.msra.mxu0 0.0
    %2479 = vmatprep.subr.mxu0 0.0
    %2480 = vmatpush1.msra.mxu0 0.0
    %2481 = vmatprep.subr.mxu0 0.0
    %2482 = vmatpush1.msra.mxu0 0.0
    %2483 = vmatprep.subr.mxu0 0.0
    %2484 = vmatpush1.msra.mxu0 0.0
    %2485 = vmatprep.subr.mxu0 0.0
    %2486 = vmatpush1.msra.mxu0 0.0
    %2487 = vmatprep.subr.mxu0 0.0
    %2488 = vmatpush1.msra.mxu0 0.0
    %2489 = vmatprep.subr.mxu0 0.0
    %2490 = vmatpush1.msra.mxu0 0.0
    %2491 = vmatprep.subr.mxu0 0.0
    %2492 = vmatpush1.msra.mxu0 0.0
    %2493 = vmatprep.subr.mxu0 0.0
    %2494 = vmatpush1.msra.mxu0 0.0
    %2495 = vmatprep.subr.mxu0 0.0
    %2496 = vmatpush1.msra.mxu0 0.0
    %2497 = vmatprep.subr.mxu0 0.0
    %2498 = vmatpush1.msra.mxu0 0.0
    %2499 = vmatprep.subr.mxu0 0.0
    %2500 = vmatpush1.msra.mxu0 0.0
    %2501 = vmatprep.subr.mxu0 0.0
    %2502 = vmatpush1.msra.mxu0 0.0
    %2503 = vmatprep.subr.mxu0 0.0
    %2504 = vmatpush1.msra.mxu0 0.0
    %2505 = vmatprep.subr.mxu0 0.0
    %2506 = vmatpush1.msra.mxu0 0.0
    %2507 = vmatprep.subr.mxu0 0.0
    %2508 = vmatpush1.msra.mxu0 0.0
    %2509 = vmatprep.subr.mxu0 0.0
    %2510 = vmatpush1.msra.mxu0 0.0
    %2511 = vmatprep.subr.mxu0 0.0
    %2512 = vmatpush1.msra.mxu0 0.0
    %2513 = vmatprep.subr.mxu0 0.0
    %2514 = vmatpush1.msra.mxu0 0.0
    %2515 = vmatprep.subr.mxu0 0.0
    %2516 = vmatpush1.msra.mxu0 0.0
    %2517 = vmatprep.subr.mxu0 0.0
    %2518 = vmatpush1.msra.mxu0 0.0
    %2519 = vmatprep.subr.mxu0 0.0
    %2520 = vmatpush1.msra.mxu0 0.0
    %2521 = vmatprep.subr.mxu0 0.0
    %2522 = vmatpush1.msra.mxu0 0.0
    %2523 = vmatprep.subr.mxu0 0.0
    %2524 = vmatpush1.msra.mxu0 0.0
    %2525 = vmatprep.subr.mxu0 0.0
    %2526 = vmatpush1.msra.mxu0 0.0
    %2527 = vmatprep.subr.mxu0 0.0
    %2528 = vmatpush1.msra.mxu0 0.0
    %2529 = vmatprep.subr.mxu0 0.0
    %2530 = vmatpush1.msra.mxu0 0.0
    %2531 = vmatprep.mubr.f32.mxu0 0.0
    %2532 = vmatmul.mubr.f32.gmra.mrb[0].mxu0 %v2465
    %v2533 = vpop.f32.mrb[0].mxu0
    %v2534 = vadd.f32 0.0, %v2533
    %v2535 = vpop.f32.mrb[0].mxu0
    %2536 = vdwg.mxu0
    %2537 = vrot.lane.b32.xlu0 %v2192, 112
    %v2538 = vpop.permute.xlu0 %2537
    %2539 = vrot.lane.b32.xlu0 %v2192, 80
    %v2540 = vpop.permute.xlu0 %2539
    %v2541 = vsel %vm646, %v2538, 0
    %v2543 = vsel %vm646, %v2540, 0
    %2545 = vmatprep.subr.mxu0 0.0
    %2546 = vmatpush1.xpose.msra.mxu0 %v2543
    %2547 = vmatprep.subr.mxu0 0.0
    %2548 = vmatpush1.xpose.msra.mxu0 0.0
    %2549 = vmatprep.subr.mxu0 0.0
    %2550 = vmatpush1.xpose.msra.mxu0 0.0
    %2551 = vmatprep.subr.mxu0 0.0
    %2552 = vmatpush1.xpose.msra.mxu0 0.0
    %2553 = vmatprep.subr.mxu0 0.0
    %2554 = vmatpush1.xpose.msra.mxu0 0.0
    %2555 = vmatprep.subr.mxu0 0.0
    %2556 = vmatpush1.xpose.msra.mxu0 0.0
    %2557 = vmatprep.subr.mxu0 0.0
    %2558 = vmatpush1.xpose.msra.mxu0 0.0
    %2559 = vmatprep.subr.mxu0 0.0
    %2560 = vmatpush1.xpose.msra.mxu0 0.0
    %2561 = vmatprep.subr.mxu0 0.0
    %2562 = vmatpush1.xpose.msra.mxu0 0.0
    %2563 = vmatprep.subr.mxu0 0.0
    %2564 = vmatpush1.xpose.msra.mxu0 0.0
    %2565 = vmatprep.subr.mxu0 0.0
    %2566 = vmatpush1.xpose.msra.mxu0 0.0
    %2567 = vmatprep.subr.mxu0 0.0
    %2568 = vmatpush1.xpose.msra.mxu0 0.0
    %2569 = vmatprep.subr.mxu0 0.0
    %2570 = vmatpush1.xpose.msra.mxu0 0.0
    %2571 = vmatprep.subr.mxu0 0.0
    %2572 = vmatpush1.xpose.msra.mxu0 0.0
    %2573 = vmatprep.subr.mxu0 0.0
    %2574 = vmatpush1.xpose.msra.mxu0 0.0
    %2575 = vmatprep.subr.mxu0 0.0
    %2576 = vmatpush1.xpose.msra.mxu0 0.0
    %2577 = vmatprep.subr.mxu0 0.0
    %2578 = vmatpush1.xpose.msra.mxu0 0.0
    %2579 = vmatprep.subr.mxu0 0.0
    %2580 = vmatpush1.xpose.msra.mxu0 0.0
    %2581 = vmatprep.subr.mxu0 0.0
    %2582 = vmatpush1.xpose.msra.mxu0 0.0
    %2583 = vmatprep.subr.mxu0 0.0
    %2584 = vmatpush1.xpose.msra.mxu0 0.0
    %2585 = vmatprep.subr.mxu0 0.0
    %2586 = vmatpush1.xpose.msra.mxu0 0.0
    %2587 = vmatprep.subr.mxu0 0.0
    %2588 = vmatpush1.xpose.msra.mxu0 0.0
    %2589 = vmatprep.subr.mxu0 0.0
    %2590 = vmatpush1.xpose.msra.mxu0 0.0
    %2591 = vmatprep.subr.mxu0 0.0
    %2592 = vmatpush1.xpose.msra.mxu0 0.0
    %2593 = vmatprep.subr.mxu0 0.0
    %2594 = vmatpush1.xpose.msra.mxu0 0.0
    %2595 = vmatprep.subr.mxu0 0.0
    %2596 = vmatpush1.xpose.msra.mxu0 0.0
    %2597 = vmatprep.subr.mxu0 0.0
    %2598 = vmatpush1.xpose.msra.mxu0 0.0
    %2599 = vmatprep.subr.mxu0 0.0
    %2600 = vmatpush1.xpose.msra.mxu0 0.0
    %2601 = vmatprep.subr.mxu0 0.0
    %2602 = vmatpush1.xpose.msra.mxu0 0.0
    %2603 = vmatprep.subr.mxu0 0.0
    %2604 = vmatpush1.xpose.msra.mxu0 0.0
    %2605 = vmatprep.subr.mxu0 0.0
    %2606 = vmatpush1.xpose.msra.mxu0 0.0
    %2607 = vmatprep.subr.mxu0 0.0
    %2608 = vmatpush1.xpose.msra.mxu0 0.0
    %2609 = vmatprep.mubr.f32.mxu0 0.0
    %2610 = vmatmul.mubr.f32.gmra.mrb[0].mxu0 %v2541
    %v2611 = vpop.f32.mrb[0].mxu0
    %v2612 = vadd.f32 0.0, %v2611
    %v2613 = vpop.f32.mrb[0].mxu0
    %2614 = vdwg.mxu0
    %2615 = vrot.lane.b32.xlu0 %v2197, 112
    %v2616 = vpop.permute.xlu0 %2615
    %2617 = vrot.lane.b32.xlu0 %v2197, 80
    %v2618 = vpop.permute.xlu0 %2617
    %v2619 = vsel %vm646, %v2616, 0
    %v2621 = vsel %vm646, %v2618, 0
    %2623 = vmatprep.subr.mxu0 0.0
    %2624 = vmatpush1.xpose.msra.mxu0 %v2621
    %2625 = vmatprep.subr.mxu0 0.0
    %2626 = vmatpush1.xpose.msra.mxu0 0.0
    %2627 = vmatprep.subr.mxu0 0.0
    %2628 = vmatpush1.xpose.msra.mxu0 0.0
    %2629 = vmatprep.subr.mxu0 0.0
    %2630 = vmatpush1.xpose.msra.mxu0 0.0
    %2631 = vmatprep.subr.mxu0 0.0
    %2632 = vmatpush1.xpose.msra.mxu0 0.0
    %2633 = vmatprep.subr.mxu0 0.0
    %2634 = vmatpush1.xpose.msra.mxu0 0.0
    %2635 = vmatprep.subr.mxu0 0.0
    %2636 = vmatpush1.xpose.msra.mxu0 0.0
    %2637 = vmatprep.subr.mxu0 0.0
    %2638 = vmatpush1.xpose.msra.mxu0 0.0
    %2639 = vmatprep.subr.mxu0 0.0
    %2640 = vmatpush1.xpose.msra.mxu0 0.0
    %2641 = vmatprep.subr.mxu0 0.0
    %2642 = vmatpush1.xpose.msra.mxu0 0.0
    %2643 = vmatprep.subr.mxu0 0.0
    %2644 = vmatpush1.xpose.msra.mxu0 0.0
    %2645 = vmatprep.subr.mxu0 0.0
    %2646 = vmatpush1.xpose.msra.mxu0 0.0
    %2647 = vmatprep.subr.mxu0 0.0
    %2648 = vmatpush1.xpose.msra.mxu0 0.0
    %2649 = vmatprep.subr.mxu0 0.0
    %2650 = vmatpush1.xpose.msra.mxu0 0.0
    %2651 = vmatprep.subr.mxu0 0.0
    %2652 = vmatpush1.xpose.msra.mxu0 0.0
    %2653 = vmatprep.subr.mxu0 0.0
    %2654 = vmatpush1.xpose.msra.mxu0 0.0
    %2655 = vmatprep.subr.mxu0 0.0
    %2656 = vmatpush1.xpose.msra.mxu0 0.0
    %2657 = vmatprep.subr.mxu0 0.0
    %2658 = vmatpush1.xpose.msra.mxu0 0.0
    %2659 = vmatprep.subr.mxu0 0.0
    %2660 = vmatpush1.xpose.msra.mxu0 0.0
    %2661 = vmatprep.subr.mxu0 0.0
    %2662 = vmatpush1.xpose.msra.mxu0 0.0
    %2663 = vmatprep.subr.mxu0 0.0
    %2664 = vmatpush1.xpose.msra.mxu0 0.0
    %2665 = vmatprep.subr.mxu0 0.0
    %2666 = vmatpush1.xpose.msra.mxu0 0.0
    %2667 = vmatprep.subr.mxu0 0.0
    %2668 = vmatpush1.xpose.msra.mxu0 0.0
    %2669 = vmatprep.subr.mxu0 0.0
    %2670 = vmatpush1.xpose.msra.mxu0 0.0
    %2671 = vmatprep.subr.mxu0 0.0
    %2672 = vmatpush1.xpose.msra.mxu0 0.0
    %2673 = vmatprep.subr.mxu0 0.0
    %2674 = vmatpush1.xpose.msra.mxu0 0.0
    %2675 = vmatprep.subr.mxu0 0.0
    %2676 = vmatpush1.xpose.msra.mxu0 0.0
    %2677 = vmatprep.subr.mxu0 0.0
    %2678 = vmatpush1.xpose.msra.mxu0 0.0
    %2679 = vmatprep.subr.mxu0 0.0
    %2680 = vmatpush1.xpose.msra.mxu0 0.0
    %2681 = vmatprep.subr.mxu0 0.0
    %2682 = vmatpush1.xpose.msra.mxu0 0.0
    %2683 = vmatprep.subr.mxu0 0.0
    %2684 = vmatpush1.xpose.msra.mxu0 0.0
    %2685 = vmatprep.subr.mxu0 0.0
    %2686 = vmatpush1.xpose.msra.mxu0 0.0
    %2687 = vmatprep.mubr.f32.mxu0 0.0
    %2688 = vmatmul.mubr.f32.gmra.mrb[0].mxu0 %v2619
    %v2689 = vpop.f32.mrb[0].mxu0
    %v2690 = vadd.f32 0.0, %v2689
    %v2691 = vpop.f32.mrb[0].mxu0
    %2692 = vdwg.mxu0
    %v2693 = vmul.f32 %v2612, 0.25
    %v2694 = vmul.f32 %v2690, 0.25
    %v2695 = vadd.f32 %v2693, %v803
    %v2696 = vadd.f32 %v2694, %v807
    %v2697 = vsel %vm812, %v2695, -inf
    %2698 = vmax.xlane.f32.xlu0 %v2697
    %v2699 = vpop.xlane.xlu0 %2698
    %v2700 = vsel %vm812, %v2696, -inf
    %2701 = vmax.xlane.f32.xlu0 %v2700
    %v2702 = vpop.xlane.xlu0 %2701
    %v2703 = vsub.f32 %v2695, %v2699
    %v2704 = vsub.f32 %v2696, %v2702
    %v2705 = vmul.f32 %v2703, 1.442695
    %v2706 = vpow.pop %v2705
    %v2707 = vmul.f32 %v2704, 1.442695
    %v2708 = vpow.pop %v2707
    %v2709 = vsel %vm812, %v2706, 0.0
    %2710 = vadd.xlane.f32.xlu0 %v2709
    %v2711 = vpop.xlane.xlu0 %2710
    %v2712 = vsel %vm812, %v2708, 0.0
    %2713 = vadd.xlane.f32.xlu0 %v2712
    %v2714 = vpop.xlane.xlu0 %2713
    %v2715 = vrcp.pop %v2711
    %v2716 = vmul.f32 %v2706, %v2715
    %v2717 = vrcp.pop %v2714
    %v2718 = vmul.f32 %v2708, %v2717
    %2719 = vrot.lane.b32.xlu0 %v2192, 48
    %v2720 = vpop.permute.xlu0 %2719
    %v2723 = vsel %vm812, %v2716, 0
    %2725 = vmatprep.subr.mxu0 0.0
    %2726 = vmatpush1.msra.mxu0 %v2720
    %2727 = vmatprep.subr.mxu0 0.0
    %2728 = vmatpush1.msra.mxu0 0.0
    %2729 = vmatprep.subr.mxu0 0.0
    %2730 = vmatpush1.msra.mxu0 0.0
    %2731 = vmatprep.subr.mxu0 0.0
    %2732 = vmatpush1.msra.mxu0 0.0
    %2733 = vmatprep.subr.mxu0 0.0
    %2734 = vmatpush1.msra.mxu0 0.0
    %2735 = vmatprep.subr.mxu0 0.0
    %2736 = vmatpush1.msra.mxu0 0.0
    %2737 = vmatprep.subr.mxu0 0.0
    %2738 = vmatpush1.msra.mxu0 0.0
    %2739 = vmatprep.subr.mxu0 0.0
    %2740 = vmatpush1.msra.mxu0 0.0
    %2741 = vmatprep.subr.mxu0 0.0
    %2742 = vmatpush1.msra.mxu0 0.0
    %2743 = vmatprep.subr.mxu0 0.0
    %2744 = vmatpush1.msra.mxu0 0.0
    %2745 = vmatprep.subr.mxu0 0.0
    %2746 = vmatpush1.msra.mxu0 0.0
    %2747 = vmatprep.subr.mxu0 0.0
    %2748 = vmatpush1.msra.mxu0 0.0
    %2749 = vmatprep.subr.mxu0 0.0
    %2750 = vmatpush1.msra.mxu0 0.0
    %2751 = vmatprep.subr.mxu0 0.0
    %2752 = vmatpush1.msra.mxu0 0.0
    %2753 = vmatprep.subr.mxu0 0.0
    %2754 = vmatpush1.msra.mxu0 0.0
    %2755 = vmatprep.subr.mxu0 0.0
    %2756 = vmatpush1.msra.mxu0 0.0
    %2757 = vmatprep.subr.mxu0 0.0
    %2758 = vmatpush1.msra.mxu0 0.0
    %2759 = vmatprep.subr.mxu0 0.0
    %2760 = vmatpush1.msra.mxu0 0.0
    %2761 = vmatprep.subr.mxu0 0.0
    %2762 = vmatpush1.msra.mxu0 0.0
    %2763 = vmatprep.subr.mxu0 0.0
    %2764 = vmatpush1.msra.mxu0 0.0
    %2765 = vmatprep.subr.mxu0 0.0
    %2766 = vmatpush1.msra.mxu0 0.0
    %2767 = vmatprep.subr.mxu0 0.0
    %2768 = vmatpush1.msra.mxu0 0.0
    %2769 = vmatprep.subr.mxu0 0.0
    %2770 = vmatpush1.msra.mxu0 0.0
    %2771 = vmatprep.subr.mxu0 0.0
    %2772 = vmatpush1.msra.mxu0 0.0
    %2773 = vmatprep.subr.mxu0 0.0
    %2774 = vmatpush1.msra.mxu0 0.0
    %2775 = vmatprep.subr.mxu0 0.0
    %2776 = vmatpush1.msra.mxu0 0.0
    %2777 = vmatprep.subr.mxu0 0.0
    %2778 = vmatpush1.msra.mxu0 0.0
    %2779 = vmatprep.subr.mxu0 0.0
    %2780 = vmatpush1.msra.mxu0 0.0
    %2781 = vmatprep.subr.mxu0 0.0
    %2782 = vmatpush1.msra.mxu0 0.0
    %2783 = vmatprep.subr.mxu0 0.0
    %2784 = vmatpush1.msra.mxu0 0.0
    %2785 = vmatprep.subr.mxu0 0.0
    %2786 = vmatpush1.msra.mxu0 0.0
    %2787 = vmatprep.subr.mxu0 0.0
    %2788 = vmatpush1.msra.mxu0 0.0
    %2789 = vmatprep.mubr.f32.mxu0 0.0
    %2790 = vmatmul.mubr.f32.gmra.mrb[0].mxu0 %v2723
    %v2791 = vpop.f32.mrb[0].mxu0
    %v2792 = vadd.f32 0.0, %v2791
    %v2793 = vpop.f32.mrb[0].mxu0
    %2794 = vdwg.mxu0
    %2795 = vrot.lane.b32.xlu0 %v2197, 48
    %v2796 = vpop.permute.xlu0 %2795
    %v2799 = vsel %vm812, %v2718, 0
    %2801 = vmatprep.subr.mxu0 0.0
    %2802 = vmatpush1.msra.mxu0 %v2796
    %2803 = vmatprep.subr.mxu0 0.0
    %2804 = vmatpush1.msra.mxu0 0.0
    %2805 = vmatprep.subr.mxu0 0.0
    %2806 = vmatpush1.msra.mxu0 0.0
    %2807 = vmatprep.subr.mxu0 0.0
    %2808 = vmatpush1.msra.mxu0 0.0
    %2809 = vmatprep.subr.mxu0 0.0
    %2810 = vmatpush1.msra.mxu0 0.0
    %2811 = vmatprep.subr.mxu0 0.0
    %2812 = vmatpush1.msra.mxu0 0.0
    %2813 = vmatprep.subr.mxu0 0.0
    %2814 = vmatpush1.msra.mxu0 0.0
    %2815 = vmatprep.subr.mxu0 0.0
    %2816 = vmatpush1.msra.mxu0 0.0
    %2817 = vmatprep.subr.mxu0 0.0
    %2818 = vmatpush1.msra.mxu0 0.0
    %2819 = vmatprep.subr.mxu0 0.0
    %2820 = vmatpush1.msra.mxu0 0.0
    %2821 = vmatprep.subr.mxu0 0.0
    %2822 = vmatpush1.msra.mxu0 0.0
    %2823 = vmatprep.subr.mxu0 0.0
    %2824 = vmatpush1.msra.mxu0 0.0
    %2825 = vmatprep.subr.mxu0 0.0
    %2826 = vmatpush1.msra.mxu0 0.0
    %2827 = vmatprep.subr.mxu0 0.0
    %2828 = vmatpush1.msra.mxu0 0.0
    %2829 = vmatprep.subr.mxu0 0.0
    %2830 = vmatpush1.msra.mxu0 0.0
    %2831 = vmatprep.subr.mxu0 0.0
    %2832 = vmatpush1.msra.mxu0 0.0
    %2833 = vmatprep.subr.mxu0 0.0
    %2834 = vmatpush1.msra.mxu0 0.0
    %2835 = vmatprep.subr.mxu0 0.0
    %2836 = vmatpush1.msra.mxu0 0.0
    %2837 = vmatprep.subr.mxu0 0.0
    %2838 = vmatpush1.msra.mxu0 0.0
    %2839 = vmatprep.subr.mxu0 0.0
    %2840 = vmatpush1.msra.mxu0 0.0
    %2841 = vmatprep.subr.mxu0 0.0
    %2842 = vmatpush1.msra.mxu0 0.0
    %2843 = vmatprep.subr.mxu0 0.0
    %2844 = vmatpush1.msra.mxu0 0.0
    %2845 = vmatprep.subr.mxu0 0.0
    %2846 = vmatpush1.msra.mxu0 0.0
    %2847 = vmatprep.subr.mxu0 0.0
    %2848 = vmatpush1.msra.mxu0 0.0
    %2849 = vmatprep.subr.mxu0 0.0
    %2850 = vmatpush1.msra.mxu0 0.0
    %2851 = vmatprep.subr.mxu0 0.0
    %2852 = vmatpush1.msra.mxu0 0.0
    %2853 = vmatprep.subr.mxu0 0.0
    %2854 = vmatpush1.msra.mxu0 0.0
    %2855 = vmatprep.subr.mxu0 0.0
    %2856 = vmatpush1.msra.mxu0 0.0
    %2857 = vmatprep.subr.mxu0 0.0
    %2858 = vmatpush1.msra.mxu0 0.0
    %2859 = vmatprep.subr.mxu0 0.0
    %2860 = vmatpush1.msra.mxu0 0.0
    %2861 = vmatprep.subr.mxu0 0.0
    %2862 = vmatpush1.msra.mxu0 0.0
    %2863 = vmatprep.subr.mxu0 0.0
    %2864 = vmatpush1.msra.mxu0 0.0
    %2865 = vmatprep.mubr.f32.mxu0 0.0
    %2866 = vmatmul.mubr.f32.gmra.mrb[0].mxu0 %v2799
    %v2867 = vpop.f32.mrb[0].mxu0
    %v2868 = vadd.f32 0.0, %v2867
    %v2869 = vpop.f32.mrb[0].mxu0
    %2870 = vdwg.mxu0
    %v2872 = vsel %vm646, %v2792, 0
    %v2875 = vsel %vm646, %v2868, 0
    %2877 = vmatprep.subr.mxu0 0.0
    %2878 = vmatpush1.msra.mxu0 %v2203
    %2879 = vmatprep.subr.mxu0 0.0
    %2880 = vmatpush1.msra.mxu0 %v2204
    %2881 = vmatprep.subr.mxu0 0.0
    %2882 = vmatpush1.msra.mxu0 0.0
    %2883 = vmatprep.subr.mxu0 0.0
    %2884 = vmatpush1.msra.mxu0 0.0
    %2885 = vmatprep.subr.mxu0 0.0
    %2886 = vmatpush1.msra.mxu0 0.0
    %2887 = vmatprep.subr.mxu0 0.0
    %2888 = vmatpush1.msra.mxu0 0.0
    %2889 = vmatprep.subr.mxu0 0.0
    %2890 = vmatpush1.msra.mxu0 0.0
    %2891 = vmatprep.subr.mxu0 0.0
    %2892 = vmatpush1.msra.mxu0 0.0
    %2893 = vmatprep.subr.mxu0 0.0
    %2894 = vmatpush1.msra.mxu0 0.0
    %2895 = vmatprep.subr.mxu0 0.0
    %2896 = vmatpush1.msra.mxu0 0.0
    %2897 = vmatprep.subr.mxu0 0.0
    %2898 = vmatpush1.msra.mxu0 0.0
    %2899 = vmatprep.subr.mxu0 0.0
    %2900 = vmatpush1.msra.mxu0 0.0
    %2901 = vmatprep.subr.mxu0 0.0
    %2902 = vmatpush1.msra.mxu0 0.0
    %2903 = vmatprep.subr.mxu0 0.0
    %2904 = vmatpush1.msra.mxu0 0.0
    %2905 = vmatprep.subr.mxu0 0.0
    %2906 = vmatpush1.msra.mxu0 0.0
    %2907 = vmatprep.subr.mxu0 0.0
    %2908 = vmatpush1.msra.mxu0 0.0
    %2909 = vmatprep.subr.mxu0 0.0
    %2910 = vmatpush1.msra.mxu0 0.0
    %2911 = vmatprep.subr.mxu0 0.0
    %2912 = vmatpush1.msra.mxu0 0.0
    %2913 = vmatprep.subr.mxu0 0.0
    %2914 = vmatpush1.msra.mxu0 0.0
    %2915 = vmatprep.subr.mxu0 0.0
    %2916 = vmatpush1.msra.mxu0 0.0
    %2917 = vmatprep.subr.mxu0 0.0
    %2918 = vmatpush1.msra.mxu0 0.0
    %2919 = vmatprep.subr.mxu0 0.0
    %2920 = vmatpush1.msra.mxu0 0.0
    %2921 = vmatprep.subr.mxu0 0.0
    %2922 = vmatpush1.msra.mxu0 0.0
    %2923 = vmatprep.subr.mxu0 0.0
    %2924 = vmatpush1.msra.mxu0 0.0
    %2925 = vmatprep.subr.mxu0 0.0
    %2926 = vmatpush1.msra.mxu0 0.0
    %2927 = vmatprep.subr.mxu0 0.0
    %2928 = vmatpush1.msra.mxu0 0.0
    %2929 = vmatprep.subr.mxu0 0.0
    %2930 = vmatpush1.msra.mxu0 0.0
    %2931 = vmatprep.subr.mxu0 0.0
    %2932 = vmatpush1.msra.mxu0 0.0
    %2933 = vmatprep.subr.mxu0 0.0
    %2934 = vmatpush1.msra.mxu0 0.0
    %2935 = vmatprep.subr.mxu0 0.0
    %2936 = vmatpush1.msra.mxu0 0.0
    %2937 = vmatprep.subr.mxu0 0.0
    %2938 = vmatpush1.msra.mxu0 0.0
    %2939 = vmatprep.subr.mxu0 0.0
    %2940 = vmatpush1.msra.mxu0 0.0
    %2941 = vmatprep.mubr.f32.mxu0 0.0
    %2942 = vmatmul.mubr.f32.gmra.mrb[0].mxu0 %v2872
    %v2943 = vpop.f32.mrb[0].mxu0
    %v2944 = vadd.f32 0.0, %v2943
    %v2945 = vpop.f32.mrb[0].mxu0
    %2946 = vmatprep.mubr.f32.mxu0 0.0
    %2947 = vmatmul.mubr.f32.gmra.mrb[0].mxu0 %v2875
    %v2948 = vpop.f32.mrb[0].mxu0
    %v2949 = vadd.f32 0.0, %v2948
    %v2950 = vpop.f32.mrb[0].mxu0
    %2951 = vdwg.mxu0
    %v2953 = vsel %vm646, %v2458, 0
    %v2956 = vsel %vm646, %v2534, 0
    %2958 = vmatprep.subr.mxu0 0.0
    %2959 = vmatpush1.msra.mxu0 %v2201
    %2960 = vmatprep.subr.mxu0 0.0
    %2961 = vmatpush1.msra.mxu0 %v2202
    %2962 = vmatprep.subr.mxu0 0.0
    %2963 = vmatpush1.msra.mxu0 0.0
    %2964 = vmatprep.subr.mxu0 0.0
    %2965 = vmatpush1.msra.mxu0 0.0
    %2966 = vmatprep.subr.mxu0 0.0
    %2967 = vmatpush1.msra.mxu0 0.0
    %2968 = vmatprep.subr.mxu0 0.0
    %2969 = vmatpush1.msra.mxu0 0.0
    %2970 = vmatprep.subr.mxu0 0.0
    %2971 = vmatpush1.msra.mxu0 0.0
    %2972 = vmatprep.subr.mxu0 0.0
    %2973 = vmatpush1.msra.mxu0 0.0
    %2974 = vmatprep.subr.mxu0 0.0
    %2975 = vmatpush1.msra.mxu0 0.0
    %2976 = vmatprep.subr.mxu0 0.0
    %2977 = vmatpush1.msra.mxu0 0.0
    %2978 = vmatprep.subr.mxu0 0.0
    %2979 = vmatpush1.msra.mxu0 0.0
    %2980 = vmatprep.subr.mxu0 0.0
    %2981 = vmatpush1.msra.mxu0 0.0
    %2982 = vmatprep.subr.mxu0 0.0
    %2983 = vmatpush1.msra.mxu0 0.0
    %2984 = vmatprep.subr.mxu0 0.0
    %2985 = vmatpush1.msra.mxu0 0.0
    %2986 = vmatprep.subr.mxu0 0.0
    %2987 = vmatpush1.msra.mxu0 0.0
    %2988 = vmatprep.subr.mxu0 0.0
    %2989 = vmatpush1.msra.mxu0 0.0
    %2990 = vmatprep.subr.mxu0 0.0
    %2991 = vmatpush1.msra.mxu0 0.0
    %2992 = vmatprep.subr.mxu0 0.0
    %2993 = vmatpush1.msra.mxu0 0.0
    %2994 = vmatprep.subr.mxu0 0.0
    %2995 = vmatpush1.msra.mxu0 0.0
    %2996 = vmatprep.subr.mxu0 0.0
    %2997 = vmatpush1.msra.mxu0 0.0
    %2998 = vmatprep.subr.mxu0 0.0
    %2999 = vmatpush1.msra.mxu0 0.0
    %3000 = vmatprep.subr.mxu0 0.0
    %3001 = vmatpush1.msra.mxu0 0.0
    %3002 = vmatprep.subr.mxu0 0.0
    %3003 = vmatpush1.msra.mxu0 0.0
    %3004 = vmatprep.subr.mxu0 0.0
    %3005 = vmatpush1.msra.mxu0 0.0
    %3006 = vmatprep.subr.mxu0 0.0
    %3007 = vmatpush1.msra.mxu0 0.0
    %3008 = vmatprep.subr.mxu0 0.0
    %3009 = vmatpush1.msra.mxu0 0.0
    %3010 = vmatprep.subr.mxu0 0.0
    %3011 = vmatpush1.msra.mxu0 0.0
    %3012 = vmatprep.subr.mxu0 0.0
    %3013 = vmatpush1.msra.mxu0 0.0
    %3014 = vmatprep.subr.mxu0 0.0
    %3015 = vmatpush1.msra.mxu0 0.0
    %3016 = vmatprep.subr.mxu0 0.0
    %3017 = vmatpush1.msra.mxu0 0.0
    %3018 = vmatprep.subr.mxu0 0.0
    %3019 = vmatpush1.msra.mxu0 0.0
    %3020 = vmatprep.subr.mxu0 0.0
    %3021 = vmatpush1.msra.mxu0 0.0
    %3022 = vmatprep.mubr.f32.mxu0 0.0
    %3023 = vmatmul.mubr.f32.gmra.mrb[0].mxu0 %v2953
    %v3024 = vpop.f32.mrb[0].mxu0
    %v3025 = vadd.f32 %v2944, %v3024
    %v3026 = vpop.f32.mrb[0].mxu0
    %3027 = vmatprep.mubr.f32.mxu0 0.0
    %3028 = vmatmul.mubr.f32.gmra.mrb[0].mxu0 %v2956
    %v3029 = vpop.f32.mrb[0].mxu0
    %v3030 = vadd.f32 %v2949, %v3029
    %v3031 = vpop.f32.mrb[0].mxu0
    %3032 = vdwg.mxu0
    %s3033 = scalar_lea.vmem %s29, 1
    %v3034 = vld [vmem:[%s3033] sm:$0x1]
    %v3036 = vlaneseq
    %v3037 = vshrl.u32 %v3036, 7
    %v3038 = vsub.s32 0, %v3037
    %v3039 = vrot.slane %v3034, %v3038
    %v3041 = vadd.f32 %v3025, %v3039
    %v3042 = vadd.f32 %v3030, %v3039
    %v3043 = vadd.f32 %v2104, %v3041
    %v3044 = vadd.f32 %v2105, %v3042
    %s3045 = scalar_lea.vmem %s31, 1
    %v3046 = vld [vmem:[%s3045] sm:$0x1]
    %s3047 = scalar_lea.vmem %s33, 1
    %v3048 = vld [vmem:[%s3047] sm:$0x1]
    %v3049 = vsel %vm477, %v3043, 0.0
    %3050 = vadd.xlane.f32.xlu0 %v3049
    %v3051 = vpop.xlane.xlu0 %3050
    %v3052 = vsel %vm477, %v3044, 0.0
    %3053 = vadd.xlane.f32.xlu0 %v3052
    %v3054 = vpop.xlane.xlu0 %3053
    %v3055 = vmul.f32 %v3051, %v484
    %v3056 = vmul.f32 %v3054, %v484
    %v3057 = vsub.f32 %v3043, %v3055
    %v3058 = vsub.f32 %v3044, %v3056
    %v3059 = vmul.f32 %v3057, %v3057
    %v3060 = vmul.f32 %v3058, %v3058
    %v3061 = vsel %vm477, %v3059, 0.0
    %3062 = vadd.xlane.f32.xlu0 %v3061
    %v3063 = vpop.xlane.xlu0 %3062
    %v3064 = vsel %vm477, %v3060, 0.0
    %3065 = vadd.xlane.f32.xlu0 %v3064
    %v3066 = vpop.xlane.xlu0 %3065
    %v3067 = vmul.f32 %v3063, %v484
    %v3068 = vmul.f32 %v3066, %v484
    %v3069 = vadd.f32 %v3067, 1e-12
    %v3070 = vadd.f32 %v3068, 1e-12
    %v3071 = vrsqrt.pop %v3069
    %v3072 = vrsqrt.pop %v3070
    %v3073 = vmul.f32 %v3057, %v3071
    %v3074 = vmul.f32 %v3058, %v3072
    %v3076 = vlaneseq
    %v3077 = vshrl.u32 %v3076, 7
    %v3078 = vsub.s32 0, %v3077
    %v3079 = vrot.slane %v3046, %v3078
    %v3081 = vmul.f32 %v3073, %v3079
    %v3082 = vmul.f32 %v3074, %v3079
    %v3084 = vlaneseq
    %v3085 = vshrl.u32 %v3084, 7
    %v3086 = vsub.s32 0, %v3085
    %v3087 = vrot.slane %v3048, %v3086
    %v3089 = vadd.f32 %v3081, %v3087
    %v3090 = vadd.f32 %v3082, %v3087
    %s3091 = scalar_lea.vmem %s35, 32
    %v3092 = vld [vmem:[%s3091] sm:$0xff]
    %v3093 = vld [vmem:[%s3091 + $0x8] sm:$0xff]
    %v3094 = vld [vmem:[%s3091 + $0x10] sm:$0xff]
    %v3095 = vld [vmem:[%s3091 + $0x18] sm:$0xff]
    %s3096 = scalar_lea.vmem %s37, 1
    %v3097 = vld [vmem:[%s3096] sm:$0x1]
    %v3099 = vlaneseq
    %v3100 = vshrl.u32 %v3099, 7
    %v3101 = vsub.s32 0, %v3100
    %v3102 = vrot.slane %v3097, %v3101
    %v3105 = vsel %vm477, %v3089, 0
    %v3108 = vsel %vm477, %v3090, 0
    %3110 = vmatprep.subr.mxu0 0.0
    %3111 = vmatpush1.msra.mxu0 %v3092
    %3112 = vmatprep.subr.mxu0 0.0
    %3113 = vmatpush1.msra.mxu0 %v3093
    %3114 = vmatprep.subr.mxu0 0.0
    %3115 = vmatpush1.msra.mxu0 %v3094
    %3116 = vmatprep.subr.mxu0 0.0
    %3117 = vmatpush1.msra.mxu0 %v3095
    %3118 = vmatprep.subr.mxu0 0.0
    %3119 = vmatpush1.msra.mxu0 0.0
    %3120 = vmatprep.subr.mxu0 0.0
    %3121 = vmatpush1.msra.mxu0 0.0
    %3122 = vmatprep.subr.mxu0 0.0
    %3123 = vmatpush1.msra.mxu0 0.0
    %3124 = vmatprep.subr.mxu0 0.0
    %3125 = vmatpush1.msra.mxu0 0.0
    %3126 = vmatprep.subr.mxu0 0.0
    %3127 = vmatpush1.msra.mxu0 0.0
    %3128 = vmatprep.subr.mxu0 0.0
    %3129 = vmatpush1.msra.mxu0 0.0
    %3130 = vmatprep.subr.mxu0 0.0
    %3131 = vmatpush1.msra.mxu0 0.0
    %3132 = vmatprep.subr.mxu0 0.0
    %3133 = vmatpush1.msra.mxu0 0.0
    %3134 = vmatprep.subr.mxu0 0.0
    %3135 = vmatpush1.msra.mxu0 0.0
    %3136 = vmatprep.subr.mxu0 0.0
    %3137 = vmatpush1.msra.mxu0 0.0
    %3138 = vmatprep.subr.mxu0 0.0
    %3139 = vmatpush1.msra.mxu0 0.0
    %3140 = vmatprep.subr.mxu0 0.0
    %3141 = vmatpush1.msra.mxu0 0.0
    %3142 = vmatprep.subr.mxu0 0.0
    %3143 = vmatpush1.msra.mxu0 0.0
    %3144 = vmatprep.subr.mxu0 0.0
    %3145 = vmatpush1.msra.mxu0 0.0
    %3146 = vmatprep.subr.mxu0 0.0
    %3147 = vmatpush1.msra.mxu0 0.0
    %3148 = vmatprep.subr.mxu0 0.0
    %3149 = vmatpush1.msra.mxu0 0.0
    %3150 = vmatprep.subr.mxu0 0.0
    %3151 = vmatpush1.msra.mxu0 0.0
    %3152 = vmatprep.subr.mxu0 0.0
    %3153 = vmatpush1.msra.mxu0 0.0
    %3154 = vmatprep.subr.mxu0 0.0
    %3155 = vmatpush1.msra.mxu0 0.0
    %3156 = vmatprep.subr.mxu0 0.0
    %3157 = vmatpush1.msra.mxu0 0.0
    %3158 = vmatprep.subr.mxu0 0.0
    %3159 = vmatpush1.msra.mxu0 0.0
    %3160 = vmatprep.subr.mxu0 0.0
    %3161 = vmatpush1.msra.mxu0 0.0
    %3162 = vmatprep.subr.mxu0 0.0
    %3163 = vmatpush1.msra.mxu0 0.0
    %3164 = vmatprep.subr.mxu0 0.0
    %3165 = vmatpush1.msra.mxu0 0.0
    %3166 = vmatprep.subr.mxu0 0.0
    %3167 = vmatpush1.msra.mxu0 0.0
    %3168 = vmatprep.subr.mxu0 0.0
    %3169 = vmatpush1.msra.mxu0 0.0
    %3170 = vmatprep.subr.mxu0 0.0
    %3171 = vmatpush1.msra.mxu0 0.0
    %3172 = vmatprep.subr.mxu0 0.0
    %3173 = vmatpush1.msra.mxu0 0.0
    %3174 = vmatprep.mubr.f32.mxu0 0.0
    %3175 = vmatmul.mubr.f32.gmra.mrb[0].mxu0 %v3105
    %v3176 = vpop.f32.mrb[0].mxu0
    %v3177 = vadd.f32 %v3102, %v3176
    %v3178 = vpop.f32.mrb[0].mxu0
    %3179 = vmatprep.mubr.f32.mxu0 0.0
    %3180 = vmatmul.mubr.f32.gmra.mrb[0].mxu0 %v3108
    %v3181 = vpop.f32.mrb[0].mxu0
    %v3182 = vadd.f32 %v3102, %v3181
    %v3183 = vpop.f32.mrb[0].mxu0
    %3184 = vdwg.mxu0
    %v3185 = vmul.f32 %v3177, 0.5
    %v3186 = vmul.f32 %v3182, 0.5
    %v3187 = vmul.f32 %v3177, 0.044715
    %v3188 = vmul.f32 %v3182, 0.044715
    %v3189 = vmul.f32 %v3187, %v3177
    %v3190 = vmul.f32 %v3188, %v3182
    %v3191 = vmul.f32 %v3189, %v3177
    %v3192 = vmul.f32 %v3190, %v3182
    %v3193 = vadd.f32 %v3177, %v3191
    %v3194 = vadd.f32 %v3182, %v3192
    %v3195 = vmul.f32 %v3193, 0.7978846
    %v3196 = vmul.f32 %v3194, 0.7978846
    %v3197 = vtanh.pop %v3195
    %v3198 = vtanh.pop %v3196
    %v3199 = vadd.f32 %v3197, 1.0
    %v3200 = vadd.f32 %v3198, 1.0
    %v3201 = vmul.f32 %v3185, %v3199
    %v3202 = vmul.f32 %v3186, %v3200
    %s3203 = scalar_lea.vmem %s39, 128
    %v3204 = vld [vmem:[%s3203] sm:$0xff]
    %v3205 = vld [vmem:[%s3203 + $0x8] sm:$0xff]
    %v3206 = vld [vmem:[%s3203 + $0x10] sm:$0xff]
    %v3207 = vld [vmem:[%s3203 + $0x18] sm:$0xff]
    %v3208 = vld [vmem:[%s3203 + $0x20] sm:$0xff]
    %v3209 = vld [vmem:[%s3203 + $0x28] sm:$0xff]
    %v3210 = vld [vmem:[%s3203 + $0x30] sm:$0xff]
    %v3211 = vld [vmem:[%s3203 + $0x38] sm:$0xff]
    %v3212 = vld [vmem:[%s3203 + $0x40] sm:$0xff]
    %v3213 = vld [vmem:[%s3203 + $0x48] sm:$0xff]
    %v3214 = vld [vmem:[%s3203 + $0x50] sm:$0xff]
    %v3215 = vld [vmem:[%s3203 + $0x58] sm:$0xff]
    %v3216 = vld [vmem:[%s3203 + $0x60] sm:$0xff]
    %v3217 = vld [vmem:[%s3203 + $0x68] sm:$0xff]
    %v3218 = vld [vmem:[%s3203 + $0x70] sm:$0xff]
    %v3219 = vld [vmem:[%s3203 + $0x78] sm:$0xff]
    %s3220 = scalar_lea.vmem %s41, 1
    %v3221 = vld [vmem:[%s3220] sm:$0x1]
    %v3223 = vlaneseq
    %v3224 = vshrl.u32 %v3223, 7
    %v3225 = vsub.s32 0, %v3224
    %v3226 = vrot.slane %v3221, %v3225
    %3228 = vmatprep.subr.mxu0 0.0
    %3229 = vmatpush1.msra.mxu0 %v3204
    %3230 = vmatprep.subr.mxu0 0.0
    %3231 = vmatpush1.msra.mxu0 %v3205
    %3232 = vmatprep.subr.mxu0 0.0
    %3233 = vmatpush1.msra.mxu0 %v3206
    %3234 = vmatprep.subr.mxu0 0.0
    %3235 = vmatpush1.msra.mxu0 %v3207
    %3236 = vmatprep.subr.mxu0 0.0
    %3237 = vmatpush1.msra.mxu0 %v3208
    %3238 = vmatprep.subr.mxu0 0.0
    %3239 = vmatpush1.msra.mxu0 %v3209
    %3240 = vmatprep.subr.mxu0 0.0
    %3241 = vmatpush1.msra.mxu0 %v3210
    %3242 = vmatprep.subr.mxu0 0.0
    %3243 = vmatpush1.msra.mxu0 %v3211
    %3244 = vmatprep.subr.mxu0 0.0
    %3245 = vmatpush1.msra.mxu0 %v3212
    %3246 = vmatprep.subr.mxu0 0.0
    %3247 = vmatpush1.msra.mxu0 %v3213
    %3248 = vmatprep.subr.mxu0 0.0
    %3249 = vmatpush1.msra.mxu0 %v3214
    %3250 = vmatprep.subr.mxu0 0.0
    %3251 = vmatpush1.msra.mxu0 %v3215
    %3252 = vmatprep.subr.mxu0 0.0
    %3253 = vmatpush1.msra.mxu0 %v3216
    %3254 = vmatprep.subr.mxu0 0.0
    %3255 = vmatpush1.msra.mxu0 %v3217
    %3256 = vmatprep.subr.mxu0 0.0
    %3257 = vmatpush1.msra.mxu0 %v3218
    %3258 = vmatprep.subr.mxu0 0.0
    %3259 = vmatpush1.msra.mxu0 %v3219
    %3260 = vmatprep.subr.mxu0 0.0
    %3261 = vmatpush1.msra.mxu0 0.0
    %3262 = vmatprep.subr.mxu0 0.0
    %3263 = vmatpush1.msra.mxu0 0.0
    %3264 = vmatprep.subr.mxu0 0.0
    %3265 = vmatpush1.msra.mxu0 0.0
    %3266 = vmatprep.subr.mxu0 0.0
    %3267 = vmatpush1.msra.mxu0 0.0
    %3268 = vmatprep.subr.mxu0 0.0
    %3269 = vmatpush1.msra.mxu0 0.0
    %3270 = vmatprep.subr.mxu0 0.0
    %3271 = vmatpush1.msra.mxu0 0.0
    %3272 = vmatprep.subr.mxu0 0.0
    %3273 = vmatpush1.msra.mxu0 0.0
    %3274 = vmatprep.subr.mxu0 0.0
    %3275 = vmatpush1.msra.mxu0 0.0
    %3276 = vmatprep.subr.mxu0 0.0
    %3277 = vmatpush1.msra.mxu0 0.0
    %3278 = vmatprep.subr.mxu0 0.0
    %3279 = vmatpush1.msra.mxu0 0.0
    %3280 = vmatprep.subr.mxu0 0.0
    %3281 = vmatpush1.msra.mxu0 0.0
    %3282 = vmatprep.subr.mxu0 0.0
    %3283 = vmatpush1.msra.mxu0 0.0
    %3284 = vmatprep.subr.mxu0 0.0
    %3285 = vmatpush1.msra.mxu0 0.0
    %3286 = vmatprep.subr.mxu0 0.0
    %3287 = vmatpush1.msra.mxu0 0.0
    %3288 = vmatprep.subr.mxu0 0.0
    %3289 = vmatpush1.msra.mxu0 0.0
    %3290 = vmatprep.subr.mxu0 0.0
    %3291 = vmatpush1.msra.mxu0 0.0
    %3292 = vmatprep.mubr.f32.mxu0 0.0
    %3293 = vmatmul.mubr.f32.gmra.mrb[0].mxu0 %v3201
    %v3294 = vpop.f32.mrb[0].mxu0
    %v3295 = vadd.f32 %v3226, %v3294
    %v3296 = vpop.f32.mrb[0].mxu0
    %3297 = vmatprep.mubr.f32.mxu0 0.0
    %3298 = vmatmul.mubr.f32.gmra.mrb[0].mxu0 %v3202
    %v3299 = vpop.f32.mrb[0].mxu0
    %v3300 = vadd.f32 %v3226, %v3299
    %v3301 = vpop.f32.mrb[0].mxu0
    %3302 = vdwg.mxu0
    %s3303 = scalar_lea.vmem %s45, 32
    %v3304 = vld [vmem:[%s3303] sm:$0xff]
    %v3305 = vld [vmem:[%s3303 + $0x8] sm:$0xff]
    %v3306 = vld [vmem:[%s3303 + $0x10] sm:$0xff]
    %v3307 = vld [vmem:[%s3303 + $0x18] sm:$0xff]
    %s3308 = scalar_lea.vmem %s47, 1
    %v3309 = vld [vmem:[%s3308] sm:$0x1]
    %v3311 = vlaneseq
    %v3312 = vshrl.u32 %v3311, 7
    %v3313 = vsub.s32 0, %v3312
    %v3314 = vrot.slane %v3309, %v3313
    %3316 = vmatprep.subr.mxu0 0.0
    %3317 = vmatpush1.msra.mxu0 %v3304
    %3318 = vmatprep.subr.mxu0 0.0
    %3319 = vmatpush1.msra.mxu0 %v3305
    %3320 = vmatprep.subr.mxu0 0.0
    %3321 = vmatpush1.msra.mxu0 %v3306
    %3322 = vmatprep.subr.mxu0 0.0
    %3323 = vmatpush1.msra.mxu0 %v3307
    %3324 = vmatprep.subr.mxu0 0.0
    %3325 = vmatpush1.msra.mxu0 0.0
    %3326 = vmatprep.subr.mxu0 0.0
    %3327 = vmatpush1.msra.mxu0 0.0
    %3328 = vmatprep.subr.mxu0 0.0
    %3329 = vmatpush1.msra.mxu0 0.0
    %3330 = vmatprep.subr.mxu0 0.0
    %3331 = vmatpush1.msra.mxu0 0.0
    %3332 = vmatprep.subr.mxu0 0.0
    %3333 = vmatpush1.msra.mxu0 0.0
    %3334 = vmatprep.subr.mxu0 0.0
    %3335 = vmatpush1.msra.mxu0 0.0
    %3336 = vmatprep.subr.mxu0 0.0
    %3337 = vmatpush1.msra.mxu0 0.0
    %3338 = vmatprep.subr.mxu0 0.0
    %3339 = vmatpush1.msra.mxu0 0.0
    %3340 = vmatprep.subr.mxu0 0.0
    %3341 = vmatpush1.msra.mxu0 0.0
    %3342 = vmatprep.subr.mxu0 0.0
    %3343 = vmatpush1.msra.mxu0 0.0
    %3344 = vmatprep.subr.mxu0 0.0
    %3345 = vmatpush1.msra.mxu0 0.0
    %3346 = vmatprep.subr.mxu0 0.0
    %3347 = vmatpush1.msra.mxu0 0.0
    %3348 = vmatprep.subr.mxu0 0.0
    %3349 = vmatpush1.msra.mxu0 0.0
    %3350 = vmatprep.subr.mxu0 0.0
    %3351 = vmatpush1.msra.mxu0 0.0
    %3352 = vmatprep.subr.mxu0 0.0
    %3353 = vmatpush1.msra.mxu0 0.0
    %3354 = vmatprep.subr.mxu0 0.0
    %3355 = vmatpush1.msra.mxu0 0.0
    %3356 = vmatprep.subr.mxu0 0.0
    %3357 = vmatpush1.msra.mxu0 0.0
    %3358 = vmatprep.subr.mxu0 0.0
    %3359 = vmatpush1.msra.mxu0 0.0
    %3360 = vmatprep.subr.mxu0 0.0
    %3361 = vmatpush1.msra.mxu0 0.0
    %3362 = vmatprep.subr.mxu0 0.0
    %3363 = vmatpush1.msra.mxu0 0.0
    %3364 = vmatprep.subr.mxu0 0.0
    %3365 = vmatpush1.msra.mxu0 0.0
    %3366 = vmatprep.subr.mxu0 0.0
    %3367 = vmatpush1.msra.mxu0 0.0
    %3368 = vmatprep.subr.mxu0 0.0
    %3369 = vmatpush1.msra.mxu0 0.0
    %3370 = vmatprep.subr.mxu0 0.0
    %3371 = vmatpush1.msra.mxu0 0.0
    %3372 = vmatprep.subr.mxu0 0.0
    %3373 = vmatpush1.msra.mxu0 0.0
    %3374 = vmatprep.subr.mxu0 0.0
    %3375 = vmatpush1.msra.mxu0 0.0
    %3376 = vmatprep.subr.mxu0 0.0
    %3377 = vmatpush1.msra.mxu0 0.0
    %3378 = vmatprep.subr.mxu0 0.0
    %3379 = vmatpush1.msra.mxu0 0.0
    %3380 = vmatprep.mubr.f32.mxu0 0.0
    %3381 = vmatmul.mubr.f32.gmra.mrb[0].mxu0 %v1758
    %v3382 = vpop.f32.mrb[0].mxu0
    %v3383 = vadd.f32 %v3314, %v3382
    %v3384 = vpop.f32.mrb[0].mxu0
    %3385 = vdwg.mxu0
    %s3386 = scalar_lea.vmem %s43, 32
    %v3387 = vld [vmem:[%s3386] sm:$0xff]
    %v3388 = vld [vmem:[%s3386 + $0x8] sm:$0xff]
    %v3389 = vld [vmem:[%s3386 + $0x10] sm:$0xff]
    %v3390 = vld [vmem:[%s3386 + $0x18] sm:$0xff]
    %v3392 = vsel %vm477, %v3295, 0
    %v3395 = vsel %vm477, %v3300, 0
    %3397 = vmatprep.subr.mxu0 0.0
    %3398 = vmatpush1.msra.mxu0 %v3387
    %3399 = vmatprep.subr.mxu0 0.0
    %3400 = vmatpush1.msra.mxu0 %v3388
    %3401 = vmatprep.subr.mxu0 0.0
    %3402 = vmatpush1.msra.mxu0 %v3389
    %3403 = vmatprep.subr.mxu0 0.0
    %3404 = vmatpush1.msra.mxu0 %v3390
    %3405 = vmatprep.subr.mxu0 0.0
    %3406 = vmatpush1.msra.mxu0 0.0
    %3407 = vmatprep.subr.mxu0 0.0
    %3408 = vmatpush1.msra.mxu0 0.0
    %3409 = vmatprep.subr.mxu0 0.0
    %3410 = vmatpush1.msra.mxu0 0.0
    %3411 = vmatprep.subr.mxu0 0.0
    %3412 = vmatpush1.msra.mxu0 0.0
    %3413 = vmatprep.subr.mxu0 0.0
    %3414 = vmatpush1.msra.mxu0 0.0
    %3415 = vmatprep.subr.mxu0 0.0
    %3416 = vmatpush1.msra.mxu0 0.0
    %3417 = vmatprep.subr.mxu0 0.0
    %3418 = vmatpush1.msra.mxu0 0.0
    %3419 = vmatprep.subr.mxu0 0.0
    %3420 = vmatpush1.msra.mxu0 0.0
    %3421 = vmatprep.subr.mxu0 0.0
    %3422 = vmatpush1.msra.mxu0 0.0
    %3423 = vmatprep.subr.mxu0 0.0
    %3424 = vmatpush1.msra.mxu0 0.0
    %3425 = vmatprep.subr.mxu0 0.0
    %3426 = vmatpush1.msra.mxu0 0.0
    %3427 = vmatprep.subr.mxu0 0.0
    %3428 = vmatpush1.msra.mxu0 0.0
    %3429 = vmatprep.subr.mxu0 0.0
    %3430 = vmatpush1.msra.mxu0 0.0
    %3431 = vmatprep.subr.mxu0 0.0
    %3432 = vmatpush1.msra.mxu0 0.0
    %3433 = vmatprep.subr.mxu0 0.0
    %3434 = vmatpush1.msra.mxu0 0.0
    %3435 = vmatprep.subr.mxu0 0.0
    %3436 = vmatpush1.msra.mxu0 0.0
    %3437 = vmatprep.subr.mxu0 0.0
    %3438 = vmatpush1.msra.mxu0 0.0
    %3439 = vmatprep.subr.mxu0 0.0
    %3440 = vmatpush1.msra.mxu0 0.0
    %3441 = vmatprep.subr.mxu0 0.0
    %3442 = vmatpush1.msra.mxu0 0.0
    %3443 = vmatprep.subr.mxu0 0.0
    %3444 = vmatpush1.msra.mxu0 0.0
    %3445 = vmatprep.subr.mxu0 0.0
    %3446 = vmatpush1.msra.mxu0 0.0
    %3447 = vmatprep.subr.mxu0 0.0
    %3448 = vmatpush1.msra.mxu0 0.0
    %3449 = vmatprep.subr.mxu0 0.0
    %3450 = vmatpush1.msra.mxu0 0.0
    %3451 = vmatprep.subr.mxu0 0.0
    %3452 = vmatpush1.msra.mxu0 0.0
    %3453 = vmatprep.subr.mxu0 0.0
    %3454 = vmatpush1.msra.mxu0 0.0
    %3455 = vmatprep.subr.mxu0 0.0
    %3456 = vmatpush1.msra.mxu0 0.0
    %3457 = vmatprep.subr.mxu0 0.0
    %3458 = vmatpush1.msra.mxu0 0.0
    %3459 = vmatprep.subr.mxu0 0.0
    %3460 = vmatpush1.msra.mxu0 0.0
    %3461 = vmatprep.mubr.f32.mxu0 0.0
    %3462 = vmatmul.mubr.f32.gmra.mrb[0].mxu0 %v3392
    %v3463 = vpop.f32.mrb[0].mxu0
    %v3464 = vadd.f32 0.0, %v3463
    %v3465 = vpop.f32.mrb[0].mxu0
    %3466 = vmatprep.mubr.f32.mxu0 0.0
    %3467 = vmatmul.mubr.f32.gmra.mrb[0].mxu0 %v3395
    %v3468 = vpop.f32.mrb[0].mxu0
    %v3469 = vadd.f32 0.0, %v3468
    %v3470 = vpop.f32.mrb[0].mxu0
    %3471 = vdwg.mxu0
    %v3474 = vunpack.c.l.s4 1966171168
    %v3475 = vunpack.c.0.s8 %v3474
    %v3476 = vlaneseq
    %v3477 = vshrl.u32 %v3476, 7
    %v3478 = vsub.s32 %v3475, %v3477
    %v3479 = vrot.slane %v3383, %v3478
    %v3480 = vcombine.high %v3479, %v3479
    %v3482 = vunpack.c.l.s4 1966171168
    %v3483 = vunpack.c.0.s8 %v3482
    %v3484 = vlaneseq
    %v3485 = vshrl.u32 %v3484, 7
    %v3486 = vsub.s32 %v3483, %v3485
    %v3487 = vrot.slane %v3479, %v3486
    %v3489 = vunpack.c.l.s4 1966171168
    %v3490 = vunpack.c.0.s8 %v3489
    %v3491 = vlaneseq
    %v3492 = vshrl.u32 %v3491, 7
    %v3493 = vsub.s32 %v3490, %v3492
    %v3494 = vrot.slane %v3480, %v3493
    %v3495 = vlaneseq
    %v3496 = vshrl.u32 %v3495, 7
    %v3497 = vsub.s32 0, %v3496
    %v3498 = vrot.slane %v3487, %v3497
    %v3499 = vlaneseq
    %v3500 = vshrl.u32 %v3499, 7
    %v3501 = vsub.s32 0, %v3500
    %v3502 = vrot.slane %v3494, %v3501
    %v3505 = vadd.f32 %v3464, %v3498
    %v3506 = vadd.f32 %v3469, %v3502
    %v3507 = vmul.f32 %v3505, 0.5
    %v3508 = vmul.f32 %v3506, 0.5
    %v3509 = vmul.f32 %v3505, 0.044715
    %v3510 = vmul.f32 %v3506, 0.044715
    %v3511 = vmul.f32 %v3509, %v3505
    %v3512 = vmul.f32 %v3510, %v3506
    %v3513 = vmul.f32 %v3511, %v3505
    %v3514 = vmul.f32 %v3512, %v3506
    %v3515 = vadd.f32 %v3505, %v3513
    %v3516 = vadd.f32 %v3506, %v3514
    %v3517 = vmul.f32 %v3515, 0.7978846
    %v3518 = vmul.f32 %v3516, 0.7978846
    %v3519 = vtanh.pop %v3517
    %v3520 = vtanh.pop %v3518
    %v3521 = vadd.f32 %v3519, 1.0
    %v3522 = vadd.f32 %v3520, 1.0
    %v3523 = vmul.f32 %v3507, %v3521
    %v3524 = vmul.f32 %v3508, %v3522
    %s3525 = scalar_lea.vmem %s49, 16
    %v3526 = vld [vmem:[%s3525] sm:$0xff]
    %v3527 = vld [vmem:[%s3525 + $0x8] sm:$0xff]
    %s3528 = scalar_lea.vmem %s51, 1
    %v3529 = vld [vmem:[%s3528] sm:$0x1]
    %v3531 = vlaneseq
    %v3532 = vshrl.u32 %v3531, 7
    %v3533 = vsub.s32 0, %v3532
    %v3534 = vrot.slane %v3529, %v3533
    %v3537 = vsel %vm646, %v3523, 0
    %v3540 = vsel %vm646, %v3524, 0
    %3542 = vmatprep.subr.mxu0 0.0
    %3543 = vmatpush1.msra.mxu0 %v3526
    %3544 = vmatprep.subr.mxu0 0.0
    %3545 = vmatpush1.msra.mxu0 %v3527
    %3546 = vmatprep.subr.mxu0 0.0
    %3547 = vmatpush1.msra.mxu0 0.0
    %3548 = vmatprep.subr.mxu0 0.0
    %3549 = vmatpush1.msra.mxu0 0.0
    %3550 = vmatprep.subr.mxu0 0.0
    %3551 = vmatpush1.msra.mxu0 0.0
    %3552 = vmatprep.subr.mxu0 0.0
    %3553 = vmatpush1.msra.mxu0 0.0
    %3554 = vmatprep.subr.mxu0 0.0
    %3555 = vmatpush1.msra.mxu0 0.0
    %3556 = vmatprep.subr.mxu0 0.0
    %3557 = vmatpush1.msra.mxu0 0.0
    %3558 = vmatprep.subr.mxu0 0.0
    %3559 = vmatpush1.msra.mxu0 0.0
    %3560 = vmatprep.subr.mxu0 0.0
    %3561 = vmatpush1.msra.mxu0 0.0
    %3562 = vmatprep.subr.mxu0 0.0
    %3563 = vmatpush1.msra.mxu0 0.0
    %3564 = vmatprep.subr.mxu0 0.0
    %3565 = vmatpush1.msra.mxu0 0.0
    %3566 = vmatprep.subr.mxu0 0.0
    %3567 = vmatpush1.msra.mxu0 0.0
    %3568 = vmatprep.subr.mxu0 0.0
    %3569 = vmatpush1.msra.mxu0 0.0
    %3570 = vmatprep.subr.mxu0 0.0
    %3571 = vmatpush1.msra.mxu0 0.0
    %3572 = vmatprep.subr.mxu0 0.0
    %3573 = vmatpush1.msra.mxu0 0.0
    %3574 = vmatprep.subr.mxu0 0.0
    %3575 = vmatpush1.msra.mxu0 0.0
    %3576 = vmatprep.subr.mxu0 0.0
    %3577 = vmatpush1.msra.mxu0 0.0
    %3578 = vmatprep.subr.mxu0 0.0
    %3579 = vmatpush1.msra.mxu0 0.0
    %3580 = vmatprep.subr.mxu0 0.0
    %3581 = vmatpush1.msra.mxu0 0.0
    %3582 = vmatprep.subr.mxu0 0.0
    %3583 = vmatpush1.msra.mxu0 0.0
    %3584 = vmatprep.subr.mxu0 0.0
    %3585 = vmatpush1.msra.mxu0 0.0
    %3586 = vmatprep.subr.mxu0 0.0
    %3587 = vmatpush1.msra.mxu0 0.0
    %3588 = vmatprep.subr.mxu0 0.0
    %3589 = vmatpush1.msra.mxu0 0.0
    %3590 = vmatprep.subr.mxu0 0.0
    %3591 = vmatpush1.msra.mxu0 0.0
    %3592 = vmatprep.subr.mxu0 0.0
    %3593 = vmatpush1.msra.mxu0 0.0
    %3594 = vmatprep.subr.mxu0 0.0
    %3595 = vmatpush1.msra.mxu0 0.0
    %3596 = vmatprep.subr.mxu0 0.0
    %3597 = vmatpush1.msra.mxu0 0.0
    %3598 = vmatprep.subr.mxu0 0.0
    %3599 = vmatpush1.msra.mxu0 0.0
    %3600 = vmatprep.subr.mxu0 0.0
    %3601 = vmatpush1.msra.mxu0 0.0
    %3602 = vmatprep.subr.mxu0 0.0
    %3603 = vmatpush1.msra.mxu0 0.0
    %3604 = vmatprep.subr.mxu0 0.0
    %3605 = vmatpush1.msra.mxu0 0.0
    %3606 = vmatprep.mubr.f32.mxu0 0.0
    %3607 = vmatmul.mubr.f32.gmra.mrb[0].mxu0 %v3537
    %v3608 = vpop.f32.mrb[0].mxu0
    %v3609 = vadd.f32 %v3534, %v3608
    %v3610 = vpop.f32.mrb[0].mxu0
    %3611 = vmatprep.mubr.f32.mxu0 0.0
    %3612 = vmatmul.mubr.f32.gmra.mrb[0].mxu0 %v3540
    %v3613 = vpop.f32.mrb[0].mxu0
    %v3614 = vadd.f32 %v3534, %v3613
    %v3615 = vpop.f32.mrb[0].mxu0
    %3616 = vdwg.mxu0
    %v3617 = vadd.f32 %v3295, %v3609
    %v3618 = vadd.f32 %v3300, %v3614
    %v3619 = vadd.f32 %v3089, %v3617
    %v3620 = vadd.f32 %v3090, %v3618
    %s3621 = scalar_lea.vmem %s53, 1
    %v3622 = vld [vmem:[%s3621] sm:$0x1]
    %s3623 = scalar_lea.vmem %s55, 1
    %v3624 = vld [vmem:[%s3623] sm:$0x1]
    %v3625 = vsel %vm477, %v3619, 0.0
    %3626 = vadd.xlane.f32.xlu0 %v3625
    %v3627 = vpop.xlane.xlu0 %3626
    %v3628 = vsel %vm477, %v3620, 0.0
    %3629 = vadd.xlane.f32.xlu0 %v3628
    %v3630 = vpop.xlane.xlu0 %3629
    %v3631 = vmul.f32 %v3627, %v484
    %v3632 = vmul.f32 %v3630, %v484
    %v3633 = vsub.f32 %v3619, %v3631
    %v3634 = vsub.f32 %v3620, %v3632
    %v3635 = vmul.f32 %v3633, %v3633
    %v3636 = vmul.f32 %v3634, %v3634
    %v3637 = vsel %vm477, %v3635, 0.0
    %3638 = vadd.xlane.f32.xlu0 %v3637
    %v3639 = vpop.xlane.xlu0 %3638
    %v3640 = vsel %vm477, %v3636, 0.0
    %3641 = vadd.xlane.f32.xlu0 %v3640
    %v3642 = vpop.xlane.xlu0 %3641
    %v3643 = vmul.f32 %v3639, %v484
    %v3644 = vmul.f32 %v3642, %v484
    %v3645 = vadd.f32 %v3643, 1e-12
    %v3646 = vadd.f32 %v3644, 1e-12
    %v3647 = vrsqrt.pop %v3645
    %v3648 = vrsqrt.pop %v3646
    %v3649 = vmul.f32 %v3633, %v3647
    %v3650 = vmul.f32 %v3634, %v3648
    %v3652 = vlaneseq
    %v3653 = vshrl.u32 %v3652, 7
    %v3654 = vsub.s32 0, %v3653
    %v3655 = vrot.slane %v3622, %v3654
    %v3657 = vmul.f32 %v3649, %v3655
    %v3658 = vmul.f32 %v3650, %v3655
    %v3660 = vlaneseq
    %v3661 = vshrl.u32 %v3660, 7
    %v3662 = vsub.s32 0, %v3661
    %v3663 = vrot.slane %v3624, %v3662
    %v3665 = vadd.f32 %v3657, %v3663
    %v3666 = vadd.f32 %v3658, %v3663
    %v3667 = vld [vmem:[%s57] sm:$0xff]
    %v3668 = vld [vmem:[%s57 + $0x8] sm:$0xff]
    %v3669 = vld [vmem:[%s57 + $0x10] sm:$0xff]
    %v3670 = vld [vmem:[%s57 + $0x18] sm:$0xff]
    %v3671 = vld [vmem:[%s59] sm:$0x1]
    %v3673 = vlaneseq
    %v3674 = vshrl.u32 %v3673, 7
    %v3675 = vsub.s32 0, %v3674
    %v3676 = vrot.slane %v3671, %v3675
    %v3680 = vrot.slane %v3666, 7
    %v3681 = vsel %vm188, %v3680, %v3665
    %v3682 = vsel %vm477, %v3681, 0
    %3684 = vmatprep.subr.mxu0 0.0
    %3685 = vmatpush1.msra.mxu0 %v3667
    %3686 = vmatprep.subr.mxu0 0.0
    %3687 = vmatpush1.msra.mxu0 %v3668
    %3688 = vmatprep.subr.mxu0 0.0
    %3689 = vmatpush1.msra.mxu0 %v3669
    %3690 = vmatprep.subr.mxu0 0.0
    %3691 = vmatpush1.msra.mxu0 %v3670
    %3692 = vmatprep.subr.mxu0 0.0
    %3693 = vmatpush1.msra.mxu0 0.0
    %3694 = vmatprep.subr.mxu0 0.0
    %3695 = vmatpush1.msra.mxu0 0.0
    %3696 = vmatprep.subr.mxu0 0.0
    %3697 = vmatpush1.msra.mxu0 0.0
    %3698 = vmatprep.subr.mxu0 0.0
    %3699 = vmatpush1.msra.mxu0 0.0
    %3700 = vmatprep.subr.mxu0 0.0
    %3701 = vmatpush1.msra.mxu0 0.0
    %3702 = vmatprep.subr.mxu0 0.0
    %3703 = vmatpush1.msra.mxu0 0.0
    %3704 = vmatprep.subr.mxu0 0.0
    %3705 = vmatpush1.msra.mxu0 0.0
    %3706 = vmatprep.subr.mxu0 0.0
    %3707 = vmatpush1.msra.mxu0 0.0
    %3708 = vmatprep.subr.mxu0 0.0
    %3709 = vmatpush1.msra.mxu0 0.0
    %3710 = vmatprep.subr.mxu0 0.0
    %3711 = vmatpush1.msra.mxu0 0.0
    %3712 = vmatprep.subr.mxu0 0.0
    %3713 = vmatpush1.msra.mxu0 0.0
    %3714 = vmatprep.subr.mxu0 0.0
    %3715 = vmatpush1.msra.mxu0 0.0
    %3716 = vmatprep.subr.mxu0 0.0
    %3717 = vmatpush1.msra.mxu0 0.0
    %3718 = vmatprep.subr.mxu0 0.0
    %3719 = vmatpush1.msra.mxu0 0.0
    %3720 = vmatprep.subr.mxu0 0.0
    %3721 = vmatpush1.msra.mxu0 0.0
    %3722 = vmatprep.subr.mxu0 0.0
    %3723 = vmatpush1.msra.mxu0 0.0
    %3724 = vmatprep.subr.mxu0 0.0
    %3725 = vmatpush1.msra.mxu0 0.0
    %3726 = vmatprep.subr.mxu0 0.0
    %3727 = vmatpush1.msra.mxu0 0.0
    %3728 = vmatprep.subr.mxu0 0.0
    %3729 = vmatpush1.msra.mxu0 0.0
    %3730 = vmatprep.subr.mxu0 0.0
    %3731 = vmatpush1.msra.mxu0 0.0
    %3732 = vmatprep.subr.mxu0 0.0
    %3733 = vmatpush1.msra.mxu0 0.0
    %3734 = vmatprep.subr.mxu0 0.0
    %3735 = vmatpush1.msra.mxu0 0.0
    %3736 = vmatprep.subr.mxu0 0.0
    %3737 = vmatpush1.msra.mxu0 0.0
    %3738 = vmatprep.subr.mxu0 0.0
    %3739 = vmatpush1.msra.mxu0 0.0
    %3740 = vmatprep.subr.mxu0 0.0
    %3741 = vmatpush1.msra.mxu0 0.0
    %3742 = vmatprep.subr.mxu0 0.0
    %3743 = vmatpush1.msra.mxu0 0.0
    %3744 = vmatprep.subr.mxu0 0.0
    %3745 = vmatpush1.msra.mxu0 0.0
    %3746 = vmatprep.subr.mxu0 0.0
    %3747 = vmatpush1.msra.mxu0 0.0
    %3748 = vmatprep.mubr.f32.mxu0 0.0
    %3749 = vmatmul.mubr.f32.gmra.mrb[0].mxu0 %v3682
    %v3750 = vpop.f32.mrb[0].mxu0
    %v3751 = vadd.f32 %v3676, %v3750
    %v3752 = vpop.f32.mrb[0].mxu0
    %3753 = vdwg.mxu0
    %v3754 = vtanh.pop %v3751
    %v3755 = vld [vmem:[%s61] sm:$0xff]
    %v3756 = vld [vmem:[%s61 + $0x8] sm:$0xff]
    %v3757 = vld [vmem:[%s61 + $0x10] sm:$0xff]
    %v3758 = vld [vmem:[%s61 + $0x18] sm:$0xff]
    %v3759 = vld [vmem:[%s63] sm:$0x1]
    %v3761 = vlaneseq
    %v3762 = vshrl.u32 %v3761, 7
    %v3763 = vsub.s32 0, %v3762
    %v3764 = vrot.slane %v3759, %v3763
    %v3767 = vsel %vm477, %v3754, 0
    %3769 = vmatprep.subr.mxu0 0.0
    %3770 = vmatpush1.msra.mxu0 %v3755
    %3771 = vmatprep.subr.mxu0 0.0
    %3772 = vmatpush1.msra.mxu0 %v3756
    %3773 = vmatprep.subr.mxu0 0.0
    %3774 = vmatpush1.msra.mxu0 %v3757
    %3775 = vmatprep.subr.mxu0 0.0
    %3776 = vmatpush1.msra.mxu0 %v3758
    %3777 = vmatprep.subr.mxu0 0.0
    %3778 = vmatpush1.msra.mxu0 0.0
    %3779 = vmatprep.subr.mxu0 0.0
    %3780 = vmatpush1.msra.mxu0 0.0
    %3781 = vmatprep.subr.mxu0 0.0
    %3782 = vmatpush1.msra.mxu0 0.0
    %3783 = vmatprep.subr.mxu0 0.0
    %3784 = vmatpush1.msra.mxu0 0.0
    %3785 = vmatprep.subr.mxu0 0.0
    %3786 = vmatpush1.msra.mxu0 0.0
    %3787 = vmatprep.subr.mxu0 0.0
    %3788 = vmatpush1.msra.mxu0 0.0
    %3789 = vmatprep.subr.mxu0 0.0
    %3790 = vmatpush1.msra.mxu0 0.0
    %3791 = vmatprep.subr.mxu0 0.0
    %3792 = vmatpush1.msra.mxu0 0.0
    %3793 = vmatprep.subr.mxu0 0.0
    %3794 = vmatpush1.msra.mxu0 0.0
    %3795 = vmatprep.subr.mxu0 0.0
    %3796 = vmatpush1.msra.mxu0 0.0
    %3797 = vmatprep.subr.mxu0 0.0
    %3798 = vmatpush1.msra.mxu0 0.0
    %3799 = vmatprep.subr.mxu0 0.0
    %3800 = vmatpush1.msra.mxu0 0.0
    %3801 = vmatprep.subr.mxu0 0.0
    %3802 = vmatpush1.msra.mxu0 0.0
    %3803 = vmatprep.subr.mxu0 0.0
    %3804 = vmatpush1.msra.mxu0 0.0
    %3805 = vmatprep.subr.mxu0 0.0
    %3806 = vmatpush1.msra.mxu0 0.0
    %3807 = vmatprep.subr.mxu0 0.0
    %3808 = vmatpush1.msra.mxu0 0.0
    %3809 = vmatprep.subr.mxu0 0.0
    %3810 = vmatpush1.msra.mxu0 0.0
    %3811 = vmatprep.subr.mxu0 0.0
    %3812 = vmatpush1.msra.mxu0 0.0
    %3813 = vmatprep.subr.mxu0 0.0
    %3814 = vmatpush1.msra.mxu0 0.0
    %3815 = vmatprep.subr.mxu0 0.0
    %3816 = vmatpush1.msra.mxu0 0.0
    %3817 = vmatprep.subr.mxu0 0.0
    %3818 = vmatpush1.msra.mxu0 0.0
    %3819 = vmatprep.subr.mxu0 0.0
    %3820 = vmatpush1.msra.mxu0 0.0
    %3821 = vmatprep.subr.mxu0 0.0
    %3822 = vmatpush1.msra.mxu0 0.0
    %3823 = vmatprep.subr.mxu0 0.0
    %3824 = vmatpush1.msra.mxu0 0.0
    %3825 = vmatprep.subr.mxu0 0.0
    %3826 = vmatpush1.msra.mxu0 0.0
    %3827 = vmatprep.subr.mxu0 0.0
    %3828 = vmatpush1.msra.mxu0 0.0
    %3829 = vmatprep.subr.mxu0 0.0
    %3830 = vmatpush1.msra.mxu0 0.0
    %3831 = vmatprep.subr.mxu0 0.0
    %3832 = vmatpush1.msra.mxu0 0.0
    %3833 = vmatprep.mubr.f32.mxu0 0.0
    %3834 = vmatmul.mubr.f32.gmra.mrb[0].mxu0 %v3767
    %v3835 = vpop.f32.mrb[0].mxu0
    %v3836 = vadd.f32 %v3764, %v3835
    %v3837 = vpop.f32.mrb[0].mxu0
    %3838 = vdwg.mxu0
    %v3839 = vmul.f32 %v3836, 0.5
    %v3840 = vmul.f32 %v3836, 0.044715
    %v3841 = vmul.f32 %v3840, %v3836
    %v3842 = vmul.f32 %v3841, %v3836
    %v3843 = vadd.f32 %v3836, %v3842
    %v3844 = vmul.f32 %v3843, 0.7978846
    %v3845 = vtanh.pop %v3844
    %v3846 = vadd.f32 %v3845, 1.0
    %v3847 = vmul.f32 %v3839, %v3846
    %v3848 = vld [vmem:[%s65] sm:$0x1]
    %v3849 = vld [vmem:[%s67] sm:$0x1]
    %vm3850 = vcmask 254976
    %v3851 = vsel %vm3850, %v3847, 0.0
    %3852 = vadd.xlane.f32.xlu0 %v3851
    %v3853 = vpop.xlane.xlu0 %3852
    %v3854 = vmul.f32 %v3853, %v484
    %v3855 = vsub.f32 %v3847, %v3854
    %v3856 = vmul.f32 %v3855, %v3855
    %v3857 = vsel %vm3850, %v3856, 0.0
    %3858 = vadd.xlane.f32.xlu0 %v3857
    %v3859 = vpop.xlane.xlu0 %3858
    %v3860 = vmul.f32 %v3859, %v484
    %v3861 = vadd.f32 %v3860, 1e-12
    %v3862 = vrsqrt.pop %v3861
    %v3863 = vmul.f32 %v3855, %v3862
    %v3865 = vlaneseq
    %v3866 = vshrl.u32 %v3865, 7
    %v3867 = vsub.s32 0, %v3866
    %v3868 = vrot.slane %v3848, %v3867
    %v3870 = vmul.f32 %v3863, %v3868
    %v3872 = vlaneseq
    %v3873 = vshrl.u32 %v3872, 7
    %v3874 = vsub.s32 0, %v3873
    %v3875 = vrot.slane %v3849, %v3874
    %v3877 = vadd.f32 %v3870, %v3875
    %v3878 = vld [vmem:[%s69] sm:$0xff]
    %v3879 = vld [vmem:[%s69 + $0x8] sm:$0xff]
    %v3880 = vld [vmem:[%s69 + $0x10] sm:$0xff]
    %v3881 = vld [vmem:[%s69 + $0x18] sm:$0xff]
    %v3882 = vld [vmem:[%s71] sm:$0x1]
    %v3884 = vlaneseq
    %v3885 = vshrl.u32 %v3884, 7
    %v3886 = vsub.s32 0, %v3885
    %v3887 = vrot.slane %v3882, %v3886
    %v3890 = vsel %vm477, %v3877, 0
    %3892 = vmatprep.subr.mxu0 0.0
    %3893 = vmatpush1.msra.mxu0 %v3878
    %3894 = vmatprep.subr.mxu0 0.0
    %3895 = vmatpush1.msra.mxu0 %v3879
    %3896 = vmatprep.subr.mxu0 0.0
    %3897 = vmatpush1.msra.mxu0 %v3880
    %3898 = vmatprep.subr.mxu0 0.0
    %3899 = vmatpush1.msra.mxu0 %v3881
    %3900 = vmatprep.subr.mxu0 0.0
    %3901 = vmatpush1.msra.mxu0 0.0
    %3902 = vmatprep.subr.mxu0 0.0
    %3903 = vmatpush1.msra.mxu0 0.0
    %3904 = vmatprep.subr.mxu0 0.0
    %3905 = vmatpush1.msra.mxu0 0.0
    %3906 = vmatprep.subr.mxu0 0.0
    %3907 = vmatpush1.msra.mxu0 0.0
    %3908 = vmatprep.subr.mxu0 0.0
    %3909 = vmatpush1.msra.mxu0 0.0
    %3910 = vmatprep.subr.mxu0 0.0
    %3911 = vmatpush1.msra.mxu0 0.0
    %3912 = vmatprep.subr.mxu0 0.0
    %3913 = vmatpush1.msra.mxu0 0.0
    %3914 = vmatprep.subr.mxu0 0.0
    %3915 = vmatpush1.msra.mxu0 0.0
    %3916 = vmatprep.subr.mxu0 0.0
    %3917 = vmatpush1.msra.mxu0 0.0
    %3918 = vmatprep.subr.mxu0 0.0
    %3919 = vmatpush1.msra.mxu0 0.0
    %3920 = vmatprep.subr.mxu0 0.0
    %3921 = vmatpush1.msra.mxu0 0.0
    %3922 = vmatprep.subr.mxu0 0.0
    %3923 = vmatpush1.msra.mxu0 0.0
    %3924 = vmatprep.subr.mxu0 0.0
    %3925 = vmatpush1.msra.mxu0 0.0
    %3926 = vmatprep.subr.mxu0 0.0
    %3927 = vmatpush1.msra.mxu0 0.0
    %3928 = vmatprep.subr.mxu0 0.0
    %3929 = vmatpush1.msra.mxu0 0.0
    %3930 = vmatprep.subr.mxu0 0.0
    %3931 = vmatpush1.msra.mxu0 0.0
    %3932 = vmatprep.subr.mxu0 0.0
    %3933 = vmatpush1.msra.mxu0 0.0
    %3934 = vmatprep.subr.mxu0 0.0
    %3935 = vmatpush1.msra.mxu0 0.0
    %3936 = vmatprep.subr.mxu0 0.0
    %3937 = vmatpush1.msra.mxu0 0.0
    %3938 = vmatprep.subr.mxu0 0.0
    %3939 = vmatpush1.msra.mxu0 0.0
    %3940 = vmatprep.subr.mxu0 0.0
    %3941 = vmatpush1.msra.mxu0 0.0
    %3942 = vmatprep.subr.mxu0 0.0
    %3943 = vmatpush1.msra.mxu0 0.0
    %3944 = vmatprep.subr.mxu0 0.0
    %3945 = vmatpush1.msra.mxu0 0.0
    %3946 = vmatprep.subr.mxu0 0.0
    %3947 = vmatpush1.msra.mxu0 0.0
    %3948 = vmatprep.subr.mxu0 0.0
    %3949 = vmatpush1.msra.mxu0 0.0
    %3950 = vmatprep.subr.mxu0 0.0
    %3951 = vmatpush1.msra.mxu0 0.0
    %3952 = vmatprep.subr.mxu0 0.0
    %3953 = vmatpush1.msra.mxu0 0.0
    %3954 = vmatprep.subr.mxu0 0.0
    %3955 = vmatpush1.msra.mxu0 0.0
    %3956 = vmatprep.mubr.f32.mxu0 0.0
    %3957 = vmatmul.mubr.f32.gmra.mrb[0].mxu0 %v3890
    %v3958 = vpop.f32.mrb[0].mxu0
    %v3959 = vadd.f32 %v3887, %v3958
    %v3960 = vpop.f32.mrb[0].mxu0
    %3961 = vdwg.mxu0
    %vm3962 = vcmask 17408
    %3963 = vst.msk [vmem:[#allocation2] sm:$0x3] %vm3962, %v3959
    // Predicated region
    $region146: #{multimodal_adapter_clf.1} parent=1 // pred_check
      _
    $region147: #{multimodal_adapter_clf.1} parent=1 // pred_check_branch
      %3965 = sbr.rel (0) target = $region149
    $region148: #{multimodal_adapter_clf.1} parent=1 // pred_region
      %s3967 = ssub.s32 32, 32
      %3968 = vsyncadd [#allocation3], %s3967
      %s3970 = sshll.u32 [#allocation2], 4
      %s3971 = int_to_ptr.vmem [resolvable:$true] %s3970
      %3973 = dma.vmem_to_hbm [thread:$0]  %s3971, 32, %s73, [#allocation3]
    $region149: #{multimodal_adapter_clf.1} parent=1 // pred_fallthru
      _
    // Predicated region
    $region150: #{multimodal_adapter_clf.1} parent=1 // pred_check
      _
    $region151: #{multimodal_adapter_clf.1} parent=1 // pred_check_branch
      %3975 = sbr.rel (0) target = $region153
    $region152: #{multimodal_adapter_clf.1} parent=1 // pred_region
      %3976 = dma.done [#allocation3], 32
    $region153: #{multimodal_adapter_clf.1} parent=1 // pred_fallthru
      _
    %3977 = vsyncpa [#allocation3], 1

</llo_original>
